<compile_context>
chip_gen: v7x
topology: tpu7x:2x2x1
jax: 0.10.0
libtpu: 0.0.40
codegen_flags: <defaults>
</compile_context>

<pallas_src>
import jax
import jax.numpy as jnp
import numpy as np
from jax.experimental import pallas as pl
from jax.experimental.pallas import tpu as pltpu


def _rup(x, m):
    return ((x + m - 1) // m) * m


# ---------------------------------------------------------------------------
# Parameter init (PyTorch ConvTranspose2d default-like init)
# ---------------------------------------------------------------------------
def init_decoder_params(key, input_dim, inner_dims):
    layer_defs = [
        # (Cin, Cout, kernel, stride, padding, relu)
        (input_dim,     inner_dims[0], (3, 3), (2, 2), (1, 1), True),
        (inner_dims[0], inner_dims[1], (3, 3), (2, 2), (1, 1), True),
        (inner_dims[1], inner_dims[2], (3, 3), (1, 1), (0, 0), True),
        (inner_dims[2], inner_dims[3], (3, 3), (1, 1), (0, 0), True),
        (inner_dims[3], inner_dims[4], (3, 3), (1, 1), (0, 0), True),
        (inner_dims[4], 1,             (4, 3), (1, 1), (0, 0), False),
    ]
    params = []
    for i, (cin, cout, k, s, p, relu) in enumerate(layer_defs):
        wkey, bkey = jax.random.split(jax.random.fold_in(key, i))
        fan_in = cin * k[0] * k[1]
        bound = 1.0 / np.sqrt(fan_in)
        w = jax.random.uniform(wkey, (cin, cout, k[0], k[1]),
                               jnp.float32, -bound, bound)
        b = jax.random.uniform(bkey, (cout,), jnp.float32, -bound, bound)
        params.append((w, b, s, p, relu))
    return params


# ---------------------------------------------------------------------------
# Init-time prep: fold each ConvTranspose2d into (S taps, B_cat, bias) blocks,
# zero-pad to (8,128) alignment and concatenate into 3 constant slabs.
# ---------------------------------------------------------------------------
def prepare_fused(params, N, H, W):
    LANE, SUB = 128, 8
    s_blocks, b_blocks, bias_blocks = [], [], []
    meta = []
    s_off = b_off = bias_off = 0
    curH, curW = H, W
    last_Cout = 1

    for (w, b, stride, padding, relu) in params:
        w_np = np.asarray(w, np.float32)
        b_np = np.asarray(b, np.float32)
        Cin, Cout, kH, kW = w_np.shape
        sh, sw = stride
        ph, pw = padding
        eph, epw = kH - 1 - ph, kW - 1 - pw
        Ho = (curH - 1) * sh - 2 * ph + kH
        Wo = (curW - 1) * sw - 2 * pw + kW

        rin, rout = N * curH, N * Ho
        lin, lout = curW * Cin, Wo * Cout
        rin_p, rout_p = _rup(rin, SUB), _rup(rout, SUB)
        lin_p, lout_p = _rup(lin, LANE), _rup(lout, LANE)
        # TODO(synk): on v6e/v7x, bumping the 120-lane layer to 256 lanes would
        # fill the 2x256 MXU better; kept at 128-multiples for simplicity.

        # flipped kernel in (kH, kW, Cin, Cout) layout
        wf = np.transpose(np.flip(w_np, (2, 3)), (2, 3, 0, 1))

        # --- B_cat: folds kw loop, W-stride/pad and channel contraction for all
        # kh taps; tap kh occupies the 128-aligned lane window [kh*lout_p, ...).
        bcat = np.zeros((lin_p, kH * lout_p), np.float32)
        for kh in range(kH):
            for wi in range(curW):
                for wo in range(Wo):
                    kw = epw + wi * sw - wo
                    if 0 <= kw < kW:
                        bcat[wi * Cin:(wi + 1) * Cin,
                             kh * lout_p + wo * Cout:
                             kh * lout_p + (wo + 1) * Cout] = wf[kh, kw]
        b_blocks.append(bcat)

        # --- S: exact 0/1 row-placement matrix per kh tap (H-stride/pad fold).
        # Columns for padded input rows stay zero -> padded rows never propagate.
        s_offs = []
        for kh in range(kH):
            s = np.zeros((rout_p, rin_p), np.float32)
            for n in range(N):
                for h in range(curH):
                    ho = eph + h * sh - kh
                    if 0 <= ho < Ho:
                        s[n * Ho + ho, n * curH + h] = 1.0
            s_blocks.append(s)
            s_offs.append(s_off)
            s_off += rout_p

        # --- bias, pre-broadcast over real output rows only (padding stays 0,
        # so padded rows/lanes of every activation slab are exactly zero).
        bias_blk = np.zeros((rout_p, lout_p), np.float32)
        bias_blk[:rout, :lout] = np.tile(b_np.reshape(1, Cout), (rout, Wo))
        bias_blocks.append(bias_blk)

        meta.append(dict(taps=int(kH), relu=bool(relu),
                         rin_p=int(rin_p), rout_p=int(rout_p),
                         lin_p=int(lin_p), lout_p=int(lout_p),
                         b_off=int(b_off), s_offs=tuple(int(o) for o in s_offs),
                         bias_off=int(bias_off)))
        b_off += lin_p
        bias_off += rout_p
        curH, curW = Ho, Wo
        last_Cout = Cout

    def _stack(blocks):
        wmax = _rup(max(blk.shape[1] for blk in blocks), LANE)
        return np.concatenate(
            [np.pad(blk, ((0, 0), (0, wmax - blk.shape[1]))) for blk in blocks],
            axis=0)

    s_slab = jnp.asarray(_stack(s_blocks))        # (672, 128)  ~0.34 MiB
    b_slab = jnp.asarray(_stack(b_blocks))        # (1024, 768) ~3.0 MiB
    bias_slab = jnp.asarray(_stack(bias_blocks))  # (208, 256)  ~0.2 MiB

    geom = dict(N=N, Ho=curH, Wo=curW, Cout=last_Cout,
                rout_p=meta[-1]["rout_p"], lout_p=meta[-1]["lout_p"],
                rin0_p=meta[0]["rin_p"], lin0_p=meta[0]["lin_p"])
    return dict(slabs=(s_slab, b_slab, bias_slab), meta=tuple(meta), geom=geom)


# ---------------------------------------------------------------------------
# Fused Pallas kernel: all 6 layers, fully VMEM resident, single grid step.
# ---------------------------------------------------------------------------
def _build_fused_kernel(meta):
    def kernel(a_ref, s_ref, b_ref, bias_ref, out_ref):
        a = a_ref[...]                                    # (rin_p0, lin_p0) f32
        for m in meta:                                    # static unroll: 6 layers
            taps = m["taps"]
            rin_p, rout_p = m["rin_p"], m["rout_p"]
            lin_p, lout_p = m["lin_p"], m["lout_p"]
            bo, so_list, io = m["b_off"], m["s_offs"], m["bias_off"]

            # stage 1: ONE wide dot for all kh taps (lane-concatenated B_cat)
            y = jnp.dot(a, b_ref[bo:bo + lin_p, :taps * lout_p],
                        preferred_element_type=jnp.float32)   # (rin_p, taps*lout_p)

            # stage 2: per-tap 0/1 placement dots accumulated onto the bias
            acc = bias_ref[io:io + rout_p, :lout_p]
            for t in range(taps):                        # static unroll over taps
                so = so_list[t]
                acc = acc + jnp.dot(s_ref[so:so + rout_p, :rin_p],
                                    y[:, t * lout_p:(t + 1) * lout_p],
                                    preferred_element_type=jnp.float32)
            if m["relu"]:
                acc = jnp.maximum(acc, 0.0)
            a = acc
        out_ref[...] = a.astype(out_ref.dtype)
    return kernel


def make_fused_forward(fused):
    s_slab, b_slab, bias_slab = fused["slabs"]
    meta, geom = fused["meta"], fused["geom"]
    kernel = _build_fused_kernel(meta)
    vmem = pl.BlockSpec(memory_space=pltpu.MemorySpace.VMEM)

    @jax.jit
    def forward(x_nchw):
        N, Cin, H, W = x_nchw.shape
        # NCHW -> packed 2-D slab A[n*H + h, w*Cin + c], padded to (8,128) mults.
        a0 = jnp.transpose(x_nchw.astype(jnp.float32),
                           (0, 2, 3, 1)).reshape(N * H, W * Cin)
        a0 = jnp.pad(a0, ((0, geom["rin0_p"] - N * H),
                          (0, geom["lin0_p"] - W * Cin)))
        out2 = pl.pallas_call(
            kernel,
            out_shape=jax.ShapeDtypeStruct((geom["rout_p"], geom["lout_p"]),
                                           jnp.float32),
            in_specs=[vmem, vmem, vmem, vmem],
            out_specs=vmem,
            compiler_params=pltpu.CompilerParams(
                vmem_limit_bytes=32 * 1024 * 1024),
        )(a0, s_slab, b_slab, bias_slab)
        # lane-dense padded output -> real extent
        out2 = out2[:geom["N"] * geom["Ho"], :geom["Wo"] * geom["Cout"]]
        if geom["Cout"] == 1:
            # single output channel: NHWC->NCHW is a pure reshape (no transpose)
            return out2.reshape(geom["N"], 1, geom["Ho"], geom["Wo"])
        out = out2.reshape(geom["N"], geom["Ho"], geom["Wo"], geom["Cout"])
        return jnp.transpose(out, (0, 3, 1, 2))

    return forward


# ---------------------------------------------------------------------------
# Pure-JAX reference (independent path) for the correctness check
# ---------------------------------------------------------------------------
def conv_transpose2d_ref(x_nhwc, w, b, stride, padding, relu):
    kH, kW = w.shape[2], w.shape[3]
    ker = jnp.transpose(jnp.flip(w, axis=(2, 3)), (2, 3, 0, 1))  # HWIO
    out = jax.lax.conv_general_dilated(
        x_nhwc, ker, window_strides=(1, 1),
        padding=((kH - 1 - padding[0],) * 2, (kW - 1 - padding[1],) * 2),
        lhs_dilation=stride,
        dimension_numbers=("NHWC", "HWIO", "NHWC"))
    out = out + b.reshape(1, 1, 1, -1)
    return jnp.maximum(out, 0.0) if relu else out


def decoder_forward_ref(x_nchw, params):
    x = jnp.transpose(x_nchw, (0, 2, 3, 1))
    for (w, b, s, p, relu) in params:
        x = conv_transpose2d_ref(x, w, b, s, p, relu)
    return jnp.transpose(x, (0, 3, 1, 2))


if __name__ == "__main__":
    key = jax.random.PRNGKey(0)
    input_dim = 4
    inner_dims = (8, 8, 8, 8, 8)
    N, H, W = 2, 4, 4

    params = init_decoder_params(key, input_dim, inner_dims)
    x = jax.random.normal(jax.random.fold_in(key, 1000),
                          (N, input_dim, H, W), jnp.float32)

    fused = prepare_fused(params, N, H, W)
    forward = make_fused_forward(fused)

    out = jax.block_until_ready(forward(x))          # fused Pallas path
    ref = jax.block_until_ready(decoder_forward_ref(x, params))

    assert out.shape == (2, 1, 22, 21), out.shape
    assert ref.shape == out.shape, (ref.shape, out.shape)
    np.testing.assert_allclose(np.asarray(out), np.asarray(ref),
                               rtol=1e-4, atol=1e-4)
    print("KERNEL_OK")
</pallas_src>

<mosaic_0001>
module attributes {stable_mosaic.version = 11 : i64} {
  func.func @kernel(%arg0: memref<8x128xf32, #tpu.memory_space<vmem>>, %arg1: memref<672x128xf32, #tpu.memory_space<vmem>>, %arg2: memref<1024x768xf32, #tpu.memory_space<vmem>>, %arg3: memref<208x256xf32, #tpu.memory_space<vmem>>, %arg4: memref<48x128xf32, #tpu.memory_space<vmem>>) attributes {dimension_semantics = [], scalar_prefetch = 0 : i64, scratch_operands = 0 : i64, tpu.core_type = #tpu.core_type<tc>} {
    %c0 = arith.constant 0 : index
    %c0_0 = arith.constant 0 : index
    %0 = vector.load %arg0[%c0, %c0_0] : memref<8x128xf32, #tpu.memory_space<vmem>>, vector<8x128xf32>
    %c0_1 = arith.constant 0 : index
    %c0_2 = arith.constant 0 : index
    %1 = vector.load %arg2[%c0_1, %c0_2] : memref<1024x768xf32, #tpu.memory_space<vmem>>, vector<128x384xf32>
    %cst = arith.constant dense<0.000000e+00> : vector<8x384xf32>
    %2 = tpu.matmul %0, %1, %cst {dimension_numbers = #tpu.dot_dimension_numbers<[1], [0], [0], [1], [0, 0, 1, 1], [], []>} : vector<8x128xf32>, vector<128x384xf32>, vector<8x384xf32> -> vector<8x384xf32>
    %c0_3 = arith.constant 0 : index
    %c0_4 = arith.constant 0 : index
    %3 = vector.load %arg3[%c0_3, %c0_4] : memref<208x256xf32, #tpu.memory_space<vmem>>, vector<16x128xf32>
    %c0_5 = arith.constant 0 : index
    %c0_6 = arith.constant 0 : index
    %4 = vector.load %arg1[%c0_5, %c0_6] : memref<672x128xf32, #tpu.memory_space<vmem>>, vector<16x8xf32>
    %5 = vector.extract_strided_slice %2 {offsets = [0, 0], sizes = [8, 128], strides = [1, 1]} : vector<8x384xf32> to vector<8x128xf32>
    %cst_7 = arith.constant dense<0.000000e+00> : vector<16x128xf32>
    %6 = tpu.matmul %4, %5, %cst_7 {dimension_numbers = #tpu.dot_dimension_numbers<[1], [0], [0], [1], [0, 0, 1, 1], [], []>} : vector<16x8xf32>, vector<8x128xf32>, vector<16x128xf32> -> vector<16x128xf32>
    %7 = arith.addf %3, %6 : vector<16x128xf32>
    %c16 = arith.constant 16 : index
    %c0_8 = arith.constant 0 : index
    %8 = vector.load %arg1[%c16, %c0_8] : memref<672x128xf32, #tpu.memory_space<vmem>>, vector<16x8xf32>
    %9 = vector.extract_strided_slice %2 {offsets = [0, 128], sizes = [8, 128], strides = [1, 1]} : vector<8x384xf32> to vector<8x128xf32>
    %cst_9 = arith.constant dense<0.000000e+00> : vector<16x128xf32>
    %10 = tpu.matmul %8, %9, %cst_9 {dimension_numbers = #tpu.dot_dimension_numbers<[1], [0], [0], [1], [0, 0, 1, 1], [], []>} : vector<16x8xf32>, vector<8x128xf32>, vector<16x128xf32> -> vector<16x128xf32>
    %11 = arith.addf %7, %10 : vector<16x128xf32>
    %c32 = arith.constant 32 : index
    %c0_10 = arith.constant 0 : index
    %12 = vector.load %arg1[%c32, %c0_10] : memref<672x128xf32, #tpu.memory_space<vmem>>, vector<16x8xf32>
    %13 = vector.extract_strided_slice %2 {offsets = [0, 256], sizes = [8, 128], strides = [1, 1]} : vector<8x384xf32> to vector<8x128xf32>
    %cst_11 = arith.constant dense<0.000000e+00> : vector<16x128xf32>
    %14 = tpu.matmul %12, %13, %cst_11 {dimension_numbers = #tpu.dot_dimension_numbers<[1], [0], [0], [1], [0, 0, 1, 1], [], []>} : vector<16x8xf32>, vector<8x128xf32>, vector<16x128xf32> -> vector<16x128xf32>
    %15 = arith.addf %11, %14 : vector<16x128xf32>
    %cst_12 = arith.constant 0.000000e+00 : f32
    %16 = vector.broadcast %cst_12 : f32 to vector<16x128xf32>
    %17 = arith.maximumf %15, %16 : vector<16x128xf32>
    %c128 = arith.constant 128 : index
    %c0_13 = arith.constant 0 : index
    %18 = vector.load %arg2[%c128, %c0_13] : memref<1024x768xf32, #tpu.memory_space<vmem>>, vector<128x384xf32>
    %cst_14 = arith.constant dense<0.000000e+00> : vector<16x384xf32>
    %19 = tpu.matmul %17, %18, %cst_14 {dimension_numbers = #tpu.dot_dimension_numbers<[1], [0], [0], [1], [0, 0, 1, 1], [], []>} : vector<16x128xf32>, vector<128x384xf32>, vector<16x384xf32> -> vector<16x384xf32>
    %c16_15 = arith.constant 16 : index
    %c0_16 = arith.constant 0 : index
    %20 = vector.load %arg3[%c16_15, %c0_16] : memref<208x256xf32, #tpu.memory_space<vmem>>, vector<32x128xf32>
    %c48 = arith.constant 48 : index
    %c0_17 = arith.constant 0 : index
    %21 = vector.load %arg1[%c48, %c0_17] : memref<672x128xf32, #tpu.memory_space<vmem>>, vector<32x16xf32>
    %22 = vector.extract_strided_slice %19 {offsets = [0, 0], sizes = [16, 128], strides = [1, 1]} : vector<16x384xf32> to vector<16x128xf32>
    %cst_18 = arith.constant dense<0.000000e+00> : vector<32x128xf32>
    %23 = tpu.matmul %21, %22, %cst_18 {dimension_numbers = #tpu.dot_dimension_numbers<[1], [0], [0], [1], [0, 0, 1, 1], [], []>} : vector<32x16xf32>, vector<16x128xf32>, vector<32x128xf32> -> vector<32x128xf32>
    %24 = arith.addf %20, %23 : vector<32x128xf32>
    %c80 = arith.constant 80 : index
    %c0_19 = arith.constant 0 : index
    %25 = vector.load %arg1[%c80, %c0_19] : memref<672x128xf32, #tpu.memory_space<vmem>>, vector<32x16xf32>
    %26 = vector.extract_strided_slice %19 {offsets = [0, 128], sizes = [16, 128], strides = [1, 1]} : vector<16x384xf32> to vector<16x128xf32>
    %cst_20 = arith.constant dense<0.000000e+00> : vector<32x128xf32>
    %27 = tpu.matmul %25, %26, %cst_20 {dimension_numbers = #tpu.dot_dimension_numbers<[1], [0], [0], [1], [0, 0, 1, 1], [], []>} : vector<32x16xf32>, vector<16x128xf32>, vector<32x128xf32> -> vector<32x128xf32>
    %28 = arith.addf %24, %27 : vector<32x128xf32>
    %c112 = arith.constant 112 : index
    %c0_21 = arith.constant 0 : index
    %29 = vector.load %arg1[%c112, %c0_21] : memref<672x128xf32, #tpu.memory_space<vmem>>, vector<32x16xf32>
    %30 = vector.extract_strided_slice %19 {offsets = [0, 256], sizes = [16, 128], strides = [1, 1]} : vector<16x384xf32> to vector<16x128xf32>
    %cst_22 = arith.constant dense<0.000000e+00> : vector<32x128xf32>
    %31 = tpu.matmul %29, %30, %cst_22 {dimension_numbers = #tpu.dot_dimension_numbers<[1], [0], [0], [1], [0, 0, 1, 1], [], []>} : vector<32x16xf32>, vector<16x128xf32>, vector<32x128xf32> -> vector<32x128xf32>
    %32 = arith.addf %28, %31 : vector<32x128xf32>
    %cst_23 = arith.constant 0.000000e+00 : f32
    %33 = vector.broadcast %cst_23 : f32 to vector<32x128xf32>
    %34 = arith.maximumf %32, %33 : vector<32x128xf32>
    %c256 = arith.constant 256 : index
    %c0_24 = arith.constant 0 : index
    %35 = vector.load %arg2[%c256, %c0_24] : memref<1024x768xf32, #tpu.memory_space<vmem>>, vector<128x384xf32>
    %cst_25 = arith.constant dense<0.000000e+00> : vector<32x384xf32>
    %36 = tpu.matmul %34, %35, %cst_25 {dimension_numbers = #tpu.dot_dimension_numbers<[1], [0], [0], [1], [0, 0, 1, 1], [], []>} : vector<32x128xf32>, vector<128x384xf32>, vector<32x384xf32> -> vector<32x384xf32>
    %c48_26 = arith.constant 48 : index
    %c0_27 = arith.constant 0 : index
    %37 = vector.load %arg3[%c48_26, %c0_27] : memref<208x256xf32, #tpu.memory_space<vmem>>, vector<32x128xf32>
    %c144 = arith.constant 144 : index
    %c0_28 = arith.constant 0 : index
    %38 = vector.load %arg1[%c144, %c0_28] : memref<672x128xf32, #tpu.memory_space<vmem>>, vector<32x32xf32>
    %39 = vector.extract_strided_slice %36 {offsets = [0, 0], sizes = [32, 128], strides = [1, 1]} : vector<32x384xf32> to vector<32x128xf32>
    %cst_29 = arith.constant dense<0.000000e+00> : vector<32x128xf32>
    %40 = tpu.matmul %38, %39, %cst_29 {dimension_numbers = #tpu.dot_dimension_numbers<[1], [0], [0], [1], [0, 0, 1, 1], [], []>} : vector<32x32xf32>, vector<32x128xf32>, vector<32x128xf32> -> vector<32x128xf32>
    %41 = arith.addf %37, %40 : vector<32x128xf32>
    %c176 = arith.constant 176 : index
    %c0_30 = arith.constant 0 : index
    %42 = vector.load %arg1[%c176, %c0_30] : memref<672x128xf32, #tpu.memory_space<vmem>>, vector<32x32xf32>
    %43 = vector.extract_strided_slice %36 {offsets = [0, 128], sizes = [32, 128], strides = [1, 1]} : vector<32x384xf32> to vector<32x128xf32>
    %cst_31 = arith.constant dense<0.000000e+00> : vector<32x128xf32>
    %44 = tpu.matmul %42, %43, %cst_31 {dimension_numbers = #tpu.dot_dimension_numbers<[1], [0], [0], [1], [0, 0, 1, 1], [], []>} : vector<32x32xf32>, vector<32x128xf32>, vector<32x128xf32> -> vector<32x128xf32>
    %45 = arith.addf %41, %44 : vector<32x128xf32>
    %c208 = arith.constant 208 : index
    %c0_32 = arith.constant 0 : index
    %46 = vector.load %arg1[%c208, %c0_32] : memref<672x128xf32, #tpu.memory_space<vmem>>, vector<32x32xf32>
    %47 = vector.extract_strided_slice %36 {offsets = [0, 256], sizes = [32, 128], strides = [1, 1]} : vector<32x384xf32> to vector<32x128xf32>
    %cst_33 = arith.constant dense<0.000000e+00> : vector<32x128xf32>
    %48 = tpu.matmul %46, %47, %cst_33 {dimension_numbers = #tpu.dot_dimension_numbers<[1], [0], [0], [1], [0, 0, 1, 1], [], []>} : vector<32x32xf32>, vector<32x128xf32>, vector<32x128xf32> -> vector<32x128xf32>
    %49 = arith.addf %45, %48 : vector<32x128xf32>
    %cst_34 = arith.constant 0.000000e+00 : f32
    %50 = vector.broadcast %cst_34 : f32 to vector<32x128xf32>
    %51 = arith.maximumf %49, %50 : vector<32x128xf32>
    %c384 = arith.constant 384 : index
    %c0_35 = arith.constant 0 : index
    %52 = vector.load %arg2[%c384, %c0_35] : memref<1024x768xf32, #tpu.memory_space<vmem>>, vector<128x768xf32>
    %cst_36 = arith.constant dense<0.000000e+00> : vector<32x768xf32>
    %53 = tpu.matmul %51, %52, %cst_36 {dimension_numbers = #tpu.dot_dimension_numbers<[1], [0], [0], [1], [0, 0, 1, 1], [], []>} : vector<32x128xf32>, vector<128x768xf32>, vector<32x768xf32> -> vector<32x768xf32>
    %c80_37 = arith.constant 80 : index
    %c0_38 = arith.constant 0 : index
    %54 = vector.load %arg3[%c80_37, %c0_38] : memref<208x256xf32, #tpu.memory_space<vmem>>, vector<40x256xf32>
    %c240 = arith.constant 240 : index
    %c0_39 = arith.constant 0 : index
    %55 = vector.load %arg1[%c240, %c0_39] : memref<672x128xf32, #tpu.memory_space<vmem>>, vector<40x32xf32>
    %56 = vector.extract_strided_slice %53 {offsets = [0, 0], sizes = [32, 256], strides = [1, 1]} : vector<32x768xf32> to vector<32x256xf32>
    %cst_40 = arith.constant dense<0.000000e+00> : vector<40x256xf32>
    %57 = tpu.matmul %55, %56, %cst_40 {dimension_numbers = #tpu.dot_dimension_numbers<[1], [0], [0], [1], [0, 0, 1, 1], [], []>} : vector<40x32xf32>, vector<32x256xf32>, vector<40x256xf32> -> vector<40x256xf32>
    %58 = arith.addf %54, %57 : vector<40x256xf32>
    %c280 = arith.constant 280 : index
    %c0_41 = arith.constant 0 : index
    %59 = vector.load %arg1[%c280, %c0_41] : memref<672x128xf32, #tpu.memory_space<vmem>>, vector<40x32xf32>
    %60 = vector.extract_strided_slice %53 {offsets = [0, 256], sizes = [32, 256], strides = [1, 1]} : vector<32x768xf32> to vector<32x256xf32>
    %cst_42 = arith.constant dense<0.000000e+00> : vector<40x256xf32>
    %61 = tpu.matmul %59, %60, %cst_42 {dimension_numbers = #tpu.dot_dimension_numbers<[1], [0], [0], [1], [0, 0, 1, 1], [], []>} : vector<40x32xf32>, vector<32x256xf32>, vector<40x256xf32> -> vector<40x256xf32>
    %62 = arith.addf %58, %61 : vector<40x256xf32>
    %c320 = arith.constant 320 : index
    %c0_43 = arith.constant 0 : index
    %63 = vector.load %arg1[%c320, %c0_43] : memref<672x128xf32, #tpu.memory_space<vmem>>, vector<40x32xf32>
    %64 = vector.extract_strided_slice %53 {offsets = [0, 512], sizes = [32, 256], strides = [1, 1]} : vector<32x768xf32> to vector<32x256xf32>
    %cst_44 = arith.constant dense<0.000000e+00> : vector<40x256xf32>
    %65 = tpu.matmul %63, %64, %cst_44 {dimension_numbers = #tpu.dot_dimension_numbers<[1], [0], [0], [1], [0, 0, 1, 1], [], []>} : vector<40x32xf32>, vector<32x256xf32>, vector<40x256xf32> -> vector<40x256xf32>
    %66 = arith.addf %62, %65 : vector<40x256xf32>
    %cst_45 = arith.constant 0.000000e+00 : f32
    %67 = vector.broadcast %cst_45 : f32 to vector<40x256xf32>
    %68 = arith.maximumf %66, %67 : vector<40x256xf32>
    %c512 = arith.constant 512 : index
    %c0_46 = arith.constant 0 : index
    %69 = vector.load %arg2[%c512, %c0_46] : memref<1024x768xf32, #tpu.memory_space<vmem>>, vector<256x768xf32>
    %cst_47 = arith.constant dense<0.000000e+00> : vector<40x768xf32>
    %70 = tpu.matmul %68, %69, %cst_47 {dimension_numbers = #tpu.dot_dimension_numbers<[1], [0], [0], [1], [0, 0, 1, 1], [], []>} : vector<40x256xf32>, vector<256x768xf32>, vector<40x768xf32> -> vector<40x768xf32>
    %c120 = arith.constant 120 : index
    %c0_48 = arith.constant 0 : index
    %71 = vector.load %arg3[%c120, %c0_48] : memref<208x256xf32, #tpu.memory_space<vmem>>, vector<40x256xf32>
    %c360 = arith.constant 360 : index
    %c0_49 = arith.constant 0 : index
    %72 = vector.load %arg1[%c360, %c0_49] : memref<672x128xf32, #tpu.memory_space<vmem>>, vector<40x40xf32>
    %73 = vector.extract_strided_slice %70 {offsets = [0, 0], sizes = [40, 256], strides = [1, 1]} : vector<40x768xf32> to vector<40x256xf32>
    %cst_50 = arith.constant dense<0.000000e+00> : vector<40x256xf32>
    %74 = tpu.matmul %72, %73, %cst_50 {dimension_numbers = #tpu.dot_dimension_numbers<[1], [0], [0], [1], [0, 0, 1, 1], [], []>} : vector<40x40xf32>, vector<40x256xf32>, vector<40x256xf32> -> vector<40x256xf32>
    %75 = arith.addf %71, %74 : vector<40x256xf32>
    %c400 = arith.constant 400 : index
    %c0_51 = arith.constant 0 : index
    %76 = vector.load %arg1[%c400, %c0_51] : memref<672x128xf32, #tpu.memory_space<vmem>>, vector<40x40xf32>
    %77 = vector.extract_strided_slice %70 {offsets = [0, 256], sizes = [40, 256], strides = [1, 1]} : vector<40x768xf32> to vector<40x256xf32>
    %cst_52 = arith.constant dense<0.000000e+00> : vector<40x256xf32>
    %78 = tpu.matmul %76, %77, %cst_52 {dimension_numbers = #tpu.dot_dimension_numbers<[1], [0], [0], [1], [0, 0, 1, 1], [], []>} : vector<40x40xf32>, vector<40x256xf32>, vector<40x256xf32> -> vector<40x256xf32>
    %79 = arith.addf %75, %78 : vector<40x256xf32>
    %c440 = arith.constant 440 : index
    %c0_53 = arith.constant 0 : index
    %80 = vector.load %arg1[%c440, %c0_53] : memref<672x128xf32, #tpu.memory_space<vmem>>, vector<40x40xf32>
    %81 = vector.extract_strided_slice %70 {offsets = [0, 512], sizes = [40, 256], strides = [1, 1]} : vector<40x768xf32> to vector<40x256xf32>
    %cst_54 = arith.constant dense<0.000000e+00> : vector<40x256xf32>
    %82 = tpu.matmul %80, %81, %cst_54 {dimension_numbers = #tpu.dot_dimension_numbers<[1], [0], [0], [1], [0, 0, 1, 1], [], []>} : vector<40x40xf32>, vector<40x256xf32>, vector<40x256xf32> -> vector<40x256xf32>
    %83 = arith.addf %79, %82 : vector<40x256xf32>
    %cst_55 = arith.constant 0.000000e+00 : f32
    %84 = vector.broadcast %cst_55 : f32 to vector<40x256xf32>
    %85 = arith.maximumf %83, %84 : vector<40x256xf32>
    %c768 = arith.constant 768 : index
    %c0_56 = arith.constant 0 : index
    %86 = vector.load %arg2[%c768, %c0_56] : memref<1024x768xf32, #tpu.memory_space<vmem>>, vector<256x512xf32>
    %cst_57 = arith.constant dense<0.000000e+00> : vector<40x512xf32>
    %87 = tpu.matmul %85, %86, %cst_57 {dimension_numbers = #tpu.dot_dimension_numbers<[1], [0], [0], [1], [0, 0, 1, 1], [], []>} : vector<40x256xf32>, vector<256x512xf32>, vector<40x512xf32> -> vector<40x512xf32>
    %c160 = arith.constant 160 : index
    %c0_58 = arith.constant 0 : index
    %88 = vector.load %arg3[%c160, %c0_58] : memref<208x256xf32, #tpu.memory_space<vmem>>, vector<48x128xf32>
    %c480 = arith.constant 480 : index
    %c0_59 = arith.constant 0 : index
    %89 = vector.load %arg1[%c480, %c0_59] : memref<672x128xf32, #tpu.memory_space<vmem>>, vector<48x40xf32>
    %90 = vector.extract_strided_slice %87 {offsets = [0, 0], sizes = [40, 128], strides = [1, 1]} : vector<40x512xf32> to vector<40x128xf32>
    %cst_60 = arith.constant dense<0.000000e+00> : vector<48x128xf32>
    %91 = tpu.matmul %89, %90, %cst_60 {dimension_numbers = #tpu.dot_dimension_numbers<[1], [0], [0], [1], [0, 0, 1, 1], [], []>} : vector<48x40xf32>, vector<40x128xf32>, vector<48x128xf32> -> vector<48x128xf32>
    %92 = arith.addf %88, %91 : vector<48x128xf32>
    %c528 = arith.constant 528 : index
    %c0_61 = arith.constant 0 : index
    %93 = vector.load %arg1[%c528, %c0_61] : memref<672x128xf32, #tpu.memory_space<vmem>>, vector<48x40xf32>
    %94 = vector.extract_strided_slice %87 {offsets = [0, 128], sizes = [40, 128], strides = [1, 1]} : vector<40x512xf32> to vector<40x128xf32>
    %cst_62 = arith.constant dense<0.000000e+00> : vector<48x128xf32>
    %95 = tpu.matmul %93, %94, %cst_62 {dimension_numbers = #tpu.dot_dimension_numbers<[1], [0], [0], [1], [0, 0, 1, 1], [], []>} : vector<48x40xf32>, vector<40x128xf32>, vector<48x128xf32> -> vector<48x128xf32>
    %96 = arith.addf %92, %95 : vector<48x128xf32>
    %c576 = arith.constant 576 : index
    %c0_63 = arith.constant 0 : index
    %97 = vector.load %arg1[%c576, %c0_63] : memref<672x128xf32, #tpu.memory_space<vmem>>, vector<48x40xf32>
    %98 = vector.extract_strided_slice %87 {offsets = [0, 256], sizes = [40, 128], strides = [1, 1]} : vector<40x512xf32> to vector<40x128xf32>
    %cst_64 = arith.constant dense<0.000000e+00> : vector<48x128xf32>
    %99 = tpu.matmul %97, %98, %cst_64 {dimension_numbers = #tpu.dot_dimension_numbers<[1], [0], [0], [1], [0, 0, 1, 1], [], []>} : vector<48x40xf32>, vector<40x128xf32>, vector<48x128xf32> -> vector<48x128xf32>
    %100 = arith.addf %96, %99 : vector<48x128xf32>
    %c624 = arith.constant 624 : index
    %c0_65 = arith.constant 0 : index
    %101 = vector.load %arg1[%c624, %c0_65] : memref<672x128xf32, #tpu.memory_space<vmem>>, vector<48x40xf32>
    %102 = vector.extract_strided_slice %87 {offsets = [0, 384], sizes = [40, 128], strides = [1, 1]} : vector<40x512xf32> to vector<40x128xf32>
    %cst_66 = arith.constant dense<0.000000e+00> : vector<48x128xf32>
    %103 = tpu.matmul %101, %102, %cst_66 {dimension_numbers = #tpu.dot_dimension_numbers<[1], [0], [0], [1], [0, 0, 1, 1], [], []>} : vector<48x40xf32>, vector<40x128xf32>, vector<48x128xf32> -> vector<48x128xf32>
    %104 = arith.addf %100, %103 : vector<48x128xf32>
    %c0_67 = arith.constant 0 : index
    %c0_68 = arith.constant 0 : index
    %105 = vector.load %arg4[%c0_67, %c0_68] : memref<48x128xf32, #tpu.memory_space<vmem>>, vector<48x128xf32>
    tpu.vector_store %arg4[%c0_67, %c0_68], %104 {strides = array<i32>} : memref<48x128xf32, #tpu.memory_space<vmem>>, vector<48x128xf32>,
    return
  }
}

</mosaic_0001>

<llo_original>
// kernel: forward.1
$region0: #{forward.1}
  #allocation0 [shape = 'u32[]', space=smem, size = 0x4, offset = 0x4, fixed_abs, tag = 'smem constant byte address 0x4 - core index']
  #allocation1 [shape = 'u32[144,128]{1,0:T(1,128)}', space=vmem, size = 0x12000, scoped, tag = 'internal scratch']
  %s0 = inlined_call_operand.vmem [shape: f32[8,128], index: 0, kind: input, shape index: {}]
  %s1 = inlined_call_operand.hbm [shape: f32[672,128], index: 1, kind: input, shape index: {}]
  %s2 = inlined_call_operand.hbm [shape: f32[1024,768], index: 2, kind: input, shape index: {}]
  %s3 = inlined_call_operand.hbm [shape: f32[208,256], index: 3, kind: input, shape index: {}]
  %s4 = inlined_call_operand.vmem [shape: f32[48,128], index: 4, kind: output, shape index: {}]
  %s5 = sld [smem:[#allocation0]]
  $region38: #{forward.1} parent=0
    _
  %s7 = ssub.s32 1, %s5
  %s8 = scalar_select 0, %s7, %s5
  $region1: #{forward.1} parent=0
    #allocation2 [shape = 'u8[344064]{0}', space=vmem, size = 0x54000, scoped, tag = 'input window, operand 1, single buffered']
    #allocation3 [shape = 's32[1]{0}', space=sflag, size = 0x4, scoped, tag = 'scoped memory for forward.1']
    #allocation4 [shape = 'u8[3145728]{0}', space=vmem, size = 0x300000, scoped, tag = 'input window, operand 2, single buffered']
    #allocation5 [shape = 's32[1]{0}', space=sflag, size = 0x4, scoped, tag = 'scoped memory for forward.1']
    #allocation6 [shape = 'u8[212992]{0}', space=vmem, size = 0x34000, scoped, tag = 'input window, operand 3, single buffered']
    %9 = vsyncpa [#allocation3], 0
    %10 = vsyncpa [#allocation5], 0
    // Predicated region
    $region2: #{forward.1} parent=1 // pred_check
      _
    $region3: #{forward.1} parent=1 // pred_check_branch
      %12 = sbr.rel (0) target = $region5
    $region4: #{forward.1} parent=1 // pred_region
      _
    $region5: #{forward.1} parent=1 // pred_fallthru
      _
    // Predicated region
    $region6: #{forward.1} parent=1 // pred_check
      _
    $region7: #{forward.1} parent=1 // pred_check_branch
      %14 = sbr.rel (0) target = $region9
    $region8: #{forward.1} parent=1 // pred_region
      %s16 = ssub.s32 10752, 10752
      %17 = vsyncadd [#allocation3], %s16
      %s18 = sshll.u32 [#allocation2], 4
      %s19 = int_to_ptr.vmem [resolvable:$true] %s18
      %24 = dma.hbm_to_vmem [thread:$0]  %s1, 10752, %s19, [#allocation3], 128, 128, 8
    $region9: #{forward.1} parent=1 // pred_fallthru
      _
    // Predicated region
    $region10: #{forward.1} parent=1 // pred_check
      _
    $region11: #{forward.1} parent=1 // pred_check_branch
      %26 = sbr.rel (0) target = $region13
    $region12: #{forward.1} parent=1 // pred_region
      %s28 = ssub.s32 98304, 98304
      %29 = vsyncadd [#allocation5], %s28
      %s30 = sshll.u32 [#allocation4], 4
      %s31 = int_to_ptr.vmem [resolvable:$true] %s30
      %36 = dma.hbm_to_vmem [thread:$0]  %s2, 98304, %s31, [#allocation5], 768, 768, 48
    $region13: #{forward.1} parent=1 // pred_fallthru
      _
    // Predicated region
    $region14: #{forward.1} parent=1 // pred_check
      _
    $region15: #{forward.1} parent=1 // pred_check_branch
      %38 = sbr.rel (0) target = $region17
    $region16: #{forward.1} parent=1 // pred_region
      %s40 = ssub.s32 6656, 6656
      %41 = vsyncadd [#allocation5], %s40
      %s42 = sshll.u32 [#allocation6], 4
      %s43 = int_to_ptr.vmem [resolvable:$true] %s42
      %48 = dma.hbm_to_vmem [thread:$0]  %s3, 6656, %s43, [#allocation5], 256, 256, 16
    $region17: #{forward.1} parent=1 // pred_fallthru
      _
    // Predicated region
    $region18: #{forward.1} parent=1 // pred_check
      _
    $region19: #{forward.1} parent=1 // pred_check_branch
      %50 = sbr.rel (0) target = $region21
    $region20: #{forward.1} parent=1 // pred_region
      %51 = dma.done [#allocation3], 10752
    $region21: #{forward.1} parent=1 // pred_fallthru
      _
    // Predicated region
    $region22: #{forward.1} parent=1 // pred_check
      _
    $region23: #{forward.1} parent=1 // pred_check_branch
      %53 = sbr.rel (0) target = $region25
    $region24: #{forward.1} parent=1 // pred_region
      %54 = dma.done [#allocation5], 98304
    $region25: #{forward.1} parent=1 // pred_fallthru
      _
    // Predicated region
    $region26: #{forward.1} parent=1 // pred_check
      _
    $region27: #{forward.1} parent=1 // pred_check_branch
      %56 = sbr.rel (0) target = $region29
    $region28: #{forward.1} parent=1 // pred_region
      %57 = dma.done [#allocation5], 6656
    $region29: #{forward.1} parent=1 // pred_fallthru
      _
    %v58 = vld [vmem:[%s0] sm:$0xff]
    %v59 = vld [vmem:[#allocation4] sm:$0xff]
    %v60 = vld [vmem:[#allocation4 + $0x8] sm:$0xff]
    %v61 = vld [vmem:[#allocation4 + $0x10] sm:$0xff]
    %v62 = vld [vmem:[#allocation4 + $0x30] sm:$0xff]
    %v63 = vld [vmem:[#allocation4 + $0x38] sm:$0xff]
    %v64 = vld [vmem:[#allocation4 + $0x40] sm:$0xff]
    %v65 = vld [vmem:[#allocation4 + $0x60] sm:$0xff]
    %v66 = vld [vmem:[#allocation4 + $0x68] sm:$0xff]
    %v67 = vld [vmem:[#allocation4 + $0x70] sm:$0xff]
    %v68 = vld [vmem:[#allocation4 + $0x90] sm:$0xff]
    %v69 = vld [vmem:[#allocation4 + $0x98] sm:$0xff]
    %v70 = vld [vmem:[#allocation4 + $0xa0] sm:$0xff]
    %v71 = vld [vmem:[#allocation4 + $0xc0] sm:$0xff]
    %v72 = vld [vmem:[#allocation4 + $0xc8] sm:$0xff]
    %v73 = vld [vmem:[#allocation4 + $0xd0] sm:$0xff]
    %v74 = vld [vmem:[#allocation4 + $0xf0] sm:$0xff]
    %v75 = vld [vmem:[#allocation4 + $0xf8] sm:$0xff]
    %v76 = vld [vmem:[#allocation4 + $0x100] sm:$0xff]
    %v77 = vld [vmem:[#allocation4 + $0x120] sm:$0xff]
    %v78 = vld [vmem:[#allocation4 + $0x128] sm:$0xff]
    %v79 = vld [vmem:[#allocation4 + $0x130] sm:$0xff]
    %v80 = vld [vmem:[#allocation4 + $0x150] sm:$0xff]
    %v81 = vld [vmem:[#allocation4 + $0x158] sm:$0xff]
    %v82 = vld [vmem:[#allocation4 + $0x160] sm:$0xff]
    %v83 = vld [vmem:[#allocation4 + $0x180] sm:$0xff]
    %v84 = vld [vmem:[#allocation4 + $0x188] sm:$0xff]
    %v85 = vld [vmem:[#allocation4 + $0x190] sm:$0xff]
    %v86 = vld [vmem:[#allocation4 + $0x1b0] sm:$0xff]
    %v87 = vld [vmem:[#allocation4 + $0x1b8] sm:$0xff]
    %v88 = vld [vmem:[#allocation4 + $0x1c0] sm:$0xff]
    %v89 = vld [vmem:[#allocation4 + $0x1e0] sm:$0xff]
    %v90 = vld [vmem:[#allocation4 + $0x1e8] sm:$0xff]
    %v91 = vld [vmem:[#allocation4 + $0x1f0] sm:$0xff]
    %v92 = vld [vmem:[#allocation4 + $0x210] sm:$0xff]
    %v93 = vld [vmem:[#allocation4 + $0x218] sm:$0xff]
    %v94 = vld [vmem:[#allocation4 + $0x220] sm:$0xff]
    %v95 = vld [vmem:[#allocation4 + $0x240] sm:$0xff]
    %v96 = vld [vmem:[#allocation4 + $0x248] sm:$0xff]
    %v97 = vld [vmem:[#allocation4 + $0x250] sm:$0xff]
    %v98 = vld [vmem:[#allocation4 + $0x270] sm:$0xff]
    %v99 = vld [vmem:[#allocation4 + $0x278] sm:$0xff]
    %v100 = vld [vmem:[#allocation4 + $0x280] sm:$0xff]
    %v101 = vld [vmem:[#allocation4 + $0x2a0] sm:$0xff]
    %v102 = vld [vmem:[#allocation4 + $0x2a8] sm:$0xff]
    %v103 = vld [vmem:[#allocation4 + $0x2b0] sm:$0xff]
    %v104 = vld [vmem:[#allocation4 + $0x2d0] sm:$0xff]
    %v105 = vld [vmem:[#allocation4 + $0x2d8] sm:$0xff]
    %v106 = vld [vmem:[#allocation4 + $0x2e0] sm:$0xff]
    %107 = vmatprep.subr.mxu0 %v60
    %108 = vmatpush1.msra.mxu0 %v59
    %109 = vmatprep.subr.mxu0 %v63
    %110 = vmatpush1.msra.mxu0 %v62
    %111 = vmatprep.subr.mxu0 %v66
    %112 = vmatpush1.msra.mxu0 %v65
    %113 = vmatprep.subr.mxu0 %v69
    %114 = vmatpush1.msra.mxu0 %v68
    %115 = vmatprep.subr.mxu0 %v72
    %116 = vmatpush1.msra.mxu0 %v71
    %117 = vmatprep.subr.mxu0 %v75
    %118 = vmatpush1.msra.mxu0 %v74
    %119 = vmatprep.subr.mxu0 %v78
    %120 = vmatpush1.msra.mxu0 %v77
    %121 = vmatprep.subr.mxu0 %v81
    %122 = vmatpush1.msra.mxu0 %v80
    %123 = vmatprep.subr.mxu0 %v84
    %124 = vmatpush1.msra.mxu0 %v83
    %125 = vmatprep.subr.mxu0 %v87
    %126 = vmatpush1.msra.mxu0 %v86
    %127 = vmatprep.subr.mxu0 %v90
    %128 = vmatpush1.msra.mxu0 %v89
    %129 = vmatprep.subr.mxu0 %v93
    %130 = vmatpush1.msra.mxu0 %v92
    %131 = vmatprep.subr.mxu0 %v96
    %132 = vmatpush1.msra.mxu0 %v95
    %133 = vmatprep.subr.mxu0 %v99
    %134 = vmatpush1.msra.mxu0 %v98
    %135 = vmatprep.subr.mxu0 %v102
    %136 = vmatpush1.msra.mxu0 %v101
    %137 = vmatprep.subr.mxu0 %v105
    %138 = vmatpush1.msra.mxu0 %v104
    %139 = vmatprep.subr.mxu0 0.0
    %140 = vmatpush1.msra.mxu0 0.0
    %141 = vmatprep.subr.mxu0 0.0
    %142 = vmatpush1.msra.mxu0 0.0
    %143 = vmatprep.subr.mxu0 0.0
    %144 = vmatpush1.msra.mxu0 0.0
    %145 = vmatprep.subr.mxu0 0.0
    %146 = vmatpush1.msra.mxu0 0.0
    %147 = vmatprep.subr.mxu0 0.0
    %148 = vmatpush1.msra.mxu0 0.0
    %149 = vmatprep.subr.mxu0 0.0
    %150 = vmatpush1.msra.mxu0 0.0
    %151 = vmatprep.subr.mxu0 0.0
    %152 = vmatpush1.msra.mxu0 0.0
    %153 = vmatprep.subr.mxu0 0.0
    %154 = vmatpush1.msra.mxu0 0.0
    %155 = vmatprep.subr.mxu0 0.0
    %156 = vmatpush1.msra.mxu0 0.0
    %157 = vmatprep.subr.mxu0 0.0
    %158 = vmatpush1.msra.mxu0 0.0
    %159 = vmatprep.subr.mxu0 0.0
    %160 = vmatpush1.msra.mxu0 0.0
    %161 = vmatprep.subr.mxu0 0.0
    %162 = vmatpush1.msra.mxu0 0.0
    %163 = vmatprep.subr.mxu0 0.0
    %164 = vmatpush1.msra.mxu0 0.0
    %165 = vmatprep.subr.mxu0 0.0
    %166 = vmatpush1.msra.mxu0 0.0
    %167 = vmatprep.subr.mxu0 0.0
    %168 = vmatpush1.msra.mxu0 0.0
    %169 = vmatprep.subr.mxu0 0.0
    %170 = vmatpush1.msra.mxu0 0.0
    %171 = vmatprep.mubr.f32.mxu0 0.0
    %172 = vmatmul.mubr.f32.gmra.mrb[0].mxu0 %v58
    %v173 = vpop.f32.mrb[0].mxu0
    %v174 = vadd.f32 0.0, %v173
    %v175 = vpop.f32.mrb[0].mxu0
    %v176 = vadd.f32 0.0, %v175
    %177 = vdwg.mxu0
    %178 = vmatprep.subr.mxu0 0.0
    %179 = vmatpush1.msra.mxu0 %v61
    %180 = vmatprep.subr.mxu0 0.0
    %181 = vmatpush1.msra.mxu0 %v64
    %182 = vmatprep.subr.mxu0 0.0
    %183 = vmatpush1.msra.mxu0 %v67
    %184 = vmatprep.subr.mxu0 0.0
    %185 = vmatpush1.msra.mxu0 %v70
    %186 = vmatprep.subr.mxu0 0.0
    %187 = vmatpush1.msra.mxu0 %v73
    %188 = vmatprep.subr.mxu0 0.0
    %189 = vmatpush1.msra.mxu0 %v76
    %190 = vmatprep.subr.mxu0 0.0
    %191 = vmatpush1.msra.mxu0 %v79
    %192 = vmatprep.subr.mxu0 0.0
    %193 = vmatpush1.msra.mxu0 %v82
    %194 = vmatprep.subr.mxu0 0.0
    %195 = vmatpush1.msra.mxu0 %v85
    %196 = vmatprep.subr.mxu0 0.0
    %197 = vmatpush1.msra.mxu0 %v88
    %198 = vmatprep.subr.mxu0 0.0
    %199 = vmatpush1.msra.mxu0 %v91
    %200 = vmatprep.subr.mxu0 0.0
    %201 = vmatpush1.msra.mxu0 %v94
    %202 = vmatprep.subr.mxu0 0.0
    %203 = vmatpush1.msra.mxu0 %v97
    %204 = vmatprep.subr.mxu0 0.0
    %205 = vmatpush1.msra.mxu0 %v100
    %206 = vmatprep.subr.mxu0 0.0
    %207 = vmatpush1.msra.mxu0 %v103
    %208 = vmatprep.subr.mxu0 0.0
    %209 = vmatpush1.msra.mxu0 %v106
    %210 = vmatprep.subr.mxu0 0.0
    %211 = vmatpush1.msra.mxu0 0.0
    %212 = vmatprep.subr.mxu0 0.0
    %213 = vmatpush1.msra.mxu0 0.0
    %214 = vmatprep.subr.mxu0 0.0
    %215 = vmatpush1.msra.mxu0 0.0
    %216 = vmatprep.subr.mxu0 0.0
    %217 = vmatpush1.msra.mxu0 0.0
    %218 = vmatprep.subr.mxu0 0.0
    %219 = vmatpush1.msra.mxu0 0.0
    %220 = vmatprep.subr.mxu0 0.0
    %221 = vmatpush1.msra.mxu0 0.0
    %222 = vmatprep.subr.mxu0 0.0
    %223 = vmatpush1.msra.mxu0 0.0
    %224 = vmatprep.subr.mxu0 0.0
    %225 = vmatpush1.msra.mxu0 0.0
    %226 = vmatprep.subr.mxu0 0.0
    %227 = vmatpush1.msra.mxu0 0.0
    %228 = vmatprep.subr.mxu0 0.0
    %229 = vmatpush1.msra.mxu0 0.0
    %230 = vmatprep.subr.mxu0 0.0
    %231 = vmatpush1.msra.mxu0 0.0
    %232 = vmatprep.subr.mxu0 0.0
    %233 = vmatpush1.msra.mxu0 0.0
    %234 = vmatprep.subr.mxu0 0.0
    %235 = vmatpush1.msra.mxu0 0.0
    %236 = vmatprep.subr.mxu0 0.0
    %237 = vmatpush1.msra.mxu0 0.0
    %238 = vmatprep.subr.mxu0 0.0
    %239 = vmatpush1.msra.mxu0 0.0
    %240 = vmatprep.subr.mxu0 0.0
    %241 = vmatpush1.msra.mxu0 0.0
    %242 = vmatprep.mubr.f32.mxu0 0.0
    %243 = vmatmul.mubr.f32.gmra.mrb[0].mxu0 %v58
    %v244 = vpop.f32.mrb[0].mxu0
    %v245 = vadd.f32 0.0, %v244
    %v246 = vpop.f32.mrb[0].mxu0
    %247 = vdwg.mxu0
    %v248 = vld [vmem:[#allocation6] sm:$0xff]
    %v249 = vld [vmem:[#allocation6 + $0x10] sm:$0xff]
    %v250 = vld [vmem:[#allocation2] sm:$0xff]
    %v251 = vld [vmem:[#allocation2 + $0x8] sm:$0xff]
    %vm252 = vcmask 64512
    %v254 = vsel %vm252, %v250, 0
    %v257 = vsel %vm252, %v251, 0
    %259 = vmatprep.subr.mxu0 0.0
    %260 = vmatpush1.msra.mxu0 %v174
    %261 = vmatprep.subr.mxu0 0.0
    %262 = vmatpush1.msra.mxu0 0.0
    %263 = vmatprep.subr.mxu0 0.0
    %264 = vmatpush1.msra.mxu0 0.0
    %265 = vmatprep.subr.mxu0 0.0
    %266 = vmatpush1.msra.mxu0 0.0
    %267 = vmatprep.subr.mxu0 0.0
    %268 = vmatpush1.msra.mxu0 0.0
    %269 = vmatprep.subr.mxu0 0.0
    %270 = vmatpush1.msra.mxu0 0.0
    %271 = vmatprep.subr.mxu0 0.0
    %272 = vmatpush1.msra.mxu0 0.0
    %273 = vmatprep.subr.mxu0 0.0
    %274 = vmatpush1.msra.mxu0 0.0
    %275 = vmatprep.subr.mxu0 0.0
    %276 = vmatpush1.msra.mxu0 0.0
    %277 = vmatprep.subr.mxu0 0.0
    %278 = vmatpush1.msra.mxu0 0.0
    %279 = vmatprep.subr.mxu0 0.0
    %280 = vmatpush1.msra.mxu0 0.0
    %281 = vmatprep.subr.mxu0 0.0
    %282 = vmatpush1.msra.mxu0 0.0
    %283 = vmatprep.subr.mxu0 0.0
    %284 = vmatpush1.msra.mxu0 0.0
    %285 = vmatprep.subr.mxu0 0.0
    %286 = vmatpush1.msra.mxu0 0.0
    %287 = vmatprep.subr.mxu0 0.0
    %288 = vmatpush1.msra.mxu0 0.0
    %289 = vmatprep.subr.mxu0 0.0
    %290 = vmatpush1.msra.mxu0 0.0
    %291 = vmatprep.subr.mxu0 0.0
    %292 = vmatpush1.msra.mxu0 0.0
    %293 = vmatprep.subr.mxu0 0.0
    %294 = vmatpush1.msra.mxu0 0.0
    %295 = vmatprep.subr.mxu0 0.0
    %296 = vmatpush1.msra.mxu0 0.0
    %297 = vmatprep.subr.mxu0 0.0
    %298 = vmatpush1.msra.mxu0 0.0
    %299 = vmatprep.subr.mxu0 0.0
    %300 = vmatpush1.msra.mxu0 0.0
    %301 = vmatprep.subr.mxu0 0.0
    %302 = vmatpush1.msra.mxu0 0.0
    %303 = vmatprep.subr.mxu0 0.0
    %304 = vmatpush1.msra.mxu0 0.0
    %305 = vmatprep.subr.mxu0 0.0
    %306 = vmatpush1.msra.mxu0 0.0
    %307 = vmatprep.subr.mxu0 0.0
    %308 = vmatpush1.msra.mxu0 0.0
    %309 = vmatprep.subr.mxu0 0.0
    %310 = vmatpush1.msra.mxu0 0.0
    %311 = vmatprep.subr.mxu0 0.0
    %312 = vmatpush1.msra.mxu0 0.0
    %313 = vmatprep.subr.mxu0 0.0
    %314 = vmatpush1.msra.mxu0 0.0
    %315 = vmatprep.subr.mxu0 0.0
    %316 = vmatpush1.msra.mxu0 0.0
    %317 = vmatprep.subr.mxu0 0.0
    %318 = vmatpush1.msra.mxu0 0.0
    %319 = vmatprep.subr.mxu0 0.0
    %320 = vmatpush1.msra.mxu0 0.0
    %321 = vmatprep.subr.mxu0 0.0
    %322 = vmatpush1.msra.mxu0 0.0
    %323 = vmatprep.mubr.f32.mxu0 0.0
    %324 = vmatmul.mubr.f32.gmra.mrb[0].mxu0 %v254
    %v325 = vpop.f32.mrb[0].mxu0
    %v326 = vadd.f32 0.0, %v325
    %v327 = vpop.f32.mrb[0].mxu0
    %328 = vmatprep.mubr.f32.mxu0 0.0
    %329 = vmatmul.mubr.f32.gmra.mrb[0].mxu0 %v257
    %v330 = vpop.f32.mrb[0].mxu0
    %v331 = vadd.f32 0.0, %v330
    %v332 = vpop.f32.mrb[0].mxu0
    %333 = vdwg.mxu0
    %v334 = vadd.f32 %v248, %v326
    %v335 = vadd.f32 %v249, %v331
    %v336 = vld [vmem:[#allocation2 + $0x10] sm:$0xff]
    %v337 = vld [vmem:[#allocation2 + $0x18] sm:$0xff]
    %v339 = vsel %vm252, %v336, 0
    %v342 = vsel %vm252, %v337, 0
    %344 = vmatprep.subr.mxu0 0.0
    %345 = vmatpush1.msra.mxu0 %v176
    %346 = vmatprep.subr.mxu0 0.0
    %347 = vmatpush1.msra.mxu0 0.0
    %348 = vmatprep.subr.mxu0 0.0
    %349 = vmatpush1.msra.mxu0 0.0
    %350 = vmatprep.subr.mxu0 0.0
    %351 = vmatpush1.msra.mxu0 0.0
    %352 = vmatprep.subr.mxu0 0.0
    %353 = vmatpush1.msra.mxu0 0.0
    %354 = vmatprep.subr.mxu0 0.0
    %355 = vmatpush1.msra.mxu0 0.0
    %356 = vmatprep.subr.mxu0 0.0
    %357 = vmatpush1.msra.mxu0 0.0
    %358 = vmatprep.subr.mxu0 0.0
    %359 = vmatpush1.msra.mxu0 0.0
    %360 = vmatprep.subr.mxu0 0.0
    %361 = vmatpush1.msra.mxu0 0.0
    %362 = vmatprep.subr.mxu0 0.0
    %363 = vmatpush1.msra.mxu0 0.0
    %364 = vmatprep.subr.mxu0 0.0
    %365 = vmatpush1.msra.mxu0 0.0
    %366 = vmatprep.subr.mxu0 0.0
    %367 = vmatpush1.msra.mxu0 0.0
    %368 = vmatprep.subr.mxu0 0.0
    %369 = vmatpush1.msra.mxu0 0.0
    %370 = vmatprep.subr.mxu0 0.0
    %371 = vmatpush1.msra.mxu0 0.0
    %372 = vmatprep.subr.mxu0 0.0
    %373 = vmatpush1.msra.mxu0 0.0
    %374 = vmatprep.subr.mxu0 0.0
    %375 = vmatpush1.msra.mxu0 0.0
    %376 = vmatprep.subr.mxu0 0.0
    %377 = vmatpush1.msra.mxu0 0.0
    %378 = vmatprep.subr.mxu0 0.0
    %379 = vmatpush1.msra.mxu0 0.0
    %380 = vmatprep.subr.mxu0 0.0
    %381 = vmatpush1.msra.mxu0 0.0
    %382 = vmatprep.subr.mxu0 0.0
    %383 = vmatpush1.msra.mxu0 0.0
    %384 = vmatprep.subr.mxu0 0.0
    %385 = vmatpush1.msra.mxu0 0.0
    %386 = vmatprep.subr.mxu0 0.0
    %387 = vmatpush1.msra.mxu0 0.0
    %388 = vmatprep.subr.mxu0 0.0
    %389 = vmatpush1.msra.mxu0 0.0
    %390 = vmatprep.subr.mxu0 0.0
    %391 = vmatpush1.msra.mxu0 0.0
    %392 = vmatprep.subr.mxu0 0.0
    %393 = vmatpush1.msra.mxu0 0.0
    %394 = vmatprep.subr.mxu0 0.0
    %395 = vmatpush1.msra.mxu0 0.0
    %396 = vmatprep.subr.mxu0 0.0
    %397 = vmatpush1.msra.mxu0 0.0
    %398 = vmatprep.subr.mxu0 0.0
    %399 = vmatpush1.msra.mxu0 0.0
    %400 = vmatprep.subr.mxu0 0.0
    %401 = vmatpush1.msra.mxu0 0.0
    %402 = vmatprep.subr.mxu0 0.0
    %403 = vmatpush1.msra.mxu0 0.0
    %404 = vmatprep.subr.mxu0 0.0
    %405 = vmatpush1.msra.mxu0 0.0
    %406 = vmatprep.subr.mxu0 0.0
    %407 = vmatpush1.msra.mxu0 0.0
    %408 = vmatprep.mubr.f32.mxu0 0.0
    %409 = vmatmul.mubr.f32.gmra.mrb[0].mxu0 %v339
    %v410 = vpop.f32.mrb[0].mxu0
    %v411 = vadd.f32 0.0, %v410
    %v412 = vpop.f32.mrb[0].mxu0
    %413 = vmatprep.mubr.f32.mxu0 0.0
    %414 = vmatmul.mubr.f32.gmra.mrb[0].mxu0 %v342
    %v415 = vpop.f32.mrb[0].mxu0
    %v416 = vadd.f32 0.0, %v415
    %v417 = vpop.f32.mrb[0].mxu0
    %418 = vdwg.mxu0
    %v419 = vadd.f32 %v334, %v411
    %v420 = vadd.f32 %v335, %v416
    %v421 = vld [vmem:[#allocation2 + $0x20] sm:$0xff]
    %v422 = vld [vmem:[#allocation2 + $0x28] sm:$0xff]
    %v424 = vsel %vm252, %v421, 0
    %v427 = vsel %vm252, %v422, 0
    %429 = vmatprep.subr.mxu0 0.0
    %430 = vmatpush1.msra.mxu0 %v245
    %431 = vmatprep.subr.mxu0 0.0
    %432 = vmatpush1.msra.mxu0 0.0
    %433 = vmatprep.subr.mxu0 0.0
    %434 = vmatpush1.msra.mxu0 0.0
    %435 = vmatprep.subr.mxu0 0.0
    %436 = vmatpush1.msra.mxu0 0.0
    %437 = vmatprep.subr.mxu0 0.0
    %438 = vmatpush1.msra.mxu0 0.0
    %439 = vmatprep.subr.mxu0 0.0
    %440 = vmatpush1.msra.mxu0 0.0
    %441 = vmatprep.subr.mxu0 0.0
    %442 = vmatpush1.msra.mxu0 0.0
    %443 = vmatprep.subr.mxu0 0.0
    %444 = vmatpush1.msra.mxu0 0.0
    %445 = vmatprep.subr.mxu0 0.0
    %446 = vmatpush1.msra.mxu0 0.0
    %447 = vmatprep.subr.mxu0 0.0
    %448 = vmatpush1.msra.mxu0 0.0
    %449 = vmatprep.subr.mxu0 0.0
    %450 = vmatpush1.msra.mxu0 0.0
    %451 = vmatprep.subr.mxu0 0.0
    %452 = vmatpush1.msra.mxu0 0.0
    %453 = vmatprep.subr.mxu0 0.0
    %454 = vmatpush1.msra.mxu0 0.0
    %455 = vmatprep.subr.mxu0 0.0
    %456 = vmatpush1.msra.mxu0 0.0
    %457 = vmatprep.subr.mxu0 0.0
    %458 = vmatpush1.msra.mxu0 0.0
    %459 = vmatprep.subr.mxu0 0.0
    %460 = vmatpush1.msra.mxu0 0.0
    %461 = vmatprep.subr.mxu0 0.0
    %462 = vmatpush1.msra.mxu0 0.0
    %463 = vmatprep.subr.mxu0 0.0
    %464 = vmatpush1.msra.mxu0 0.0
    %465 = vmatprep.subr.mxu0 0.0
    %466 = vmatpush1.msra.mxu0 0.0
    %467 = vmatprep.subr.mxu0 0.0
    %468 = vmatpush1.msra.mxu0 0.0
    %469 = vmatprep.subr.mxu0 0.0
    %470 = vmatpush1.msra.mxu0 0.0
    %471 = vmatprep.subr.mxu0 0.0
    %472 = vmatpush1.msra.mxu0 0.0
    %473 = vmatprep.subr.mxu0 0.0
    %474 = vmatpush1.msra.mxu0 0.0
    %475 = vmatprep.subr.mxu0 0.0
    %476 = vmatpush1.msra.mxu0 0.0
    %477 = vmatprep.subr.mxu0 0.0
    %478 = vmatpush1.msra.mxu0 0.0
    %479 = vmatprep.subr.mxu0 0.0
    %480 = vmatpush1.msra.mxu0 0.0
    %481 = vmatprep.subr.mxu0 0.0
    %482 = vmatpush1.msra.mxu0 0.0
    %483 = vmatprep.subr.mxu0 0.0
    %484 = vmatpush1.msra.mxu0 0.0
    %485 = vmatprep.subr.mxu0 0.0
    %486 = vmatpush1.msra.mxu0 0.0
    %487 = vmatprep.subr.mxu0 0.0
    %488 = vmatpush1.msra.mxu0 0.0
    %489 = vmatprep.subr.mxu0 0.0
    %490 = vmatpush1.msra.mxu0 0.0
    %491 = vmatprep.subr.mxu0 0.0
    %492 = vmatpush1.msra.mxu0 0.0
    %493 = vmatprep.mubr.f32.mxu0 0.0
    %494 = vmatmul.mubr.f32.gmra.mrb[0].mxu0 %v424
    %v495 = vpop.f32.mrb[0].mxu0
    %v496 = vadd.f32 0.0, %v495
    %v497 = vpop.f32.mrb[0].mxu0
    %498 = vmatprep.mubr.f32.mxu0 0.0
    %499 = vmatmul.mubr.f32.gmra.mrb[0].mxu0 %v427
    %v500 = vpop.f32.mrb[0].mxu0
    %v501 = vadd.f32 0.0, %v500
    %v502 = vpop.f32.mrb[0].mxu0
    %503 = vdwg.mxu0
    %v504 = vadd.f32 %v419, %v496
    %v505 = vadd.f32 %v420, %v501
    %v506 = vmax.f32 %v504, 0.0
    %v507 = vmax.f32 %v505, 0.0
    %v508 = vld [vmem:[#allocation4 + $0x300] sm:$0xff]
    %v509 = vld [vmem:[#allocation4 + $0x308] sm:$0xff]
    %v510 = vld [vmem:[#allocation4 + $0x310] sm:$0xff]
    %v511 = vld [vmem:[#allocation4 + $0x330] sm:$0xff]
    %v512 = vld [vmem:[#allocation4 + $0x338] sm:$0xff]
    %v513 = vld [vmem:[#allocation4 + $0x340] sm:$0xff]
    %v514 = vld [vmem:[#allocation4 + $0x360] sm:$0xff]
    %v515 = vld [vmem:[#allocation4 + $0x368] sm:$0xff]
    %v516 = vld [vmem:[#allocation4 + $0x370] sm:$0xff]
    %v517 = vld [vmem:[#allocation4 + $0x390] sm:$0xff]
    %v518 = vld [vmem:[#allocation4 + $0x398] sm:$0xff]
    %v519 = vld [vmem:[#allocation4 + $0x3a0] sm:$0xff]
    %v520 = vld [vmem:[#allocation4 + $0x3c0] sm:$0xff]
    %v521 = vld [vmem:[#allocation4 + $0x3c8] sm:$0xff]
    %v522 = vld [vmem:[#allocation4 + $0x3d0] sm:$0xff]
    %v523 = vld [vmem:[#allocation4 + $0x3f0] sm:$0xff]
    %v524 = vld [vmem:[#allocation4 + $0x3f8] sm:$0xff]
    %v525 = vld [vmem:[#allocation4 + $0x400] sm:$0xff]
    %v526 = vld [vmem:[#allocation4 + $0x420] sm:$0xff]
    %v527 = vld [vmem:[#allocation4 + $0x428] sm:$0xff]
    %v528 = vld [vmem:[#allocation4 + $0x430] sm:$0xff]
    %v529 = vld [vmem:[#allocation4 + $0x450] sm:$0xff]
    %v530 = vld [vmem:[#allocation4 + $0x458] sm:$0xff]
    %v531 = vld [vmem:[#allocation4 + $0x460] sm:$0xff]
    %v532 = vld [vmem:[#allocation4 + $0x480] sm:$0xff]
    %v533 = vld [vmem:[#allocation4 + $0x488] sm:$0xff]
    %v534 = vld [vmem:[#allocation4 + $0x490] sm:$0xff]
    %v535 = vld [vmem:[#allocation4 + $0x4b0] sm:$0xff]
    %v536 = vld [vmem:[#allocation4 + $0x4b8] sm:$0xff]
    %v537 = vld [vmem:[#allocation4 + $0x4c0] sm:$0xff]
    %v538 = vld [vmem:[#allocation4 + $0x4e0] sm:$0xff]
    %v539 = vld [vmem:[#allocation4 + $0x4e8] sm:$0xff]
    %v540 = vld [vmem:[#allocation4 + $0x4f0] sm:$0xff]
    %v541 = vld [vmem:[#allocation4 + $0x510] sm:$0xff]
    %v542 = vld [vmem:[#allocation4 + $0x518] sm:$0xff]
    %v543 = vld [vmem:[#allocation4 + $0x520] sm:$0xff]
    %v544 = vld [vmem:[#allocation4 + $0x540] sm:$0xff]
    %v545 = vld [vmem:[#allocation4 + $0x548] sm:$0xff]
    %v546 = vld [vmem:[#allocation4 + $0x550] sm:$0xff]
    %v547 = vld [vmem:[#allocation4 + $0x570] sm:$0xff]
    %v548 = vld [vmem:[#allocation4 + $0x578] sm:$0xff]
    %v549 = vld [vmem:[#allocation4 + $0x580] sm:$0xff]
    %v550 = vld [vmem:[#allocation4 + $0x5a0] sm:$0xff]
    %v551 = vld [vmem:[#allocation4 + $0x5a8] sm:$0xff]
    %v552 = vld [vmem:[#allocation4 + $0x5b0] sm:$0xff]
    %v553 = vld [vmem:[#allocation4 + $0x5d0] sm:$0xff]
    %v554 = vld [vmem:[#allocation4 + $0x5d8] sm:$0xff]
    %v555 = vld [vmem:[#allocation4 + $0x5e0] sm:$0xff]
    %556 = vmatprep.subr.mxu0 %v509
    %557 = vmatpush1.msra.mxu0 %v508
    %558 = vmatprep.subr.mxu0 %v512
    %559 = vmatpush1.msra.mxu0 %v511
    %560 = vmatprep.subr.mxu0 %v515
    %561 = vmatpush1.msra.mxu0 %v514
    %562 = vmatprep.subr.mxu0 %v518
    %563 = vmatpush1.msra.mxu0 %v517
    %564 = vmatprep.subr.mxu0 %v521
    %565 = vmatpush1.msra.mxu0 %v520
    %566 = vmatprep.subr.mxu0 %v524
    %567 = vmatpush1.msra.mxu0 %v523
    %568 = vmatprep.subr.mxu0 %v527
    %569 = vmatpush1.msra.mxu0 %v526
    %570 = vmatprep.subr.mxu0 %v530
    %571 = vmatpush1.msra.mxu0 %v529
    %572 = vmatprep.subr.mxu0 %v533
    %573 = vmatpush1.msra.mxu0 %v532
    %574 = vmatprep.subr.mxu0 %v536
    %575 = vmatpush1.msra.mxu0 %v535
    %576 = vmatprep.subr.mxu0 %v539
    %577 = vmatpush1.msra.mxu0 %v538
    %578 = vmatprep.subr.mxu0 %v542
    %579 = vmatpush1.msra.mxu0 %v541
    %580 = vmatprep.subr.mxu0 %v545
    %581 = vmatpush1.msra.mxu0 %v544
    %582 = vmatprep.subr.mxu0 %v548
    %583 = vmatpush1.msra.mxu0 %v547
    %584 = vmatprep.subr.mxu0 %v551
    %585 = vmatpush1.msra.mxu0 %v550
    %586 = vmatprep.subr.mxu0 %v554
    %587 = vmatpush1.msra.mxu0 %v553
    %588 = vmatprep.subr.mxu0 0.0
    %589 = vmatpush1.msra.mxu0 0.0
    %590 = vmatprep.subr.mxu0 0.0
    %591 = vmatpush1.msra.mxu0 0.0
    %592 = vmatprep.subr.mxu0 0.0
    %593 = vmatpush1.msra.mxu0 0.0
    %594 = vmatprep.subr.mxu0 0.0
    %595 = vmatpush1.msra.mxu0 0.0
    %596 = vmatprep.subr.mxu0 0.0
    %597 = vmatpush1.msra.mxu0 0.0
    %598 = vmatprep.subr.mxu0 0.0
    %599 = vmatpush1.msra.mxu0 0.0
    %600 = vmatprep.subr.mxu0 0.0
    %601 = vmatpush1.msra.mxu0 0.0
    %602 = vmatprep.subr.mxu0 0.0
    %603 = vmatpush1.msra.mxu0 0.0
    %604 = vmatprep.subr.mxu0 0.0
    %605 = vmatpush1.msra.mxu0 0.0
    %606 = vmatprep.subr.mxu0 0.0
    %607 = vmatpush1.msra.mxu0 0.0
    %608 = vmatprep.subr.mxu0 0.0
    %609 = vmatpush1.msra.mxu0 0.0
    %610 = vmatprep.subr.mxu0 0.0
    %611 = vmatpush1.msra.mxu0 0.0
    %612 = vmatprep.subr.mxu0 0.0
    %613 = vmatpush1.msra.mxu0 0.0
    %614 = vmatprep.subr.mxu0 0.0
    %615 = vmatpush1.msra.mxu0 0.0
    %616 = vmatprep.subr.mxu0 0.0
    %617 = vmatpush1.msra.mxu0 0.0
    %618 = vmatprep.subr.mxu0 0.0
    %619 = vmatpush1.msra.mxu0 0.0
    %620 = vmatprep.mubr.f32.mxu0 0.0
    %621 = vmatmul.mubr.f32.gmra.mrb[0].mxu0 %v506
    %v622 = vpop.f32.mrb[0].mxu0
    %v623 = vadd.f32 0.0, %v622
    %v624 = vpop.f32.mrb[0].mxu0
    %v625 = vadd.f32 0.0, %v624
    %626 = vmatprep.mubr.f32.mxu0 0.0
    %627 = vmatmul.mubr.f32.gmra.mrb[0].mxu0 %v507
    %v628 = vpop.f32.mrb[0].mxu0
    %v629 = vadd.f32 0.0, %v628
    %v630 = vpop.f32.mrb[0].mxu0
    %v631 = vadd.f32 0.0, %v630
    %632 = vdwg.mxu0
    %633 = vmatprep.subr.mxu0 0.0
    %634 = vmatpush1.msra.mxu0 %v510
    %635 = vmatprep.subr.mxu0 0.0
    %636 = vmatpush1.msra.mxu0 %v513
    %637 = vmatprep.subr.mxu0 0.0
    %638 = vmatpush1.msra.mxu0 %v516
    %639 = vmatprep.subr.mxu0 0.0
    %640 = vmatpush1.msra.mxu0 %v519
    %641 = vmatprep.subr.mxu0 0.0
    %642 = vmatpush1.msra.mxu0 %v522
    %643 = vmatprep.subr.mxu0 0.0
    %644 = vmatpush1.msra.mxu0 %v525
    %645 = vmatprep.subr.mxu0 0.0
    %646 = vmatpush1.msra.mxu0 %v528
    %647 = vmatprep.subr.mxu0 0.0
    %648 = vmatpush1.msra.mxu0 %v531
    %649 = vmatprep.subr.mxu0 0.0
    %650 = vmatpush1.msra.mxu0 %v534
    %651 = vmatprep.subr.mxu0 0.0
    %652 = vmatpush1.msra.mxu0 %v537
    %653 = vmatprep.subr.mxu0 0.0
    %654 = vmatpush1.msra.mxu0 %v540
    %655 = vmatprep.subr.mxu0 0.0
    %656 = vmatpush1.msra.mxu0 %v543
    %657 = vmatprep.subr.mxu0 0.0
    %658 = vmatpush1.msra.mxu0 %v546
    %659 = vmatprep.subr.mxu0 0.0
    %660 = vmatpush1.msra.mxu0 %v549
    %661 = vmatprep.subr.mxu0 0.0
    %662 = vmatpush1.msra.mxu0 %v552
    %663 = vmatprep.subr.mxu0 0.0
    %664 = vmatpush1.msra.mxu0 %v555
    %665 = vmatprep.subr.mxu0 0.0
    %666 = vmatpush1.msra.mxu0 0.0
    %667 = vmatprep.subr.mxu0 0.0
    %668 = vmatpush1.msra.mxu0 0.0
    %669 = vmatprep.subr.mxu0 0.0
    %670 = vmatpush1.msra.mxu0 0.0
    %671 = vmatprep.subr.mxu0 0.0
    %672 = vmatpush1.msra.mxu0 0.0
    %673 = vmatprep.subr.mxu0 0.0
    %674 = vmatpush1.msra.mxu0 0.0
    %675 = vmatprep.subr.mxu0 0.0
    %676 = vmatpush1.msra.mxu0 0.0
    %677 = vmatprep.subr.mxu0 0.0
    %678 = vmatpush1.msra.mxu0 0.0
    %679 = vmatprep.subr.mxu0 0.0
    %680 = vmatpush1.msra.mxu0 0.0
    %681 = vmatprep.subr.mxu0 0.0
    %682 = vmatpush1.msra.mxu0 0.0
    %683 = vmatprep.subr.mxu0 0.0
    %684 = vmatpush1.msra.mxu0 0.0
    %685 = vmatprep.subr.mxu0 0.0
    %686 = vmatpush1.msra.mxu0 0.0
    %687 = vmatprep.subr.mxu0 0.0
    %688 = vmatpush1.msra.mxu0 0.0
    %689 = vmatprep.subr.mxu0 0.0
    %690 = vmatpush1.msra.mxu0 0.0
    %691 = vmatprep.subr.mxu0 0.0
    %692 = vmatpush1.msra.mxu0 0.0
    %693 = vmatprep.subr.mxu0 0.0
    %694 = vmatpush1.msra.mxu0 0.0
    %695 = vmatprep.subr.mxu0 0.0
    %696 = vmatpush1.msra.mxu0 0.0
    %697 = vmatprep.mubr.f32.mxu0 0.0
    %698 = vmatmul.mubr.f32.gmra.mrb[0].mxu0 %v506
    %v699 = vpop.f32.mrb[0].mxu0
    %v700 = vadd.f32 0.0, %v699
    %v701 = vpop.f32.mrb[0].mxu0
    %702 = vmatprep.mubr.f32.mxu0 0.0
    %703 = vmatmul.mubr.f32.gmra.mrb[0].mxu0 %v507
    %v704 = vpop.f32.mrb[0].mxu0
    %v705 = vadd.f32 0.0, %v704
    %v706 = vpop.f32.mrb[0].mxu0
    %707 = vdwg.mxu0
    %v708 = vld [vmem:[#allocation6 + $0x20] sm:$0xff]
    %v709 = vld [vmem:[#allocation6 + $0x30] sm:$0xff]
    %v710 = vld [vmem:[#allocation6 + $0x40] sm:$0xff]
    %v711 = vld [vmem:[#allocation6 + $0x50] sm:$0xff]
    %v712 = vld [vmem:[#allocation2 + $0x30] sm:$0xff]
    %v713 = vld [vmem:[#allocation2 + $0x38] sm:$0xff]
    %v714 = vld [vmem:[#allocation2 + $0x40] sm:$0xff]
    %v715 = vld [vmem:[#allocation2 + $0x48] sm:$0xff]
    %vm716 = vcmask 130048
    %v718 = vsel %vm716, %v712, 0
    %v721 = vsel %vm716, %v713, 0
    %v724 = vsel %vm716, %v714, 0
    %v727 = vsel %vm716, %v715, 0
    %729 = vmatprep.subr.mxu0 0.0
    %730 = vmatpush1.msra.mxu0 %v623
    %731 = vmatprep.subr.mxu0 0.0
    %732 = vmatpush1.msra.mxu0 %v629
    %733 = vmatprep.subr.mxu0 0.0
    %734 = vmatpush1.msra.mxu0 0.0
    %735 = vmatprep.subr.mxu0 0.0
    %736 = vmatpush1.msra.mxu0 0.0
    %737 = vmatprep.subr.mxu0 0.0
    %738 = vmatpush1.msra.mxu0 0.0
    %739 = vmatprep.subr.mxu0 0.0
    %740 = vmatpush1.msra.mxu0 0.0
    %741 = vmatprep.subr.mxu0 0.0
    %742 = vmatpush1.msra.mxu0 0.0
    %743 = vmatprep.subr.mxu0 0.0
    %744 = vmatpush1.msra.mxu0 0.0
    %745 = vmatprep.subr.mxu0 0.0
    %746 = vmatpush1.msra.mxu0 0.0
    %747 = vmatprep.subr.mxu0 0.0
    %748 = vmatpush1.msra.mxu0 0.0
    %749 = vmatprep.subr.mxu0 0.0
    %750 = vmatpush1.msra.mxu0 0.0
    %751 = vmatprep.subr.mxu0 0.0
    %752 = vmatpush1.msra.mxu0 0.0
    %753 = vmatprep.subr.mxu0 0.0
    %754 = vmatpush1.msra.mxu0 0.0
    %755 = vmatprep.subr.mxu0 0.0
    %756 = vmatpush1.msra.mxu0 0.0
    %757 = vmatprep.subr.mxu0 0.0
    %758 = vmatpush1.msra.mxu0 0.0
    %759 = vmatprep.subr.mxu0 0.0
    %760 = vmatpush1.msra.mxu0 0.0
    %761 = vmatprep.subr.mxu0 0.0
    %762 = vmatpush1.msra.mxu0 0.0
    %763 = vmatprep.subr.mxu0 0.0
    %764 = vmatpush1.msra.mxu0 0.0
    %765 = vmatprep.subr.mxu0 0.0
    %766 = vmatpush1.msra.mxu0 0.0
    %767 = vmatprep.subr.mxu0 0.0
    %768 = vmatpush1.msra.mxu0 0.0
    %769 = vmatprep.subr.mxu0 0.0
    %770 = vmatpush1.msra.mxu0 0.0
    %771 = vmatprep.subr.mxu0 0.0
    %772 = vmatpush1.msra.mxu0 0.0
    %773 = vmatprep.subr.mxu0 0.0
    %774 = vmatpush1.msra.mxu0 0.0
    %775 = vmatprep.subr.mxu0 0.0
    %776 = vmatpush1.msra.mxu0 0.0
    %777 = vmatprep.subr.mxu0 0.0
    %778 = vmatpush1.msra.mxu0 0.0
    %779 = vmatprep.subr.mxu0 0.0
    %780 = vmatpush1.msra.mxu0 0.0
    %781 = vmatprep.subr.mxu0 0.0
    %782 = vmatpush1.msra.mxu0 0.0
    %783 = vmatprep.subr.mxu0 0.0
    %784 = vmatpush1.msra.mxu0 0.0
    %785 = vmatprep.subr.mxu0 0.0
    %786 = vmatpush1.msra.mxu0 0.0
    %787 = vmatprep.subr.mxu0 0.0
    %788 = vmatpush1.msra.mxu0 0.0
    %789 = vmatprep.subr.mxu0 0.0
    %790 = vmatpush1.msra.mxu0 0.0
    %791 = vmatprep.subr.mxu0 0.0
    %792 = vmatpush1.msra.mxu0 0.0
    %793 = vmatprep.mubr.f32.mxu0 0.0
    %794 = vmatmul.mubr.f32.gmra.mrb[0].mxu0 %v718
    %v795 = vpop.f32.mrb[0].mxu0
    %v796 = vadd.f32 0.0, %v795
    %v797 = vpop.f32.mrb[0].mxu0
    %798 = vmatprep.mubr.f32.mxu0 0.0
    %799 = vmatmul.mubr.f32.gmra.mrb[0].mxu0 %v721
    %v800 = vpop.f32.mrb[0].mxu0
    %v801 = vadd.f32 0.0, %v800
    %v802 = vpop.f32.mrb[0].mxu0
    %803 = vmatprep.mubr.f32.mxu0 0.0
    %804 = vmatmul.mubr.f32.gmra.mrb[0].mxu0 %v724
    %v805 = vpop.f32.mrb[0].mxu0
    %v806 = vadd.f32 0.0, %v805
    %v807 = vpop.f32.mrb[0].mxu0
    %808 = vmatprep.mubr.f32.mxu0 0.0
    %809 = vmatmul.mubr.f32.gmra.mrb[0].mxu0 %v727
    %v810 = vpop.f32.mrb[0].mxu0
    %v811 = vadd.f32 0.0, %v810
    %v812 = vpop.f32.mrb[0].mxu0
    %813 = vdwg.mxu0
    %v814 = vadd.f32 %v708, %v796
    %v815 = vadd.f32 %v709, %v801
    %v816 = vadd.f32 %v710, %v806
    %v817 = vadd.f32 %v711, %v811
    %v818 = vld [vmem:[#allocation2 + $0x50] sm:$0xff]
    %v819 = vld [vmem:[#allocation2 + $0x58] sm:$0xff]
    %v820 = vld [vmem:[#allocation2 + $0x60] sm:$0xff]
    %v821 = vld [vmem:[#allocation2 + $0x68] sm:$0xff]
    %v823 = vsel %vm716, %v818, 0
    %v826 = vsel %vm716, %v819, 0
    %v829 = vsel %vm716, %v820, 0
    %v832 = vsel %vm716, %v821, 0
    %834 = vmatprep.subr.mxu0 0.0
    %835 = vmatpush1.msra.mxu0 %v625
    %836 = vmatprep.subr.mxu0 0.0
    %837 = vmatpush1.msra.mxu0 %v631
    %838 = vmatprep.subr.mxu0 0.0
    %839 = vmatpush1.msra.mxu0 0.0
    %840 = vmatprep.subr.mxu0 0.0
    %841 = vmatpush1.msra.mxu0 0.0
    %842 = vmatprep.subr.mxu0 0.0
    %843 = vmatpush1.msra.mxu0 0.0
    %844 = vmatprep.subr.mxu0 0.0
    %845 = vmatpush1.msra.mxu0 0.0
    %846 = vmatprep.subr.mxu0 0.0
    %847 = vmatpush1.msra.mxu0 0.0
    %848 = vmatprep.subr.mxu0 0.0
    %849 = vmatpush1.msra.mxu0 0.0
    %850 = vmatprep.subr.mxu0 0.0
    %851 = vmatpush1.msra.mxu0 0.0
    %852 = vmatprep.subr.mxu0 0.0
    %853 = vmatpush1.msra.mxu0 0.0
    %854 = vmatprep.subr.mxu0 0.0
    %855 = vmatpush1.msra.mxu0 0.0
    %856 = vmatprep.subr.mxu0 0.0
    %857 = vmatpush1.msra.mxu0 0.0
    %858 = vmatprep.subr.mxu0 0.0
    %859 = vmatpush1.msra.mxu0 0.0
    %860 = vmatprep.subr.mxu0 0.0
    %861 = vmatpush1.msra.mxu0 0.0
    %862 = vmatprep.subr.mxu0 0.0
    %863 = vmatpush1.msra.mxu0 0.0
    %864 = vmatprep.subr.mxu0 0.0
    %865 = vmatpush1.msra.mxu0 0.0
    %866 = vmatprep.subr.mxu0 0.0
    %867 = vmatpush1.msra.mxu0 0.0
    %868 = vmatprep.subr.mxu0 0.0
    %869 = vmatpush1.msra.mxu0 0.0
    %870 = vmatprep.subr.mxu0 0.0
    %871 = vmatpush1.msra.mxu0 0.0
    %872 = vmatprep.subr.mxu0 0.0
    %873 = vmatpush1.msra.mxu0 0.0
    %874 = vmatprep.subr.mxu0 0.0
    %875 = vmatpush1.msra.mxu0 0.0
    %876 = vmatprep.subr.mxu0 0.0
    %877 = vmatpush1.msra.mxu0 0.0
    %878 = vmatprep.subr.mxu0 0.0
    %879 = vmatpush1.msra.mxu0 0.0
    %880 = vmatprep.subr.mxu0 0.0
    %881 = vmatpush1.msra.mxu0 0.0
    %882 = vmatprep.subr.mxu0 0.0
    %883 = vmatpush1.msra.mxu0 0.0
    %884 = vmatprep.subr.mxu0 0.0
    %885 = vmatpush1.msra.mxu0 0.0
    %886 = vmatprep.subr.mxu0 0.0
    %887 = vmatpush1.msra.mxu0 0.0
    %888 = vmatprep.subr.mxu0 0.0
    %889 = vmatpush1.msra.mxu0 0.0
    %890 = vmatprep.subr.mxu0 0.0
    %891 = vmatpush1.msra.mxu0 0.0
    %892 = vmatprep.subr.mxu0 0.0
    %893 = vmatpush1.msra.mxu0 0.0
    %894 = vmatprep.subr.mxu0 0.0
    %895 = vmatpush1.msra.mxu0 0.0
    %896 = vmatprep.subr.mxu0 0.0
    %897 = vmatpush1.msra.mxu0 0.0
    %898 = vmatprep.mubr.f32.mxu0 0.0
    %899 = vmatmul.mubr.f32.gmra.mrb[0].mxu0 %v823
    %v900 = vpop.f32.mrb[0].mxu0
    %v901 = vadd.f32 0.0, %v900
    %v902 = vpop.f32.mrb[0].mxu0
    %903 = vmatprep.mubr.f32.mxu0 0.0
    %904 = vmatmul.mubr.f32.gmra.mrb[0].mxu0 %v826
    %v905 = vpop.f32.mrb[0].mxu0
    %v906 = vadd.f32 0.0, %v905
    %v907 = vpop.f32.mrb[0].mxu0
    %908 = vmatprep.mubr.f32.mxu0 0.0
    %909 = vmatmul.mubr.f32.gmra.mrb[0].mxu0 %v829
    %v910 = vpop.f32.mrb[0].mxu0
    %v911 = vadd.f32 0.0, %v910
    %v912 = vpop.f32.mrb[0].mxu0
    %913 = vmatprep.mubr.f32.mxu0 0.0
    %914 = vmatmul.mubr.f32.gmra.mrb[0].mxu0 %v832
    %v915 = vpop.f32.mrb[0].mxu0
    %v916 = vadd.f32 0.0, %v915
    %v917 = vpop.f32.mrb[0].mxu0
    %918 = vdwg.mxu0
    %v919 = vadd.f32 %v814, %v901
    %v920 = vadd.f32 %v815, %v906
    %v921 = vadd.f32 %v816, %v911
    %v922 = vadd.f32 %v817, %v916
    %v923 = vld [vmem:[#allocation2 + $0x70] sm:$0xff]
    %v924 = vld [vmem:[#allocation2 + $0x78] sm:$0xff]
    %v925 = vld [vmem:[#allocation2 + $0x80] sm:$0xff]
    %v926 = vld [vmem:[#allocation2 + $0x88] sm:$0xff]
    %v928 = vsel %vm716, %v923, 0
    %v931 = vsel %vm716, %v924, 0
    %v934 = vsel %vm716, %v925, 0
    %v937 = vsel %vm716, %v926, 0
    %939 = vmatprep.subr.mxu0 0.0
    %940 = vmatpush1.msra.mxu0 %v700
    %941 = vmatprep.subr.mxu0 0.0
    %942 = vmatpush1.msra.mxu0 %v705
    %943 = vmatprep.subr.mxu0 0.0
    %944 = vmatpush1.msra.mxu0 0.0
    %945 = vmatprep.subr.mxu0 0.0
    %946 = vmatpush1.msra.mxu0 0.0
    %947 = vmatprep.subr.mxu0 0.0
    %948 = vmatpush1.msra.mxu0 0.0
    %949 = vmatprep.subr.mxu0 0.0
    %950 = vmatpush1.msra.mxu0 0.0
    %951 = vmatprep.subr.mxu0 0.0
    %952 = vmatpush1.msra.mxu0 0.0
    %953 = vmatprep.subr.mxu0 0.0
    %954 = vmatpush1.msra.mxu0 0.0
    %955 = vmatprep.subr.mxu0 0.0
    %956 = vmatpush1.msra.mxu0 0.0
    %957 = vmatprep.subr.mxu0 0.0
    %958 = vmatpush1.msra.mxu0 0.0
    %959 = vmatprep.subr.mxu0 0.0
    %960 = vmatpush1.msra.mxu0 0.0
    %961 = vmatprep.subr.mxu0 0.0
    %962 = vmatpush1.msra.mxu0 0.0
    %963 = vmatprep.subr.mxu0 0.0
    %964 = vmatpush1.msra.mxu0 0.0
    %965 = vmatprep.subr.mxu0 0.0
    %966 = vmatpush1.msra.mxu0 0.0
    %967 = vmatprep.subr.mxu0 0.0
    %968 = vmatpush1.msra.mxu0 0.0
    %969 = vmatprep.subr.mxu0 0.0
    %970 = vmatpush1.msra.mxu0 0.0
    %971 = vmatprep.subr.mxu0 0.0
    %972 = vmatpush1.msra.mxu0 0.0
    %973 = vmatprep.subr.mxu0 0.0
    %974 = vmatpush1.msra.mxu0 0.0
    %975 = vmatprep.subr.mxu0 0.0
    %976 = vmatpush1.msra.mxu0 0.0
    %977 = vmatprep.subr.mxu0 0.0
    %978 = vmatpush1.msra.mxu0 0.0
    %979 = vmatprep.subr.mxu0 0.0
    %980 = vmatpush1.msra.mxu0 0.0
    %981 = vmatprep.subr.mxu0 0.0
    %982 = vmatpush1.msra.mxu0 0.0
    %983 = vmatprep.subr.mxu0 0.0
    %984 = vmatpush1.msra.mxu0 0.0
    %985 = vmatprep.subr.mxu0 0.0
    %986 = vmatpush1.msra.mxu0 0.0
    %987 = vmatprep.subr.mxu0 0.0
    %988 = vmatpush1.msra.mxu0 0.0
    %989 = vmatprep.subr.mxu0 0.0
    %990 = vmatpush1.msra.mxu0 0.0
    %991 = vmatprep.subr.mxu0 0.0
    %992 = vmatpush1.msra.mxu0 0.0
    %993 = vmatprep.subr.mxu0 0.0
    %994 = vmatpush1.msra.mxu0 0.0
    %995 = vmatprep.subr.mxu0 0.0
    %996 = vmatpush1.msra.mxu0 0.0
    %997 = vmatprep.subr.mxu0 0.0
    %998 = vmatpush1.msra.mxu0 0.0
    %999 = vmatprep.subr.mxu0 0.0
    %1000 = vmatpush1.msra.mxu0 0.0
    %1001 = vmatprep.subr.mxu0 0.0
    %1002 = vmatpush1.msra.mxu0 0.0
    %1003 = vmatprep.mubr.f32.mxu0 0.0
    %1004 = vmatmul.mubr.f32.gmra.mrb[0].mxu0 %v928
    %v1005 = vpop.f32.mrb[0].mxu0
    %v1006 = vadd.f32 0.0, %v1005
    %v1007 = vpop.f32.mrb[0].mxu0
    %1008 = vmatprep.mubr.f32.mxu0 0.0
    %1009 = vmatmul.mubr.f32.gmra.mrb[0].mxu0 %v931
    %v1010 = vpop.f32.mrb[0].mxu0
    %v1011 = vadd.f32 0.0, %v1010
    %v1012 = vpop.f32.mrb[0].mxu0
    %1013 = vmatprep.mubr.f32.mxu0 0.0
    %1014 = vmatmul.mubr.f32.gmra.mrb[0].mxu0 %v934
    %v1015 = vpop.f32.mrb[0].mxu0
    %v1016 = vadd.f32 0.0, %v1015
    %v1017 = vpop.f32.mrb[0].mxu0
    %1018 = vmatprep.mubr.f32.mxu0 0.0
    %1019 = vmatmul.mubr.f32.gmra.mrb[0].mxu0 %v937
    %v1020 = vpop.f32.mrb[0].mxu0
    %v1021 = vadd.f32 0.0, %v1020
    %v1022 = vpop.f32.mrb[0].mxu0
    %1023 = vdwg.mxu0
    %v1024 = vadd.f32 %v919, %v1006
    %v1025 = vadd.f32 %v920, %v1011
    %v1026 = vadd.f32 %v921, %v1016
    %v1027 = vadd.f32 %v922, %v1021
    %v1028 = vmax.f32 %v1024, 0.0
    %v1029 = vmax.f32 %v1025, 0.0
    %v1030 = vmax.f32 %v1026, 0.0
    %v1031 = vmax.f32 %v1027, 0.0
    %v1032 = vld [vmem:[#allocation4 + $0x600] sm:$0xff]
    %v1033 = vld [vmem:[#allocation4 + $0x608] sm:$0xff]
    %v1034 = vld [vmem:[#allocation4 + $0x610] sm:$0xff]
    %v1035 = vld [vmem:[#allocation4 + $0x630] sm:$0xff]
    %v1036 = vld [vmem:[#allocation4 + $0x638] sm:$0xff]
    %v1037 = vld [vmem:[#allocation4 + $0x640] sm:$0xff]
    %v1038 = vld [vmem:[#allocation4 + $0x660] sm:$0xff]
    %v1039 = vld [vmem:[#allocation4 + $0x668] sm:$0xff]
    %v1040 = vld [vmem:[#allocation4 + $0x670] sm:$0xff]
    %v1041 = vld [vmem:[#allocation4 + $0x690] sm:$0xff]
    %v1042 = vld [vmem:[#allocation4 + $0x698] sm:$0xff]
    %v1043 = vld [vmem:[#allocation4 + $0x6a0] sm:$0xff]
    %v1044 = vld [vmem:[#allocation4 + $0x6c0] sm:$0xff]
    %v1045 = vld [vmem:[#allocation4 + $0x6c8] sm:$0xff]
    %v1046 = vld [vmem:[#allocation4 + $0x6d0] sm:$0xff]
    %v1047 = vld [vmem:[#allocation4 + $0x6f0] sm:$0xff]
    %v1048 = vld [vmem:[#allocation4 + $0x6f8] sm:$0xff]
    %v1049 = vld [vmem:[#allocation4 + $0x700] sm:$0xff]
    %v1050 = vld [vmem:[#allocation4 + $0x720] sm:$0xff]
    %v1051 = vld [vmem:[#allocation4 + $0x728] sm:$0xff]
    %v1052 = vld [vmem:[#allocation4 + $0x730] sm:$0xff]
    %v1053 = vld [vmem:[#allocation4 + $0x750] sm:$0xff]
    %v1054 = vld [vmem:[#allocation4 + $0x758] sm:$0xff]
    %v1055 = vld [vmem:[#allocation4 + $0x760] sm:$0xff]
    %v1056 = vld [vmem:[#allocation4 + $0x780] sm:$0xff]
    %v1057 = vld [vmem:[#allocation4 + $0x788] sm:$0xff]
    %v1058 = vld [vmem:[#allocation4 + $0x790] sm:$0xff]
    %v1059 = vld [vmem:[#allocation4 + $0x7b0] sm:$0xff]
    %v1060 = vld [vmem:[#allocation4 + $0x7b8] sm:$0xff]
    %v1061 = vld [vmem:[#allocation4 + $0x7c0] sm:$0xff]
    %v1062 = vld [vmem:[#allocation4 + $0x7e0] sm:$0xff]
    %v1063 = vld [vmem:[#allocation4 + $0x7e8] sm:$0xff]
    %v1064 = vld [vmem:[#allocation4 + $0x7f0] sm:$0xff]
    %v1065 = vld [vmem:[#allocation4 + $0x810] sm:$0xff]
    %v1066 = vld [vmem:[#allocation4 + $0x818] sm:$0xff]
    %v1067 = vld [vmem:[#allocation4 + $0x820] sm:$0xff]
    %v1068 = vld [vmem:[#allocation4 + $0x840] sm:$0xff]
    %v1069 = vld [vmem:[#allocation4 + $0x848] sm:$0xff]
    %v1070 = vld [vmem:[#allocation4 + $0x850] sm:$0xff]
    %v1071 = vld [vmem:[#allocation4 + $0x870] sm:$0xff]
    %v1072 = vld [vmem:[#allocation4 + $0x878] sm:$0xff]
    %v1073 = vld [vmem:[#allocation4 + $0x880] sm:$0xff]
    %v1074 = vld [vmem:[#allocation4 + $0x8a0] sm:$0xff]
    %v1075 = vld [vmem:[#allocation4 + $0x8a8] sm:$0xff]
    %v1076 = vld [vmem:[#allocation4 + $0x8b0] sm:$0xff]
    %v1077 = vld [vmem:[#allocation4 + $0x8d0] sm:$0xff]
    %v1078 = vld [vmem:[#allocation4 + $0x8d8] sm:$0xff]
    %v1079 = vld [vmem:[#allocation4 + $0x8e0] sm:$0xff]
    %1080 = vmatprep.subr.mxu0 %v1033
    %1081 = vmatpush1.msra.mxu0 %v1032
    %1082 = vmatprep.subr.mxu0 %v1036
    %1083 = vmatpush1.msra.mxu0 %v1035
    %1084 = vmatprep.subr.mxu0 %v1039
    %1085 = vmatpush1.msra.mxu0 %v1038
    %1086 = vmatprep.subr.mxu0 %v1042
    %1087 = vmatpush1.msra.mxu0 %v1041
    %1088 = vmatprep.subr.mxu0 %v1045
    %1089 = vmatpush1.msra.mxu0 %v1044
    %1090 = vmatprep.subr.mxu0 %v1048
    %1091 = vmatpush1.msra.mxu0 %v1047
    %1092 = vmatprep.subr.mxu0 %v1051
    %1093 = vmatpush1.msra.mxu0 %v1050
    %1094 = vmatprep.subr.mxu0 %v1054
    %1095 = vmatpush1.msra.mxu0 %v1053
    %1096 = vmatprep.subr.mxu0 %v1057
    %1097 = vmatpush1.msra.mxu0 %v1056
    %1098 = vmatprep.subr.mxu0 %v1060
    %1099 = vmatpush1.msra.mxu0 %v1059
    %1100 = vmatprep.subr.mxu0 %v1063
    %1101 = vmatpush1.msra.mxu0 %v1062
    %1102 = vmatprep.subr.mxu0 %v1066
    %1103 = vmatpush1.msra.mxu0 %v1065
    %1104 = vmatprep.subr.mxu0 %v1069
    %1105 = vmatpush1.msra.mxu0 %v1068
    %1106 = vmatprep.subr.mxu0 %v1072
    %1107 = vmatpush1.msra.mxu0 %v1071
    %1108 = vmatprep.subr.mxu0 %v1075
    %1109 = vmatpush1.msra.mxu0 %v1074
    %1110 = vmatprep.subr.mxu0 %v1078
    %1111 = vmatpush1.msra.mxu0 %v1077
    %1112 = vmatprep.subr.mxu0 0.0
    %1113 = vmatpush1.msra.mxu0 0.0
    %1114 = vmatprep.subr.mxu0 0.0
    %1115 = vmatpush1.msra.mxu0 0.0
    %1116 = vmatprep.subr.mxu0 0.0
    %1117 = vmatpush1.msra.mxu0 0.0
    %1118 = vmatprep.subr.mxu0 0.0
    %1119 = vmatpush1.msra.mxu0 0.0
    %1120 = vmatprep.subr.mxu0 0.0
    %1121 = vmatpush1.msra.mxu0 0.0
    %1122 = vmatprep.subr.mxu0 0.0
    %1123 = vmatpush1.msra.mxu0 0.0
    %1124 = vmatprep.subr.mxu0 0.0
    %1125 = vmatpush1.msra.mxu0 0.0
    %1126 = vmatprep.subr.mxu0 0.0
    %1127 = vmatpush1.msra.mxu0 0.0
    %1128 = vmatprep.subr.mxu0 0.0
    %1129 = vmatpush1.msra.mxu0 0.0
    %1130 = vmatprep.subr.mxu0 0.0
    %1131 = vmatpush1.msra.mxu0 0.0
    %1132 = vmatprep.subr.mxu0 0.0
    %1133 = vmatpush1.msra.mxu0 0.0
    %1134 = vmatprep.subr.mxu0 0.0
    %1135 = vmatpush1.msra.mxu0 0.0
    %1136 = vmatprep.subr.mxu0 0.0
    %1137 = vmatpush1.msra.mxu0 0.0
    %1138 = vmatprep.subr.mxu0 0.0
    %1139 = vmatpush1.msra.mxu0 0.0
    %1140 = vmatprep.subr.mxu0 0.0
    %1141 = vmatpush1.msra.mxu0 0.0
    %1142 = vmatprep.subr.mxu0 0.0
    %1143 = vmatpush1.msra.mxu0 0.0
    %1144 = vmatprep.mubr.f32.mxu0 0.0
    %1145 = vmatmul.mubr.f32.gmra.mrb[0].mxu0 %v1028
    %v1146 = vpop.f32.mrb[0].mxu0
    %v1147 = vadd.f32 0.0, %v1146
    %v1148 = vpop.f32.mrb[0].mxu0
    %v1149 = vadd.f32 0.0, %v1148
    %1150 = vmatprep.mubr.f32.mxu0 0.0
    %1151 = vmatmul.mubr.f32.gmra.mrb[0].mxu0 %v1029
    %v1152 = vpop.f32.mrb[0].mxu0
    %v1153 = vadd.f32 0.0, %v1152
    %v1154 = vpop.f32.mrb[0].mxu0
    %v1155 = vadd.f32 0.0, %v1154
    %1156 = vmatprep.mubr.f32.mxu0 0.0
    %1157 = vmatmul.mubr.f32.gmra.mrb[0].mxu0 %v1030
    %v1158 = vpop.f32.mrb[0].mxu0
    %v1159 = vadd.f32 0.0, %v1158
    %v1160 = vpop.f32.mrb[0].mxu0
    %v1161 = vadd.f32 0.0, %v1160
    %1162 = vmatprep.mubr.f32.mxu0 0.0
    %1163 = vmatmul.mubr.f32.gmra.mrb[0].mxu0 %v1031
    %v1164 = vpop.f32.mrb[0].mxu0
    %v1165 = vadd.f32 0.0, %v1164
    %v1166 = vpop.f32.mrb[0].mxu0
    %v1167 = vadd.f32 0.0, %v1166
    %1168 = vdwg.mxu0
    %1169 = vmatprep.subr.mxu0 0.0
    %1170 = vmatpush1.msra.mxu0 %v1034
    %1171 = vmatprep.subr.mxu0 0.0
    %1172 = vmatpush1.msra.mxu0 %v1037
    %1173 = vmatprep.subr.mxu0 0.0
    %1174 = vmatpush1.msra.mxu0 %v1040
    %1175 = vmatprep.subr.mxu0 0.0
    %1176 = vmatpush1.msra.mxu0 %v1043
    %1177 = vmatprep.subr.mxu0 0.0
    %1178 = vmatpush1.msra.mxu0 %v1046
    %1179 = vmatprep.subr.mxu0 0.0
    %1180 = vmatpush1.msra.mxu0 %v1049
    %1181 = vmatprep.subr.mxu0 0.0
    %1182 = vmatpush1.msra.mxu0 %v1052
    %1183 = vmatprep.subr.mxu0 0.0
    %1184 = vmatpush1.msra.mxu0 %v1055
    %1185 = vmatprep.subr.mxu0 0.0
    %1186 = vmatpush1.msra.mxu0 %v1058
    %1187 = vmatprep.subr.mxu0 0.0
    %1188 = vmatpush1.msra.mxu0 %v1061
    %1189 = vmatprep.subr.mxu0 0.0
    %1190 = vmatpush1.msra.mxu0 %v1064
    %1191 = vmatprep.subr.mxu0 0.0
    %1192 = vmatpush1.msra.mxu0 %v1067
    %1193 = vmatprep.subr.mxu0 0.0
    %1194 = vmatpush1.msra.mxu0 %v1070
    %1195 = vmatprep.subr.mxu0 0.0
    %1196 = vmatpush1.msra.mxu0 %v1073
    %1197 = vmatprep.subr.mxu0 0.0
    %1198 = vmatpush1.msra.mxu0 %v1076
    %1199 = vmatprep.subr.mxu0 0.0
    %1200 = vmatpush1.msra.mxu0 %v1079
    %1201 = vmatprep.subr.mxu0 0.0
    %1202 = vmatpush1.msra.mxu0 0.0
    %1203 = vmatprep.subr.mxu0 0.0
    %1204 = vmatpush1.msra.mxu0 0.0
    %1205 = vmatprep.subr.mxu0 0.0
    %1206 = vmatpush1.msra.mxu0 0.0
    %1207 = vmatprep.subr.mxu0 0.0
    %1208 = vmatpush1.msra.mxu0 0.0
    %1209 = vmatprep.subr.mxu0 0.0
    %1210 = vmatpush1.msra.mxu0 0.0
    %1211 = vmatprep.subr.mxu0 0.0
    %1212 = vmatpush1.msra.mxu0 0.0
    %1213 = vmatprep.subr.mxu0 0.0
    %1214 = vmatpush1.msra.mxu0 0.0
    %1215 = vmatprep.subr.mxu0 0.0
    %1216 = vmatpush1.msra.mxu0 0.0
    %1217 = vmatprep.subr.mxu0 0.0
    %1218 = vmatpush1.msra.mxu0 0.0
    %1219 = vmatprep.subr.mxu0 0.0
    %1220 = vmatpush1.msra.mxu0 0.0
    %1221 = vmatprep.subr.mxu0 0.0
    %1222 = vmatpush1.msra.mxu0 0.0
    %1223 = vmatprep.subr.mxu0 0.0
    %1224 = vmatpush1.msra.mxu0 0.0
    %1225 = vmatprep.subr.mxu0 0.0
    %1226 = vmatpush1.msra.mxu0 0.0
    %1227 = vmatprep.subr.mxu0 0.0
    %1228 = vmatpush1.msra.mxu0 0.0
    %1229 = vmatprep.subr.mxu0 0.0
    %1230 = vmatpush1.msra.mxu0 0.0
    %1231 = vmatprep.subr.mxu0 0.0
    %1232 = vmatpush1.msra.mxu0 0.0
    %1233 = vmatprep.mubr.f32.mxu0 0.0
    %1234 = vmatmul.mubr.f32.gmra.mrb[0].mxu0 %v1028
    %v1235 = vpop.f32.mrb[0].mxu0
    %v1236 = vadd.f32 0.0, %v1235
    %v1237 = vpop.f32.mrb[0].mxu0
    %1238 = vmatprep.mubr.f32.mxu0 0.0
    %1239 = vmatmul.mubr.f32.gmra.mrb[0].mxu0 %v1029
    %v1240 = vpop.f32.mrb[0].mxu0
    %v1241 = vadd.f32 0.0, %v1240
    %v1242 = vpop.f32.mrb[0].mxu0
    %1243 = vmatprep.mubr.f32.mxu0 0.0
    %1244 = vmatmul.mubr.f32.gmra.mrb[0].mxu0 %v1030
    %v1245 = vpop.f32.mrb[0].mxu0
    %v1246 = vadd.f32 0.0, %v1245
    %v1247 = vpop.f32.mrb[0].mxu0
    %1248 = vmatprep.mubr.f32.mxu0 0.0
    %1249 = vmatmul.mubr.f32.gmra.mrb[0].mxu0 %v1031
    %v1250 = vpop.f32.mrb[0].mxu0
    %v1251 = vadd.f32 0.0, %v1250
    %v1252 = vpop.f32.mrb[0].mxu0
    %1253 = vdwg.mxu0
    %v1254 = vld [vmem:[#allocation6 + $0x60] sm:$0xff]
    %v1255 = vld [vmem:[#allocation6 + $0x70] sm:$0xff]
    %v1256 = vld [vmem:[#allocation6 + $0x80] sm:$0xff]
    %v1257 = vld [vmem:[#allocation6 + $0x90] sm:$0xff]
    %v1258 = vld [vmem:[#allocation2 + $0x90] sm:$0xff]
    %v1259 = vld [vmem:[#allocation2 + $0x98] sm:$0xff]
    %v1260 = vld [vmem:[#allocation2 + $0xa0] sm:$0xff]
    %v1261 = vld [vmem:[#allocation2 + $0xa8] sm:$0xff]
    %vm1262 = vcmask 261120
    %v1264 = vsel %vm1262, %v1258, 0
    %v1267 = vsel %vm1262, %v1259, 0
    %v1270 = vsel %vm1262, %v1260, 0
    %v1273 = vsel %vm1262, %v1261, 0
    %1275 = vmatprep.subr.mxu0 0.0
    %1276 = vmatpush1.msra.mxu0 %v1147
    %1277 = vmatprep.subr.mxu0 0.0
    %1278 = vmatpush1.msra.mxu0 %v1153
    %1279 = vmatprep.subr.mxu0 0.0
    %1280 = vmatpush1.msra.mxu0 %v1159
    %1281 = vmatprep.subr.mxu0 0.0
    %1282 = vmatpush1.msra.mxu0 %v1165
    %1283 = vmatprep.subr.mxu0 0.0
    %1284 = vmatpush1.msra.mxu0 0.0
    %1285 = vmatprep.subr.mxu0 0.0
    %1286 = vmatpush1.msra.mxu0 0.0
    %1287 = vmatprep.subr.mxu0 0.0
    %1288 = vmatpush1.msra.mxu0 0.0
    %1289 = vmatprep.subr.mxu0 0.0
    %1290 = vmatpush1.msra.mxu0 0.0
    %1291 = vmatprep.subr.mxu0 0.0
    %1292 = vmatpush1.msra.mxu0 0.0
    %1293 = vmatprep.subr.mxu0 0.0
    %1294 = vmatpush1.msra.mxu0 0.0
    %1295 = vmatprep.subr.mxu0 0.0
    %1296 = vmatpush1.msra.mxu0 0.0
    %1297 = vmatprep.subr.mxu0 0.0
    %1298 = vmatpush1.msra.mxu0 0.0
    %1299 = vmatprep.subr.mxu0 0.0
    %1300 = vmatpush1.msra.mxu0 0.0
    %1301 = vmatprep.subr.mxu0 0.0
    %1302 = vmatpush1.msra.mxu0 0.0
    %1303 = vmatprep.subr.mxu0 0.0
    %1304 = vmatpush1.msra.mxu0 0.0
    %1305 = vmatprep.subr.mxu0 0.0
    %1306 = vmatpush1.msra.mxu0 0.0
    %1307 = vmatprep.subr.mxu0 0.0
    %1308 = vmatpush1.msra.mxu0 0.0
    %1309 = vmatprep.subr.mxu0 0.0
    %1310 = vmatpush1.msra.mxu0 0.0
    %1311 = vmatprep.subr.mxu0 0.0
    %1312 = vmatpush1.msra.mxu0 0.0
    %1313 = vmatprep.subr.mxu0 0.0
    %1314 = vmatpush1.msra.mxu0 0.0
    %1315 = vmatprep.subr.mxu0 0.0
    %1316 = vmatpush1.msra.mxu0 0.0
    %1317 = vmatprep.subr.mxu0 0.0
    %1318 = vmatpush1.msra.mxu0 0.0
    %1319 = vmatprep.subr.mxu0 0.0
    %1320 = vmatpush1.msra.mxu0 0.0
    %1321 = vmatprep.subr.mxu0 0.0
    %1322 = vmatpush1.msra.mxu0 0.0
    %1323 = vmatprep.subr.mxu0 0.0
    %1324 = vmatpush1.msra.mxu0 0.0
    %1325 = vmatprep.subr.mxu0 0.0
    %1326 = vmatpush1.msra.mxu0 0.0
    %1327 = vmatprep.subr.mxu0 0.0
    %1328 = vmatpush1.msra.mxu0 0.0
    %1329 = vmatprep.subr.mxu0 0.0
    %1330 = vmatpush1.msra.mxu0 0.0
    %1331 = vmatprep.subr.mxu0 0.0
    %1332 = vmatpush1.msra.mxu0 0.0
    %1333 = vmatprep.subr.mxu0 0.0
    %1334 = vmatpush1.msra.mxu0 0.0
    %1335 = vmatprep.subr.mxu0 0.0
    %1336 = vmatpush1.msra.mxu0 0.0
    %1337 = vmatprep.subr.mxu0 0.0
    %1338 = vmatpush1.msra.mxu0 0.0
    %1339 = vmatprep.mubr.f32.mxu0 0.0
    %1340 = vmatmul.mubr.f32.gmra.mrb[0].mxu0 %v1264
    %v1341 = vpop.f32.mrb[0].mxu0
    %v1342 = vadd.f32 0.0, %v1341
    %v1343 = vpop.f32.mrb[0].mxu0
    %1344 = vmatprep.mubr.f32.mxu0 0.0
    %1345 = vmatmul.mubr.f32.gmra.mrb[0].mxu0 %v1267
    %v1346 = vpop.f32.mrb[0].mxu0
    %v1347 = vadd.f32 0.0, %v1346
    %v1348 = vpop.f32.mrb[0].mxu0
    %1349 = vmatprep.mubr.f32.mxu0 0.0
    %1350 = vmatmul.mubr.f32.gmra.mrb[0].mxu0 %v1270
    %v1351 = vpop.f32.mrb[0].mxu0
    %v1352 = vadd.f32 0.0, %v1351
    %v1353 = vpop.f32.mrb[0].mxu0
    %1354 = vmatprep.mubr.f32.mxu0 0.0
    %1355 = vmatmul.mubr.f32.gmra.mrb[0].mxu0 %v1273
    %v1356 = vpop.f32.mrb[0].mxu0
    %v1357 = vadd.f32 0.0, %v1356
    %v1358 = vpop.f32.mrb[0].mxu0
    %1359 = vdwg.mxu0
    %v1360 = vadd.f32 %v1254, %v1342
    %v1361 = vadd.f32 %v1255, %v1347
    %v1362 = vadd.f32 %v1256, %v1352
    %v1363 = vadd.f32 %v1257, %v1357
    %v1364 = vld [vmem:[#allocation2 + $0xb0] sm:$0xff]
    %v1365 = vld [vmem:[#allocation2 + $0xb8] sm:$0xff]
    %v1366 = vld [vmem:[#allocation2 + $0xc0] sm:$0xff]
    %v1367 = vld [vmem:[#allocation2 + $0xc8] sm:$0xff]
    %v1369 = vsel %vm1262, %v1364, 0
    %v1372 = vsel %vm1262, %v1365, 0
    %v1375 = vsel %vm1262, %v1366, 0
    %v1378 = vsel %vm1262, %v1367, 0
    %1380 = vmatprep.subr.mxu0 0.0
    %1381 = vmatpush1.msra.mxu0 %v1149
    %1382 = vmatprep.subr.mxu0 0.0
    %1383 = vmatpush1.msra.mxu0 %v1155
    %1384 = vmatprep.subr.mxu0 0.0
    %1385 = vmatpush1.msra.mxu0 %v1161
    %1386 = vmatprep.subr.mxu0 0.0
    %1387 = vmatpush1.msra.mxu0 %v1167
    %1388 = vmatprep.subr.mxu0 0.0
    %1389 = vmatpush1.msra.mxu0 0.0
    %1390 = vmatprep.subr.mxu0 0.0
    %1391 = vmatpush1.msra.mxu0 0.0
    %1392 = vmatprep.subr.mxu0 0.0
    %1393 = vmatpush1.msra.mxu0 0.0
    %1394 = vmatprep.subr.mxu0 0.0
    %1395 = vmatpush1.msra.mxu0 0.0
    %1396 = vmatprep.subr.mxu0 0.0
    %1397 = vmatpush1.msra.mxu0 0.0
    %1398 = vmatprep.subr.mxu0 0.0
    %1399 = vmatpush1.msra.mxu0 0.0
    %1400 = vmatprep.subr.mxu0 0.0
    %1401 = vmatpush1.msra.mxu0 0.0
    %1402 = vmatprep.subr.mxu0 0.0
    %1403 = vmatpush1.msra.mxu0 0.0
    %1404 = vmatprep.subr.mxu0 0.0
    %1405 = vmatpush1.msra.mxu0 0.0
    %1406 = vmatprep.subr.mxu0 0.0
    %1407 = vmatpush1.msra.mxu0 0.0
    %1408 = vmatprep.subr.mxu0 0.0
    %1409 = vmatpush1.msra.mxu0 0.0
    %1410 = vmatprep.subr.mxu0 0.0
    %1411 = vmatpush1.msra.mxu0 0.0
    %1412 = vmatprep.subr.mxu0 0.0
    %1413 = vmatpush1.msra.mxu0 0.0
    %1414 = vmatprep.subr.mxu0 0.0
    %1415 = vmatpush1.msra.mxu0 0.0
    %1416 = vmatprep.subr.mxu0 0.0
    %1417 = vmatpush1.msra.mxu0 0.0
    %1418 = vmatprep.subr.mxu0 0.0
    %1419 = vmatpush1.msra.mxu0 0.0
    %1420 = vmatprep.subr.mxu0 0.0
    %1421 = vmatpush1.msra.mxu0 0.0
    %1422 = vmatprep.subr.mxu0 0.0
    %1423 = vmatpush1.msra.mxu0 0.0
    %1424 = vmatprep.subr.mxu0 0.0
    %1425 = vmatpush1.msra.mxu0 0.0
    %1426 = vmatprep.subr.mxu0 0.0
    %1427 = vmatpush1.msra.mxu0 0.0
    %1428 = vmatprep.subr.mxu0 0.0
    %1429 = vmatpush1.msra.mxu0 0.0
    %1430 = vmatprep.subr.mxu0 0.0
    %1431 = vmatpush1.msra.mxu0 0.0
    %1432 = vmatprep.subr.mxu0 0.0
    %1433 = vmatpush1.msra.mxu0 0.0
    %1434 = vmatprep.subr.mxu0 0.0
    %1435 = vmatpush1.msra.mxu0 0.0
    %1436 = vmatprep.subr.mxu0 0.0
    %1437 = vmatpush1.msra.mxu0 0.0
    %1438 = vmatprep.subr.mxu0 0.0
    %1439 = vmatpush1.msra.mxu0 0.0
    %1440 = vmatprep.subr.mxu0 0.0
    %1441 = vmatpush1.msra.mxu0 0.0
    %1442 = vmatprep.subr.mxu0 0.0
    %1443 = vmatpush1.msra.mxu0 0.0
    %1444 = vmatprep.mubr.f32.mxu0 0.0
    %1445 = vmatmul.mubr.f32.gmra.mrb[0].mxu0 %v1369
    %v1446 = vpop.f32.mrb[0].mxu0
    %v1447 = vadd.f32 0.0, %v1446
    %v1448 = vpop.f32.mrb[0].mxu0
    %1449 = vmatprep.mubr.f32.mxu0 0.0
    %1450 = vmatmul.mubr.f32.gmra.mrb[0].mxu0 %v1372
    %v1451 = vpop.f32.mrb[0].mxu0
    %v1452 = vadd.f32 0.0, %v1451
    %v1453 = vpop.f32.mrb[0].mxu0
    %1454 = vmatprep.mubr.f32.mxu0 0.0
    %1455 = vmatmul.mubr.f32.gmra.mrb[0].mxu0 %v1375
    %v1456 = vpop.f32.mrb[0].mxu0
    %v1457 = vadd.f32 0.0, %v1456
    %v1458 = vpop.f32.mrb[0].mxu0
    %1459 = vmatprep.mubr.f32.mxu0 0.0
    %1460 = vmatmul.mubr.f32.gmra.mrb[0].mxu0 %v1378
    %v1461 = vpop.f32.mrb[0].mxu0
    %v1462 = vadd.f32 0.0, %v1461
    %v1463 = vpop.f32.mrb[0].mxu0
    %1464 = vdwg.mxu0
    %v1465 = vadd.f32 %v1360, %v1447
    %v1466 = vadd.f32 %v1361, %v1452
    %v1467 = vadd.f32 %v1362, %v1457
    %v1468 = vadd.f32 %v1363, %v1462
    %v1469 = vld [vmem:[#allocation2 + $0xd0] sm:$0xff]
    %v1470 = vld [vmem:[#allocation2 + $0xd8] sm:$0xff]
    %v1471 = vld [vmem:[#allocation2 + $0xe0] sm:$0xff]
    %v1472 = vld [vmem:[#allocation2 + $0xe8] sm:$0xff]
    %v1474 = vsel %vm1262, %v1469, 0
    %v1477 = vsel %vm1262, %v1470, 0
    %v1480 = vsel %vm1262, %v1471, 0
    %v1483 = vsel %vm1262, %v1472, 0
    %1485 = vmatprep.subr.mxu0 0.0
    %1486 = vmatpush1.msra.mxu0 %v1236
    %1487 = vmatprep.subr.mxu0 0.0
    %1488 = vmatpush1.msra.mxu0 %v1241
    %1489 = vmatprep.subr.mxu0 0.0
    %1490 = vmatpush1.msra.mxu0 %v1246
    %1491 = vmatprep.subr.mxu0 0.0
    %1492 = vmatpush1.msra.mxu0 %v1251
    %1493 = vmatprep.subr.mxu0 0.0
    %1494 = vmatpush1.msra.mxu0 0.0
    %1495 = vmatprep.subr.mxu0 0.0
    %1496 = vmatpush1.msra.mxu0 0.0
    %1497 = vmatprep.subr.mxu0 0.0
    %1498 = vmatpush1.msra.mxu0 0.0
    %1499 = vmatprep.subr.mxu0 0.0
    %1500 = vmatpush1.msra.mxu0 0.0
    %1501 = vmatprep.subr.mxu0 0.0
    %1502 = vmatpush1.msra.mxu0 0.0
    %1503 = vmatprep.subr.mxu0 0.0
    %1504 = vmatpush1.msra.mxu0 0.0
    %1505 = vmatprep.subr.mxu0 0.0
    %1506 = vmatpush1.msra.mxu0 0.0
    %1507 = vmatprep.subr.mxu0 0.0
    %1508 = vmatpush1.msra.mxu0 0.0
    %1509 = vmatprep.subr.mxu0 0.0
    %1510 = vmatpush1.msra.mxu0 0.0
    %1511 = vmatprep.subr.mxu0 0.0
    %1512 = vmatpush1.msra.mxu0 0.0
    %1513 = vmatprep.subr.mxu0 0.0
    %1514 = vmatpush1.msra.mxu0 0.0
    %1515 = vmatprep.subr.mxu0 0.0
    %1516 = vmatpush1.msra.mxu0 0.0
    %1517 = vmatprep.subr.mxu0 0.0
    %1518 = vmatpush1.msra.mxu0 0.0
    %1519 = vmatprep.subr.mxu0 0.0
    %1520 = vmatpush1.msra.mxu0 0.0
    %1521 = vmatprep.subr.mxu0 0.0
    %1522 = vmatpush1.msra.mxu0 0.0
    %1523 = vmatprep.subr.mxu0 0.0
    %1524 = vmatpush1.msra.mxu0 0.0
    %1525 = vmatprep.subr.mxu0 0.0
    %1526 = vmatpush1.msra.mxu0 0.0
    %1527 = vmatprep.subr.mxu0 0.0
    %1528 = vmatpush1.msra.mxu0 0.0
    %1529 = vmatprep.subr.mxu0 0.0
    %1530 = vmatpush1.msra.mxu0 0.0
    %1531 = vmatprep.subr.mxu0 0.0
    %1532 = vmatpush1.msra.mxu0 0.0
    %1533 = vmatprep.subr.mxu0 0.0
    %1534 = vmatpush1.msra.mxu0 0.0
    %1535 = vmatprep.subr.mxu0 0.0
    %1536 = vmatpush1.msra.mxu0 0.0
    %1537 = vmatprep.subr.mxu0 0.0
    %1538 = vmatpush1.msra.mxu0 0.0
    %1539 = vmatprep.subr.mxu0 0.0
    %1540 = vmatpush1.msra.mxu0 0.0
    %1541 = vmatprep.subr.mxu0 0.0
    %1542 = vmatpush1.msra.mxu0 0.0
    %1543 = vmatprep.subr.mxu0 0.0
    %1544 = vmatpush1.msra.mxu0 0.0
    %1545 = vmatprep.subr.mxu0 0.0
    %1546 = vmatpush1.msra.mxu0 0.0
    %1547 = vmatprep.subr.mxu0 0.0
    %1548 = vmatpush1.msra.mxu0 0.0
    %1549 = vmatprep.mubr.f32.mxu0 0.0
    %1550 = vmatmul.mubr.f32.gmra.mrb[0].mxu0 %v1474
    %v1551 = vpop.f32.mrb[0].mxu0
    %v1552 = vadd.f32 0.0, %v1551
    %v1553 = vpop.f32.mrb[0].mxu0
    %1554 = vmatprep.mubr.f32.mxu0 0.0
    %1555 = vmatmul.mubr.f32.gmra.mrb[0].mxu0 %v1477
    %v1556 = vpop.f32.mrb[0].mxu0
    %v1557 = vadd.f32 0.0, %v1556
    %v1558 = vpop.f32.mrb[0].mxu0
    %1559 = vmatprep.mubr.f32.mxu0 0.0
    %1560 = vmatmul.mubr.f32.gmra.mrb[0].mxu0 %v1480
    %v1561 = vpop.f32.mrb[0].mxu0
    %v1562 = vadd.f32 0.0, %v1561
    %v1563 = vpop.f32.mrb[0].mxu0
    %1564 = vmatprep.mubr.f32.mxu0 0.0
    %1565 = vmatmul.mubr.f32.gmra.mrb[0].mxu0 %v1483
    %v1566 = vpop.f32.mrb[0].mxu0
    %v1567 = vadd.f32 0.0, %v1566
    %v1568 = vpop.f32.mrb[0].mxu0
    %1569 = vdwg.mxu0
    %v1570 = vadd.f32 %v1465, %v1552
    %v1571 = vadd.f32 %v1466, %v1557
    %v1572 = vadd.f32 %v1467, %v1562
    %v1573 = vadd.f32 %v1468, %v1567
    %v1574 = vmax.f32 %v1570, 0.0
    %v1575 = vmax.f32 %v1571, 0.0
    %v1576 = vmax.f32 %v1572, 0.0
    %v1577 = vmax.f32 %v1573, 0.0
    %v1578 = vld [vmem:[#allocation4 + $0x900] sm:$0xff]
    %v1579 = vld [vmem:[#allocation4 + $0x908] sm:$0xff]
    %v1580 = vld [vmem:[#allocation4 + $0x910] sm:$0xff]
    %v1581 = vld [vmem:[#allocation4 + $0x918] sm:$0xff]
    %v1582 = vld [vmem:[#allocation4 + $0x920] sm:$0xff]
    %v1583 = vld [vmem:[#allocation4 + $0x928] sm:$0xff]
    %v1584 = vld [vmem:[#allocation4 + $0x930] sm:$0xff]
    %v1585 = vld [vmem:[#allocation4 + $0x938] sm:$0xff]
    %v1586 = vld [vmem:[#allocation4 + $0x940] sm:$0xff]
    %v1587 = vld [vmem:[#allocation4 + $0x948] sm:$0xff]
    %v1588 = vld [vmem:[#allocation4 + $0x950] sm:$0xff]
    %v1589 = vld [vmem:[#allocation4 + $0x958] sm:$0xff]
    %v1590 = vld [vmem:[#allocation4 + $0x960] sm:$0xff]
    %v1591 = vld [vmem:[#allocation4 + $0x968] sm:$0xff]
    %v1592 = vld [vmem:[#allocation4 + $0x970] sm:$0xff]
    %v1593 = vld [vmem:[#allocation4 + $0x978] sm:$0xff]
    %v1594 = vld [vmem:[#allocation4 + $0x980] sm:$0xff]
    %v1595 = vld [vmem:[#allocation4 + $0x988] sm:$0xff]
    %v1596 = vld [vmem:[#allocation4 + $0x990] sm:$0xff]
    %v1597 = vld [vmem:[#allocation4 + $0x998] sm:$0xff]
    %v1598 = vld [vmem:[#allocation4 + $0x9a0] sm:$0xff]
    %v1599 = vld [vmem:[#allocation4 + $0x9a8] sm:$0xff]
    %v1600 = vld [vmem:[#allocation4 + $0x9b0] sm:$0xff]
    %v1601 = vld [vmem:[#allocation4 + $0x9b8] sm:$0xff]
    %v1602 = vld [vmem:[#allocation4 + $0x9c0] sm:$0xff]
    %v1603 = vld [vmem:[#allocation4 + $0x9c8] sm:$0xff]
    %v1604 = vld [vmem:[#allocation4 + $0x9d0] sm:$0xff]
    %v1605 = vld [vmem:[#allocation4 + $0x9d8] sm:$0xff]
    %v1606 = vld [vmem:[#allocation4 + $0x9e0] sm:$0xff]
    %v1607 = vld [vmem:[#allocation4 + $0x9e8] sm:$0xff]
    %v1608 = vld [vmem:[#allocation4 + $0x9f0] sm:$0xff]
    %v1609 = vld [vmem:[#allocation4 + $0x9f8] sm:$0xff]
    %v1610 = vld [vmem:[#allocation4 + $0xa00] sm:$0xff]
    %v1611 = vld [vmem:[#allocation4 + $0xa08] sm:$0xff]
    %v1612 = vld [vmem:[#allocation4 + $0xa10] sm:$0xff]
    %v1613 = vld [vmem:[#allocation4 + $0xa18] sm:$0xff]
    %v1614 = vld [vmem:[#allocation4 + $0xa20] sm:$0xff]
    %v1615 = vld [vmem:[#allocation4 + $0xa28] sm:$0xff]
    %v1616 = vld [vmem:[#allocation4 + $0xa30] sm:$0xff]
    %v1617 = vld [vmem:[#allocation4 + $0xa38] sm:$0xff]
    %v1618 = vld [vmem:[#allocation4 + $0xa40] sm:$0xff]
    %v1619 = vld [vmem:[#allocation4 + $0xa48] sm:$0xff]
    %v1620 = vld [vmem:[#allocation4 + $0xa50] sm:$0xff]
    %v1621 = vld [vmem:[#allocation4 + $0xa58] sm:$0xff]
    %v1622 = vld [vmem:[#allocation4 + $0xa60] sm:$0xff]
    %v1623 = vld [vmem:[#allocation4 + $0xa68] sm:$0xff]
    %v1624 = vld [vmem:[#allocation4 + $0xa70] sm:$0xff]
    %v1625 = vld [vmem:[#allocation4 + $0xa78] sm:$0xff]
    %v1626 = vld [vmem:[#allocation4 + $0xa80] sm:$0xff]
    %v1627 = vld [vmem:[#allocation4 + $0xa88] sm:$0xff]
    %v1628 = vld [vmem:[#allocation4 + $0xa90] sm:$0xff]
    %v1629 = vld [vmem:[#allocation4 + $0xa98] sm:$0xff]
    %v1630 = vld [vmem:[#allocation4 + $0xaa0] sm:$0xff]
    %v1631 = vld [vmem:[#allocation4 + $0xaa8] sm:$0xff]
    %v1632 = vld [vmem:[#allocation4 + $0xab0] sm:$0xff]
    %v1633 = vld [vmem:[#allocation4 + $0xab8] sm:$0xff]
    %v1634 = vld [vmem:[#allocation4 + $0xac0] sm:$0xff]
    %v1635 = vld [vmem:[#allocation4 + $0xac8] sm:$0xff]
    %v1636 = vld [vmem:[#allocation4 + $0xad0] sm:$0xff]
    %v1637 = vld [vmem:[#allocation4 + $0xad8] sm:$0xff]
    %v1638 = vld [vmem:[#allocation4 + $0xae0] sm:$0xff]
    %v1639 = vld [vmem:[#allocation4 + $0xae8] sm:$0xff]
    %v1640 = vld [vmem:[#allocation4 + $0xaf0] sm:$0xff]
    %v1641 = vld [vmem:[#allocation4 + $0xaf8] sm:$0xff]
    %v1642 = vld [vmem:[#allocation4 + $0xb00] sm:$0xff]
    %v1643 = vld [vmem:[#allocation4 + $0xb08] sm:$0xff]
    %v1644 = vld [vmem:[#allocation4 + $0xb10] sm:$0xff]
    %v1645 = vld [vmem:[#allocation4 + $0xb18] sm:$0xff]
    %v1646 = vld [vmem:[#allocation4 + $0xb20] sm:$0xff]
    %v1647 = vld [vmem:[#allocation4 + $0xb28] sm:$0xff]
    %v1648 = vld [vmem:[#allocation4 + $0xb30] sm:$0xff]
    %v1649 = vld [vmem:[#allocation4 + $0xb38] sm:$0xff]
    %v1650 = vld [vmem:[#allocation4 + $0xb40] sm:$0xff]
    %v1651 = vld [vmem:[#allocation4 + $0xb48] sm:$0xff]
    %v1652 = vld [vmem:[#allocation4 + $0xb50] sm:$0xff]
    %v1653 = vld [vmem:[#allocation4 + $0xb58] sm:$0xff]
    %v1654 = vld [vmem:[#allocation4 + $0xb60] sm:$0xff]
    %v1655 = vld [vmem:[#allocation4 + $0xb68] sm:$0xff]
    %v1656 = vld [vmem:[#allocation4 + $0xb70] sm:$0xff]
    %v1657 = vld [vmem:[#allocation4 + $0xb78] sm:$0xff]
    %v1658 = vld [vmem:[#allocation4 + $0xb80] sm:$0xff]
    %v1659 = vld [vmem:[#allocation4 + $0xb88] sm:$0xff]
    %v1660 = vld [vmem:[#allocation4 + $0xb90] sm:$0xff]
    %v1661 = vld [vmem:[#allocation4 + $0xb98] sm:$0xff]
    %v1662 = vld [vmem:[#allocation4 + $0xba0] sm:$0xff]
    %v1663 = vld [vmem:[#allocation4 + $0xba8] sm:$0xff]
    %v1664 = vld [vmem:[#allocation4 + $0xbb0] sm:$0xff]
    %v1665 = vld [vmem:[#allocation4 + $0xbb8] sm:$0xff]
    %v1666 = vld [vmem:[#allocation4 + $0xbc0] sm:$0xff]
    %v1667 = vld [vmem:[#allocation4 + $0xbc8] sm:$0xff]
    %v1668 = vld [vmem:[#allocation4 + $0xbd0] sm:$0xff]
    %v1669 = vld [vmem:[#allocation4 + $0xbd8] sm:$0xff]
    %v1670 = vld [vmem:[#allocation4 + $0xbe0] sm:$0xff]
    %v1671 = vld [vmem:[#allocation4 + $0xbe8] sm:$0xff]
    %v1672 = vld [vmem:[#allocation4 + $0xbf0] sm:$0xff]
    %v1673 = vld [vmem:[#allocation4 + $0xbf8] sm:$0xff]
    %1674 = vmatprep.subr.mxu0 %v1579
    %1675 = vmatpush1.msra.mxu0 %v1578
    %1676 = vmatprep.subr.mxu0 %v1585
    %1677 = vmatpush1.msra.mxu0 %v1584
    %1678 = vmatprep.subr.mxu0 %v1591
    %1679 = vmatpush1.msra.mxu0 %v1590
    %1680 = vmatprep.subr.mxu0 %v1597
    %1681 = vmatpush1.msra.mxu0 %v1596
    %1682 = vmatprep.subr.mxu0 %v1603
    %1683 = vmatpush1.msra.mxu0 %v1602
    %1684 = vmatprep.subr.mxu0 %v1609
    %1685 = vmatpush1.msra.mxu0 %v1608
    %1686 = vmatprep.subr.mxu0 %v1615
    %1687 = vmatpush1.msra.mxu0 %v1614
    %1688 = vmatprep.subr.mxu0 %v1621
    %1689 = vmatpush1.msra.mxu0 %v1620
    %1690 = vmatprep.subr.mxu0 %v1627
    %1691 = vmatpush1.msra.mxu0 %v1626
    %1692 = vmatprep.subr.mxu0 %v1633
    %1693 = vmatpush1.msra.mxu0 %v1632
    %1694 = vmatprep.subr.mxu0 %v1639
    %1695 = vmatpush1.msra.mxu0 %v1638
    %1696 = vmatprep.subr.mxu0 %v1645
    %1697 = vmatpush1.msra.mxu0 %v1644
    %1698 = vmatprep.subr.mxu0 %v1651
    %1699 = vmatpush1.msra.mxu0 %v1650
    %1700 = vmatprep.subr.mxu0 %v1657
    %1701 = vmatpush1.msra.mxu0 %v1656
    %1702 = vmatprep.subr.mxu0 %v1663
    %1703 = vmatpush1.msra.mxu0 %v1662
    %1704 = vmatprep.subr.mxu0 %v1669
    %1705 = vmatpush1.msra.mxu0 %v1668
    %1706 = vmatprep.subr.mxu0 0.0
    %1707 = vmatpush1.msra.mxu0 0.0
    %1708 = vmatprep.subr.mxu0 0.0
    %1709 = vmatpush1.msra.mxu0 0.0
    %1710 = vmatprep.subr.mxu0 0.0
    %1711 = vmatpush1.msra.mxu0 0.0
    %1712 = vmatprep.subr.mxu0 0.0
    %1713 = vmatpush1.msra.mxu0 0.0
    %1714 = vmatprep.subr.mxu0 0.0
    %1715 = vmatpush1.msra.mxu0 0.0
    %1716 = vmatprep.subr.mxu0 0.0
    %1717 = vmatpush1.msra.mxu0 0.0
    %1718 = vmatprep.subr.mxu0 0.0
    %1719 = vmatpush1.msra.mxu0 0.0
    %1720 = vmatprep.subr.mxu0 0.0
    %1721 = vmatpush1.msra.mxu0 0.0
    %1722 = vmatprep.subr.mxu0 0.0
    %1723 = vmatpush1.msra.mxu0 0.0
    %1724 = vmatprep.subr.mxu0 0.0
    %1725 = vmatpush1.msra.mxu0 0.0
    %1726 = vmatprep.subr.mxu0 0.0
    %1727 = vmatpush1.msra.mxu0 0.0
    %1728 = vmatprep.subr.mxu0 0.0
    %1729 = vmatpush1.msra.mxu0 0.0
    %1730 = vmatprep.subr.mxu0 0.0
    %1731 = vmatpush1.msra.mxu0 0.0
    %1732 = vmatprep.subr.mxu0 0.0
    %1733 = vmatpush1.msra.mxu0 0.0
    %1734 = vmatprep.subr.mxu0 0.0
    %1735 = vmatpush1.msra.mxu0 0.0
    %1736 = vmatprep.subr.mxu0 0.0
    %1737 = vmatpush1.msra.mxu0 0.0
    %1738 = vmatprep.mubr.f32.mxu0 0.0
    %1739 = vmatmul.mubr.f32.gmra.mrb[0].mxu0 %v1574
    %v1740 = vpop.f32.mrb[0].mxu0
    %v1741 = vadd.f32 0.0, %v1740
    %v1742 = vpop.f32.mrb[0].mxu0
    %v1743 = vadd.f32 0.0, %v1742
    %1744 = vmatprep.mubr.f32.mxu0 0.0
    %1745 = vmatmul.mubr.f32.gmra.mrb[0].mxu0 %v1575
    %v1746 = vpop.f32.mrb[0].mxu0
    %v1747 = vadd.f32 0.0, %v1746
    %v1748 = vpop.f32.mrb[0].mxu0
    %v1749 = vadd.f32 0.0, %v1748
    %1750 = vmatprep.mubr.f32.mxu0 0.0
    %1751 = vmatmul.mubr.f32.gmra.mrb[0].mxu0 %v1576
    %v1752 = vpop.f32.mrb[0].mxu0
    %v1753 = vadd.f32 0.0, %v1752
    %v1754 = vpop.f32.mrb[0].mxu0
    %v1755 = vadd.f32 0.0, %v1754
    %1756 = vmatprep.mubr.f32.mxu0 0.0
    %1757 = vmatmul.mubr.f32.gmra.mrb[0].mxu0 %v1577
    %v1758 = vpop.f32.mrb[0].mxu0
    %v1759 = vadd.f32 0.0, %v1758
    %v1760 = vpop.f32.mrb[0].mxu0
    %v1761 = vadd.f32 0.0, %v1760
    %1762 = vdwg.mxu0
    %1763 = vmatprep.subr.mxu0 %v1581
    %1764 = vmatpush1.msra.mxu0 %v1580
    %1765 = vmatprep.subr.mxu0 %v1587
    %1766 = vmatpush1.msra.mxu0 %v1586
    %1767 = vmatprep.subr.mxu0 %v1593
    %1768 = vmatpush1.msra.mxu0 %v1592
    %1769 = vmatprep.subr.mxu0 %v1599
    %1770 = vmatpush1.msra.mxu0 %v1598
    %1771 = vmatprep.subr.mxu0 %v1605
    %1772 = vmatpush1.msra.mxu0 %v1604
    %1773 = vmatprep.subr.mxu0 %v1611
    %1774 = vmatpush1.msra.mxu0 %v1610
    %1775 = vmatprep.subr.mxu0 %v1617
    %1776 = vmatpush1.msra.mxu0 %v1616
    %1777 = vmatprep.subr.mxu0 %v1623
    %1778 = vmatpush1.msra.mxu0 %v1622
    %1779 = vmatprep.subr.mxu0 %v1629
    %1780 = vmatpush1.msra.mxu0 %v1628
    %1781 = vmatprep.subr.mxu0 %v1635
    %1782 = vmatpush1.msra.mxu0 %v1634
    %1783 = vmatprep.subr.mxu0 %v1641
    %1784 = vmatpush1.msra.mxu0 %v1640
    %1785 = vmatprep.subr.mxu0 %v1647
    %1786 = vmatpush1.msra.mxu0 %v1646
    %1787 = vmatprep.subr.mxu0 %v1653
    %1788 = vmatpush1.msra.mxu0 %v1652
    %1789 = vmatprep.subr.mxu0 %v1659
    %1790 = vmatpush1.msra.mxu0 %v1658
    %1791 = vmatprep.subr.mxu0 %v1665
    %1792 = vmatpush1.msra.mxu0 %v1664
    %1793 = vmatprep.subr.mxu0 %v1671
    %1794 = vmatpush1.msra.mxu0 %v1670
    %1795 = vmatprep.subr.mxu0 0.0
    %1796 = vmatpush1.msra.mxu0 0.0
    %1797 = vmatprep.subr.mxu0 0.0
    %1798 = vmatpush1.msra.mxu0 0.0
    %1799 = vmatprep.subr.mxu0 0.0
    %1800 = vmatpush1.msra.mxu0 0.0
    %1801 = vmatprep.subr.mxu0 0.0
    %1802 = vmatpush1.msra.mxu0 0.0
    %1803 = vmatprep.subr.mxu0 0.0
    %1804 = vmatpush1.msra.mxu0 0.0
    %1805 = vmatprep.subr.mxu0 0.0
    %1806 = vmatpush1.msra.mxu0 0.0
    %1807 = vmatprep.subr.mxu0 0.0
    %1808 = vmatpush1.msra.mxu0 0.0
    %1809 = vmatprep.subr.mxu0 0.0
    %1810 = vmatpush1.msra.mxu0 0.0
    %1811 = vmatprep.subr.mxu0 0.0
    %1812 = vmatpush1.msra.mxu0 0.0
    %1813 = vmatprep.subr.mxu0 0.0
    %1814 = vmatpush1.msra.mxu0 0.0
    %1815 = vmatprep.subr.mxu0 0.0
    %1816 = vmatpush1.msra.mxu0 0.0
    %1817 = vmatprep.subr.mxu0 0.0
    %1818 = vmatpush1.msra.mxu0 0.0
    %1819 = vmatprep.subr.mxu0 0.0
    %1820 = vmatpush1.msra.mxu0 0.0
    %1821 = vmatprep.subr.mxu0 0.0
    %1822 = vmatpush1.msra.mxu0 0.0
    %1823 = vmatprep.subr.mxu0 0.0
    %1824 = vmatpush1.msra.mxu0 0.0
    %1825 = vmatprep.subr.mxu0 0.0
    %1826 = vmatpush1.msra.mxu0 0.0
    %1827 = vmatprep.mubr.f32.mxu0 0.0
    %1828 = vmatmul.mubr.f32.gmra.mrb[0].mxu0 %v1574
    %v1829 = vpop.f32.mrb[0].mxu0
    %v1830 = vadd.f32 0.0, %v1829
    %v1831 = vpop.f32.mrb[0].mxu0
    %v1832 = vadd.f32 0.0, %v1831
    %1833 = vmatprep.mubr.f32.mxu0 0.0
    %1834 = vmatmul.mubr.f32.gmra.mrb[0].mxu0 %v1575
    %v1835 = vpop.f32.mrb[0].mxu0
    %v1836 = vadd.f32 0.0, %v1835
    %v1837 = vpop.f32.mrb[0].mxu0
    %v1838 = vadd.f32 0.0, %v1837
    %1839 = vmatprep.mubr.f32.mxu0 0.0
    %1840 = vmatmul.mubr.f32.gmra.mrb[0].mxu0 %v1576
    %v1841 = vpop.f32.mrb[0].mxu0
    %v1842 = vadd.f32 0.0, %v1841
    %v1843 = vpop.f32.mrb[0].mxu0
    %v1844 = vadd.f32 0.0, %v1843
    %1845 = vmatprep.mubr.f32.mxu0 0.0
    %1846 = vmatmul.mubr.f32.gmra.mrb[0].mxu0 %v1577
    %v1847 = vpop.f32.mrb[0].mxu0
    %v1848 = vadd.f32 0.0, %v1847
    %v1849 = vpop.f32.mrb[0].mxu0
    %v1850 = vadd.f32 0.0, %v1849
    %1851 = vdwg.mxu0
    %1852 = vmatprep.subr.mxu0 %v1583
    %1853 = vmatpush1.msra.mxu0 %v1582
    %1854 = vmatprep.subr.mxu0 %v1589
    %1855 = vmatpush1.msra.mxu0 %v1588
    %1856 = vmatprep.subr.mxu0 %v1595
    %1857 = vmatpush1.msra.mxu0 %v1594
    %1858 = vmatprep.subr.mxu0 %v1601
    %1859 = vmatpush1.msra.mxu0 %v1600
    %1860 = vmatprep.subr.mxu0 %v1607
    %1861 = vmatpush1.msra.mxu0 %v1606
    %1862 = vmatprep.subr.mxu0 %v1613
    %1863 = vmatpush1.msra.mxu0 %v1612
    %1864 = vmatprep.subr.mxu0 %v1619
    %1865 = vmatpush1.msra.mxu0 %v1618
    %1866 = vmatprep.subr.mxu0 %v1625
    %1867 = vmatpush1.msra.mxu0 %v1624
    %1868 = vmatprep.subr.mxu0 %v1631
    %1869 = vmatpush1.msra.mxu0 %v1630
    %1870 = vmatprep.subr.mxu0 %v1637
    %1871 = vmatpush1.msra.mxu0 %v1636
    %1872 = vmatprep.subr.mxu0 %v1643
    %1873 = vmatpush1.msra.mxu0 %v1642
    %1874 = vmatprep.subr.mxu0 %v1649
    %1875 = vmatpush1.msra.mxu0 %v1648
    %1876 = vmatprep.subr.mxu0 %v1655
    %1877 = vmatpush1.msra.mxu0 %v1654
    %1878 = vmatprep.subr.mxu0 %v1661
    %1879 = vmatpush1.msra.mxu0 %v1660
    %1880 = vmatprep.subr.mxu0 %v1667
    %1881 = vmatpush1.msra.mxu0 %v1666
    %1882 = vmatprep.subr.mxu0 %v1673
    %1883 = vmatpush1.msra.mxu0 %v1672
    %1884 = vmatprep.subr.mxu0 0.0
    %1885 = vmatpush1.msra.mxu0 0.0
    %1886 = vmatprep.subr.mxu0 0.0
    %1887 = vmatpush1.msra.mxu0 0.0
    %1888 = vmatprep.subr.mxu0 0.0
    %1889 = vmatpush1.msra.mxu0 0.0
    %1890 = vmatprep.subr.mxu0 0.0
    %1891 = vmatpush1.msra.mxu0 0.0
    %1892 = vmatprep.subr.mxu0 0.0
    %1893 = vmatpush1.msra.mxu0 0.0
    %1894 = vmatprep.subr.mxu0 0.0
    %1895 = vmatpush1.msra.mxu0 0.0
    %1896 = vmatprep.subr.mxu0 0.0
    %1897 = vmatpush1.msra.mxu0 0.0
    %1898 = vmatprep.subr.mxu0 0.0
    %1899 = vmatpush1.msra.mxu0 0.0
    %1900 = vmatprep.subr.mxu0 0.0
    %1901 = vmatpush1.msra.mxu0 0.0
    %1902 = vmatprep.subr.mxu0 0.0
    %1903 = vmatpush1.msra.mxu0 0.0
    %1904 = vmatprep.subr.mxu0 0.0
    %1905 = vmatpush1.msra.mxu0 0.0
    %1906 = vmatprep.subr.mxu0 0.0
    %1907 = vmatpush1.msra.mxu0 0.0
    %1908 = vmatprep.subr.mxu0 0.0
    %1909 = vmatpush1.msra.mxu0 0.0
    %1910 = vmatprep.subr.mxu0 0.0
    %1911 = vmatpush1.msra.mxu0 0.0
    %1912 = vmatprep.subr.mxu0 0.0
    %1913 = vmatpush1.msra.mxu0 0.0
    %1914 = vmatprep.subr.mxu0 0.0
    %1915 = vmatpush1.msra.mxu0 0.0
    %1916 = vmatprep.mubr.f32.mxu0 0.0
    %1917 = vmatmul.mubr.f32.gmra.mrb[0].mxu0 %v1574
    %v1918 = vpop.f32.mrb[0].mxu0
    %v1919 = vadd.f32 0.0, %v1918
    %v1920 = vpop.f32.mrb[0].mxu0
    %v1921 = vadd.f32 0.0, %v1920
    %1922 = vmatprep.mubr.f32.mxu0 0.0
    %1923 = vmatmul.mubr.f32.gmra.mrb[0].mxu0 %v1575
    %v1924 = vpop.f32.mrb[0].mxu0
    %v1925 = vadd.f32 0.0, %v1924
    %v1926 = vpop.f32.mrb[0].mxu0
    %v1927 = vadd.f32 0.0, %v1926
    %1928 = vmatprep.mubr.f32.mxu0 0.0
    %1929 = vmatmul.mubr.f32.gmra.mrb[0].mxu0 %v1576
    %v1930 = vpop.f32.mrb[0].mxu0
    %v1931 = vadd.f32 0.0, %v1930
    %v1932 = vpop.f32.mrb[0].mxu0
    %v1933 = vadd.f32 0.0, %v1932
    %1934 = vmatprep.mubr.f32.mxu0 0.0
    %1935 = vmatmul.mubr.f32.gmra.mrb[0].mxu0 %v1577
    %v1936 = vpop.f32.mrb[0].mxu0
    %v1937 = vadd.f32 0.0, %v1936
    %v1938 = vpop.f32.mrb[0].mxu0
    %v1939 = vadd.f32 0.0, %v1938
    %1940 = vdwg.mxu0
    %v1941 = vld [vmem:[#allocation6 + $0xa0] sm:$0xff]
    %v1942 = vld [vmem:[#allocation6 + $0xa8] sm:$0xff]
    %v1943 = vld [vmem:[#allocation6 + $0xb0] sm:$0xff]
    %v1944 = vld [vmem:[#allocation6 + $0xb8] sm:$0xff]
    %v1945 = vld [vmem:[#allocation6 + $0xc0] sm:$0xff]
    %v1946 = vld [vmem:[#allocation6 + $0xc8] sm:$0xff]
    %v1947 = vld [vmem:[#allocation6 + $0xd0] sm:$0xff]
    %v1948 = vld [vmem:[#allocation6 + $0xd8] sm:$0xff]
    %v1949 = vld [vmem:[#allocation6 + $0xe0] sm:$0xff]
    %v1950 = vld [vmem:[#allocation6 + $0xe8] sm:$0xff]
    %v1951 = vld [vmem:[#allocation2 + $0xf0] sm:$0xff]
    %v1952 = vld [vmem:[#allocation2 + $0xf8] sm:$0xff]
    %v1953 = vld [vmem:[#allocation2 + $0x100] sm:$0xff]
    %v1954 = vld [vmem:[#allocation2 + $0x108] sm:$0xff]
    %v1955 = vld [vmem:[#allocation2 + $0x110] sm:$0xff]
    %v1957 = vsel %vm1262, %v1951, 0
    %v1960 = vsel %vm1262, %v1952, 0
    %v1963 = vsel %vm1262, %v1953, 0
    %v1966 = vsel %vm1262, %v1954, 0
    %v1969 = vsel %vm1262, %v1955, 0
    %1971 = vmatprep.subr.mxu0 %v1743
    %1972 = vmatpush1.msra.mxu0 %v1741
    %1973 = vmatprep.subr.mxu0 %v1749
    %1974 = vmatpush1.msra.mxu0 %v1747
    %1975 = vmatprep.subr.mxu0 %v1755
    %1976 = vmatpush1.msra.mxu0 %v1753
    %1977 = vmatprep.subr.mxu0 %v1761
    %1978 = vmatpush1.msra.mxu0 %v1759
    %1979 = vmatprep.subr.mxu0 0.0
    %1980 = vmatpush1.msra.mxu0 0.0
    %1981 = vmatprep.subr.mxu0 0.0
    %1982 = vmatpush1.msra.mxu0 0.0
    %1983 = vmatprep.subr.mxu0 0.0
    %1984 = vmatpush1.msra.mxu0 0.0
    %1985 = vmatprep.subr.mxu0 0.0
    %1986 = vmatpush1.msra.mxu0 0.0
    %1987 = vmatprep.subr.mxu0 0.0
    %1988 = vmatpush1.msra.mxu0 0.0
    %1989 = vmatprep.subr.mxu0 0.0
    %1990 = vmatpush1.msra.mxu0 0.0
    %1991 = vmatprep.subr.mxu0 0.0
    %1992 = vmatpush1.msra.mxu0 0.0
    %1993 = vmatprep.subr.mxu0 0.0
    %1994 = vmatpush1.msra.mxu0 0.0
    %1995 = vmatprep.subr.mxu0 0.0
    %1996 = vmatpush1.msra.mxu0 0.0
    %1997 = vmatprep.subr.mxu0 0.0
    %1998 = vmatpush1.msra.mxu0 0.0
    %1999 = vmatprep.subr.mxu0 0.0
    %2000 = vmatpush1.msra.mxu0 0.0
    %2001 = vmatprep.subr.mxu0 0.0
    %2002 = vmatpush1.msra.mxu0 0.0
    %2003 = vmatprep.subr.mxu0 0.0
    %2004 = vmatpush1.msra.mxu0 0.0
    %2005 = vmatprep.subr.mxu0 0.0
    %2006 = vmatpush1.msra.mxu0 0.0
    %2007 = vmatprep.subr.mxu0 0.0
    %2008 = vmatpush1.msra.mxu0 0.0
    %2009 = vmatprep.subr.mxu0 0.0
    %2010 = vmatpush1.msra.mxu0 0.0
    %2011 = vmatprep.subr.mxu0 0.0
    %2012 = vmatpush1.msra.mxu0 0.0
    %2013 = vmatprep.subr.mxu0 0.0
    %2014 = vmatpush1.msra.mxu0 0.0
    %2015 = vmatprep.subr.mxu0 0.0
    %2016 = vmatpush1.msra.mxu0 0.0
    %2017 = vmatprep.subr.mxu0 0.0
    %2018 = vmatpush1.msra.mxu0 0.0
    %2019 = vmatprep.subr.mxu0 0.0
    %2020 = vmatpush1.msra.mxu0 0.0
    %2021 = vmatprep.subr.mxu0 0.0
    %2022 = vmatpush1.msra.mxu0 0.0
    %2023 = vmatprep.subr.mxu0 0.0
    %2024 = vmatpush1.msra.mxu0 0.0
    %2025 = vmatprep.subr.mxu0 0.0
    %2026 = vmatpush1.msra.mxu0 0.0
    %2027 = vmatprep.subr.mxu0 0.0
    %2028 = vmatpush1.msra.mxu0 0.0
    %2029 = vmatprep.subr.mxu0 0.0
    %2030 = vmatpush1.msra.mxu0 0.0
    %2031 = vmatprep.subr.mxu0 0.0
    %2032 = vmatpush1.msra.mxu0 0.0
    %2033 = vmatprep.subr.mxu0 0.0
    %2034 = vmatpush1.msra.mxu0 0.0
    %2035 = vmatprep.mubr.f32.mxu0 0.0
    %2036 = vmatmul.mubr.f32.gmra.mrb[0].mxu0 %v1957
    %v2037 = vpop.f32.mrb[0].mxu0
    %v2038 = vadd.f32 0.0, %v2037
    %v2039 = vpop.f32.mrb[0].mxu0
    %v2040 = vadd.f32 0.0, %v2039
    %2041 = vmatprep.mubr.f32.mxu0 0.0
    %2042 = vmatmul.mubr.f32.gmra.mrb[0].mxu0 %v1960
    %v2043 = vpop.f32.mrb[0].mxu0
    %v2044 = vadd.f32 0.0, %v2043
    %v2045 = vpop.f32.mrb[0].mxu0
    %v2046 = vadd.f32 0.0, %v2045
    %2047 = vmatprep.mubr.f32.mxu0 0.0
    %2048 = vmatmul.mubr.f32.gmra.mrb[0].mxu0 %v1963
    %v2049 = vpop.f32.mrb[0].mxu0
    %v2050 = vadd.f32 0.0, %v2049
    %v2051 = vpop.f32.mrb[0].mxu0
    %v2052 = vadd.f32 0.0, %v2051
    %2053 = vmatprep.mubr.f32.mxu0 0.0
    %2054 = vmatmul.mubr.f32.gmra.mrb[0].mxu0 %v1966
    %v2055 = vpop.f32.mrb[0].mxu0
    %v2056 = vadd.f32 0.0, %v2055
    %v2057 = vpop.f32.mrb[0].mxu0
    %v2058 = vadd.f32 0.0, %v2057
    %2059 = vmatprep.mubr.f32.mxu0 0.0
    %2060 = vmatmul.mubr.f32.gmra.mrb[0].mxu0 %v1969
    %v2061 = vpop.f32.mrb[0].mxu0
    %v2062 = vadd.f32 0.0, %v2061
    %v2063 = vpop.f32.mrb[0].mxu0
    %v2064 = vadd.f32 0.0, %v2063
    %2065 = vdwg.mxu0
    %v2066 = vadd.f32 %v1941, %v2038
    %v2067 = vadd.f32 %v1942, %v2040
    %v2068 = vadd.f32 %v1943, %v2044
    %v2069 = vadd.f32 %v1944, %v2046
    %v2070 = vadd.f32 %v1945, %v2050
    %v2071 = vadd.f32 %v1946, %v2052
    %v2072 = vadd.f32 %v1947, %v2056
    %v2073 = vadd.f32 %v1948, %v2058
    %v2074 = vadd.f32 %v1949, %v2062
    %v2075 = vadd.f32 %v1950, %v2064
    %v2076 = vld [vmem:[#allocation2 + $0x118] sm:$0xff]
    %v2077 = vld [vmem:[#allocation2 + $0x120] sm:$0xff]
    %v2078 = vld [vmem:[#allocation2 + $0x128] sm:$0xff]
    %v2079 = vld [vmem:[#allocation2 + $0x130] sm:$0xff]
    %v2080 = vld [vmem:[#allocation2 + $0x138] sm:$0xff]
    %v2082 = vsel %vm1262, %v2076, 0
    %v2085 = vsel %vm1262, %v2077, 0
    %v2088 = vsel %vm1262, %v2078, 0
    %v2091 = vsel %vm1262, %v2079, 0
    %v2094 = vsel %vm1262, %v2080, 0
    %2096 = vmatprep.subr.mxu0 %v1832
    %2097 = vmatpush1.msra.mxu0 %v1830
    %2098 = vmatprep.subr.mxu0 %v1838
    %2099 = vmatpush1.msra.mxu0 %v1836
    %2100 = vmatprep.subr.mxu0 %v1844
    %2101 = vmatpush1.msra.mxu0 %v1842
    %2102 = vmatprep.subr.mxu0 %v1850
    %2103 = vmatpush1.msra.mxu0 %v1848
    %2104 = vmatprep.subr.mxu0 0.0
    %2105 = vmatpush1.msra.mxu0 0.0
    %2106 = vmatprep.subr.mxu0 0.0
    %2107 = vmatpush1.msra.mxu0 0.0
    %2108 = vmatprep.subr.mxu0 0.0
    %2109 = vmatpush1.msra.mxu0 0.0
    %2110 = vmatprep.subr.mxu0 0.0
    %2111 = vmatpush1.msra.mxu0 0.0
    %2112 = vmatprep.subr.mxu0 0.0
    %2113 = vmatpush1.msra.mxu0 0.0
    %2114 = vmatprep.subr.mxu0 0.0
    %2115 = vmatpush1.msra.mxu0 0.0
    %2116 = vmatprep.subr.mxu0 0.0
    %2117 = vmatpush1.msra.mxu0 0.0
    %2118 = vmatprep.subr.mxu0 0.0
    %2119 = vmatpush1.msra.mxu0 0.0
    %2120 = vmatprep.subr.mxu0 0.0
    %2121 = vmatpush1.msra.mxu0 0.0
    %2122 = vmatprep.subr.mxu0 0.0
    %2123 = vmatpush1.msra.mxu0 0.0
    %2124 = vmatprep.subr.mxu0 0.0
    %2125 = vmatpush1.msra.mxu0 0.0
    %2126 = vmatprep.subr.mxu0 0.0
    %2127 = vmatpush1.msra.mxu0 0.0
    %2128 = vmatprep.subr.mxu0 0.0
    %2129 = vmatpush1.msra.mxu0 0.0
    %2130 = vmatprep.subr.mxu0 0.0
    %2131 = vmatpush1.msra.mxu0 0.0
    %2132 = vmatprep.subr.mxu0 0.0
    %2133 = vmatpush1.msra.mxu0 0.0
    %2134 = vmatprep.subr.mxu0 0.0
    %2135 = vmatpush1.msra.mxu0 0.0
    %2136 = vmatprep.subr.mxu0 0.0
    %2137 = vmatpush1.msra.mxu0 0.0
    %2138 = vmatprep.subr.mxu0 0.0
    %2139 = vmatpush1.msra.mxu0 0.0
    %2140 = vmatprep.subr.mxu0 0.0
    %2141 = vmatpush1.msra.mxu0 0.0
    %2142 = vmatprep.subr.mxu0 0.0
    %2143 = vmatpush1.msra.mxu0 0.0
    %2144 = vmatprep.subr.mxu0 0.0
    %2145 = vmatpush1.msra.mxu0 0.0
    %2146 = vmatprep.subr.mxu0 0.0
    %2147 = vmatpush1.msra.mxu0 0.0
    %2148 = vmatprep.subr.mxu0 0.0
    %2149 = vmatpush1.msra.mxu0 0.0
    %2150 = vmatprep.subr.mxu0 0.0
    %2151 = vmatpush1.msra.mxu0 0.0
    %2152 = vmatprep.subr.mxu0 0.0
    %2153 = vmatpush1.msra.mxu0 0.0
    %2154 = vmatprep.subr.mxu0 0.0
    %2155 = vmatpush1.msra.mxu0 0.0
    %2156 = vmatprep.subr.mxu0 0.0
    %2157 = vmatpush1.msra.mxu0 0.0
    %2158 = vmatprep.subr.mxu0 0.0
    %2159 = vmatpush1.msra.mxu0 0.0
    %2160 = vmatprep.mubr.f32.mxu0 0.0
    %2161 = vmatmul.mubr.f32.gmra.mrb[0].mxu0 %v2082
    %v2162 = vpop.f32.mrb[0].mxu0
    %v2163 = vadd.f32 0.0, %v2162
    %v2164 = vpop.f32.mrb[0].mxu0
    %v2165 = vadd.f32 0.0, %v2164
    %2166 = vmatprep.mubr.f32.mxu0 0.0
    %2167 = vmatmul.mubr.f32.gmra.mrb[0].mxu0 %v2085
    %v2168 = vpop.f32.mrb[0].mxu0
    %v2169 = vadd.f32 0.0, %v2168
    %v2170 = vpop.f32.mrb[0].mxu0
    %v2171 = vadd.f32 0.0, %v2170
    %2172 = vmatprep.mubr.f32.mxu0 0.0
    %2173 = vmatmul.mubr.f32.gmra.mrb[0].mxu0 %v2088
    %v2174 = vpop.f32.mrb[0].mxu0
    %v2175 = vadd.f32 0.0, %v2174
    %v2176 = vpop.f32.mrb[0].mxu0
    %v2177 = vadd.f32 0.0, %v2176
    %2178 = vmatprep.mubr.f32.mxu0 0.0
    %2179 = vmatmul.mubr.f32.gmra.mrb[0].mxu0 %v2091
    %v2180 = vpop.f32.mrb[0].mxu0
    %v2181 = vadd.f32 0.0, %v2180
    %v2182 = vpop.f32.mrb[0].mxu0
    %v2183 = vadd.f32 0.0, %v2182
    %2184 = vmatprep.mubr.f32.mxu0 0.0
    %2185 = vmatmul.mubr.f32.gmra.mrb[0].mxu0 %v2094
    %v2186 = vpop.f32.mrb[0].mxu0
    %v2187 = vadd.f32 0.0, %v2186
    %v2188 = vpop.f32.mrb[0].mxu0
    %v2189 = vadd.f32 0.0, %v2188
    %2190 = vdwg.mxu0
    %v2191 = vadd.f32 %v2066, %v2163
    %v2192 = vadd.f32 %v2067, %v2165
    %v2193 = vadd.f32 %v2068, %v2169
    %v2194 = vadd.f32 %v2069, %v2171
    %v2195 = vadd.f32 %v2070, %v2175
    %v2196 = vadd.f32 %v2071, %v2177
    %v2197 = vadd.f32 %v2072, %v2181
    %v2198 = vadd.f32 %v2073, %v2183
    %v2199 = vadd.f32 %v2074, %v2187
    %v2200 = vadd.f32 %v2075, %v2189
    %v2201 = vld [vmem:[#allocation2 + $0x140] sm:$0xff]
    %v2202 = vld [vmem:[#allocation2 + $0x148] sm:$0xff]
    %v2203 = vld [vmem:[#allocation2 + $0x150] sm:$0xff]
    %v2204 = vld [vmem:[#allocation2 + $0x158] sm:$0xff]
    %v2205 = vld [vmem:[#allocation2 + $0x160] sm:$0xff]
    %v2207 = vsel %vm1262, %v2201, 0
    %v2210 = vsel %vm1262, %v2202, 0
    %v2213 = vsel %vm1262, %v2203, 0
    %v2216 = vsel %vm1262, %v2204, 0
    %v2219 = vsel %vm1262, %v2205, 0
    %2221 = vmatprep.subr.mxu0 %v1921
    %2222 = vmatpush1.msra.mxu0 %v1919
    %2223 = vmatprep.subr.mxu0 %v1927
    %2224 = vmatpush1.msra.mxu0 %v1925
    %2225 = vmatprep.subr.mxu0 %v1933
    %2226 = vmatpush1.msra.mxu0 %v1931
    %2227 = vmatprep.subr.mxu0 %v1939
    %2228 = vmatpush1.msra.mxu0 %v1937
    %2229 = vmatprep.subr.mxu0 0.0
    %2230 = vmatpush1.msra.mxu0 0.0
    %2231 = vmatprep.subr.mxu0 0.0
    %2232 = vmatpush1.msra.mxu0 0.0
    %2233 = vmatprep.subr.mxu0 0.0
    %2234 = vmatpush1.msra.mxu0 0.0
    %2235 = vmatprep.subr.mxu0 0.0
    %2236 = vmatpush1.msra.mxu0 0.0
    %2237 = vmatprep.subr.mxu0 0.0
    %2238 = vmatpush1.msra.mxu0 0.0
    %2239 = vmatprep.subr.mxu0 0.0
    %2240 = vmatpush1.msra.mxu0 0.0
    %2241 = vmatprep.subr.mxu0 0.0
    %2242 = vmatpush1.msra.mxu0 0.0
    %2243 = vmatprep.subr.mxu0 0.0
    %2244 = vmatpush1.msra.mxu0 0.0
    %2245 = vmatprep.subr.mxu0 0.0
    %2246 = vmatpush1.msra.mxu0 0.0
    %2247 = vmatprep.subr.mxu0 0.0
    %2248 = vmatpush1.msra.mxu0 0.0
    %2249 = vmatprep.subr.mxu0 0.0
    %2250 = vmatpush1.msra.mxu0 0.0
    %2251 = vmatprep.subr.mxu0 0.0
    %2252 = vmatpush1.msra.mxu0 0.0
    %2253 = vmatprep.subr.mxu0 0.0
    %2254 = vmatpush1.msra.mxu0 0.0
    %2255 = vmatprep.subr.mxu0 0.0
    %2256 = vmatpush1.msra.mxu0 0.0
    %2257 = vmatprep.subr.mxu0 0.0
    %2258 = vmatpush1.msra.mxu0 0.0
    %2259 = vmatprep.subr.mxu0 0.0
    %2260 = vmatpush1.msra.mxu0 0.0
    %2261 = vmatprep.subr.mxu0 0.0
    %2262 = vmatpush1.msra.mxu0 0.0
    %2263 = vmatprep.subr.mxu0 0.0
    %2264 = vmatpush1.msra.mxu0 0.0
    %2265 = vmatprep.subr.mxu0 0.0
    %2266 = vmatpush1.msra.mxu0 0.0
    %2267 = vmatprep.subr.mxu0 0.0
    %2268 = vmatpush1.msra.mxu0 0.0
    %2269 = vmatprep.subr.mxu0 0.0
    %2270 = vmatpush1.msra.mxu0 0.0
    %2271 = vmatprep.subr.mxu0 0.0
    %2272 = vmatpush1.msra.mxu0 0.0
    %2273 = vmatprep.subr.mxu0 0.0
    %2274 = vmatpush1.msra.mxu0 0.0
    %2275 = vmatprep.subr.mxu0 0.0
    %2276 = vmatpush1.msra.mxu0 0.0
    %2277 = vmatprep.subr.mxu0 0.0
    %2278 = vmatpush1.msra.mxu0 0.0
    %2279 = vmatprep.subr.mxu0 0.0
    %2280 = vmatpush1.msra.mxu0 0.0
    %2281 = vmatprep.subr.mxu0 0.0
    %2282 = vmatpush1.msra.mxu0 0.0
    %2283 = vmatprep.subr.mxu0 0.0
    %2284 = vmatpush1.msra.mxu0 0.0
    %2285 = vmatprep.mubr.f32.mxu0 0.0
    %2286 = vmatmul.mubr.f32.gmra.mrb[0].mxu0 %v2207
    %v2287 = vpop.f32.mrb[0].mxu0
    %v2288 = vadd.f32 0.0, %v2287
    %v2289 = vpop.f32.mrb[0].mxu0
    %v2290 = vadd.f32 0.0, %v2289
    %2291 = vmatprep.mubr.f32.mxu0 0.0
    %2292 = vmatmul.mubr.f32.gmra.mrb[0].mxu0 %v2210
    %v2293 = vpop.f32.mrb[0].mxu0
    %v2294 = vadd.f32 0.0, %v2293
    %v2295 = vpop.f32.mrb[0].mxu0
    %v2296 = vadd.f32 0.0, %v2295
    %2297 = vmatprep.mubr.f32.mxu0 0.0
    %2298 = vmatmul.mubr.f32.gmra.mrb[0].mxu0 %v2213
    %v2299 = vpop.f32.mrb[0].mxu0
    %v2300 = vadd.f32 0.0, %v2299
    %v2301 = vpop.f32.mrb[0].mxu0
    %v2302 = vadd.f32 0.0, %v2301
    %2303 = vmatprep.mubr.f32.mxu0 0.0
    %2304 = vmatmul.mubr.f32.gmra.mrb[0].mxu0 %v2216
    %v2305 = vpop.f32.mrb[0].mxu0
    %v2306 = vadd.f32 0.0, %v2305
    %v2307 = vpop.f32.mrb[0].mxu0
    %v2308 = vadd.f32 0.0, %v2307
    %2309 = vmatprep.mubr.f32.mxu0 0.0
    %2310 = vmatmul.mubr.f32.gmra.mrb[0].mxu0 %v2219
    %v2311 = vpop.f32.mrb[0].mxu0
    %v2312 = vadd.f32 0.0, %v2311
    %v2313 = vpop.f32.mrb[0].mxu0
    %v2314 = vadd.f32 0.0, %v2313
    %2315 = vdwg.mxu0
    %v2316 = vadd.f32 %v2191, %v2288
    %v2317 = vadd.f32 %v2192, %v2290
    %v2318 = vadd.f32 %v2193, %v2294
    %v2319 = vadd.f32 %v2194, %v2296
    %v2320 = vadd.f32 %v2195, %v2300
    %v2321 = vadd.f32 %v2196, %v2302
    %v2322 = vadd.f32 %v2197, %v2306
    %v2323 = vadd.f32 %v2198, %v2308
    %v2324 = vadd.f32 %v2199, %v2312
    %v2325 = vadd.f32 %v2200, %v2314
    %v2326 = vmax.f32 %v2316, 0.0
    %v2327 = vmax.f32 %v2317, 0.0
    %v2328 = vmax.f32 %v2318, 0.0
    %v2329 = vmax.f32 %v2319, 0.0
    %v2330 = vmax.f32 %v2320, 0.0
    %v2331 = vmax.f32 %v2321, 0.0
    %v2332 = vmax.f32 %v2322, 0.0
    %v2333 = vmax.f32 %v2323, 0.0
    %v2334 = vmax.f32 %v2324, 0.0
    %v2335 = vmax.f32 %v2325, 0.0
    %v2336 = vld [vmem:[#allocation4 + $0xc00] sm:$0xff]
    %v2337 = vld [vmem:[#allocation4 + $0xc08] sm:$0xff]
    %v2338 = vld [vmem:[#allocation4 + $0xc10] sm:$0xff]
    %v2339 = vld [vmem:[#allocation4 + $0xc18] sm:$0xff]
    %v2340 = vld [vmem:[#allocation4 + $0xc20] sm:$0xff]
    %v2341 = vld [vmem:[#allocation4 + $0xc28] sm:$0xff]
    %v2342 = vld [vmem:[#allocation4 + $0xc30] sm:$0xff]
    %v2343 = vld [vmem:[#allocation4 + $0xc38] sm:$0xff]
    %v2344 = vld [vmem:[#allocation4 + $0xc40] sm:$0xff]
    %v2345 = vld [vmem:[#allocation4 + $0xc48] sm:$0xff]
    %v2346 = vld [vmem:[#allocation4 + $0xc50] sm:$0xff]
    %v2347 = vld [vmem:[#allocation4 + $0xc58] sm:$0xff]
    %v2348 = vld [vmem:[#allocation4 + $0xc60] sm:$0xff]
    %v2349 = vld [vmem:[#allocation4 + $0xc68] sm:$0xff]
    %v2350 = vld [vmem:[#allocation4 + $0xc70] sm:$0xff]
    %v2351 = vld [vmem:[#allocation4 + $0xc78] sm:$0xff]
    %v2352 = vld [vmem:[#allocation4 + $0xc80] sm:$0xff]
    %v2353 = vld [vmem:[#allocation4 + $0xc88] sm:$0xff]
    %v2354 = vld [vmem:[#allocation4 + $0xc90] sm:$0xff]
    %v2355 = vld [vmem:[#allocation4 + $0xc98] sm:$0xff]
    %v2356 = vld [vmem:[#allocation4 + $0xca0] sm:$0xff]
    %v2357 = vld [vmem:[#allocation4 + $0xca8] sm:$0xff]
    %v2358 = vld [vmem:[#allocation4 + $0xcb0] sm:$0xff]
    %v2359 = vld [vmem:[#allocation4 + $0xcb8] sm:$0xff]
    %v2360 = vld [vmem:[#allocation4 + $0xcc0] sm:$0xff]
    %v2361 = vld [vmem:[#allocation4 + $0xcc8] sm:$0xff]
    %v2362 = vld [vmem:[#allocation4 + $0xcd0] sm:$0xff]
    %v2363 = vld [vmem:[#allocation4 + $0xcd8] sm:$0xff]
    %v2364 = vld [vmem:[#allocation4 + $0xce0] sm:$0xff]
    %v2365 = vld [vmem:[#allocation4 + $0xce8] sm:$0xff]
    %v2366 = vld [vmem:[#allocation4 + $0xcf0] sm:$0xff]
    %v2367 = vld [vmem:[#allocation4 + $0xcf8] sm:$0xff]
    %v2368 = vld [vmem:[#allocation4 + $0xd00] sm:$0xff]
    %v2369 = vld [vmem:[#allocation4 + $0xd08] sm:$0xff]
    %v2370 = vld [vmem:[#allocation4 + $0xd10] sm:$0xff]
    %v2371 = vld [vmem:[#allocation4 + $0xd18] sm:$0xff]
    %v2372 = vld [vmem:[#allocation4 + $0xd20] sm:$0xff]
    %v2373 = vld [vmem:[#allocation4 + $0xd28] sm:$0xff]
    %v2374 = vld [vmem:[#allocation4 + $0xd30] sm:$0xff]
    %v2375 = vld [vmem:[#allocation4 + $0xd38] sm:$0xff]
    %v2376 = vld [vmem:[#allocation4 + $0xd40] sm:$0xff]
    %v2377 = vld [vmem:[#allocation4 + $0xd48] sm:$0xff]
    %v2378 = vld [vmem:[#allocation4 + $0xd50] sm:$0xff]
    %v2379 = vld [vmem:[#allocation4 + $0xd58] sm:$0xff]
    %v2380 = vld [vmem:[#allocation4 + $0xd60] sm:$0xff]
    %v2381 = vld [vmem:[#allocation4 + $0xd68] sm:$0xff]
    %v2382 = vld [vmem:[#allocation4 + $0xd70] sm:$0xff]
    %v2383 = vld [vmem:[#allocation4 + $0xd78] sm:$0xff]
    %v2384 = vld [vmem:[#allocation4 + $0xd80] sm:$0xff]
    %v2385 = vld [vmem:[#allocation4 + $0xd88] sm:$0xff]
    %v2386 = vld [vmem:[#allocation4 + $0xd90] sm:$0xff]
    %v2387 = vld [vmem:[#allocation4 + $0xd98] sm:$0xff]
    %v2388 = vld [vmem:[#allocation4 + $0xda0] sm:$0xff]
    %v2389 = vld [vmem:[#allocation4 + $0xda8] sm:$0xff]
    %v2390 = vld [vmem:[#allocation4 + $0xdb0] sm:$0xff]
    %v2391 = vld [vmem:[#allocation4 + $0xdb8] sm:$0xff]
    %v2392 = vld [vmem:[#allocation4 + $0xdc0] sm:$0xff]
    %v2393 = vld [vmem:[#allocation4 + $0xdc8] sm:$0xff]
    %v2394 = vld [vmem:[#allocation4 + $0xdd0] sm:$0xff]
    %v2395 = vld [vmem:[#allocation4 + $0xdd8] sm:$0xff]
    %v2396 = vld [vmem:[#allocation4 + $0xde0] sm:$0xff]
    %v2397 = vld [vmem:[#allocation4 + $0xde8] sm:$0xff]
    %v2398 = vld [vmem:[#allocation4 + $0xdf0] sm:$0xff]
    %v2399 = vld [vmem:[#allocation4 + $0xdf8] sm:$0xff]
    %v2400 = vld [vmem:[#allocation4 + $0xe00] sm:$0xff]
    %v2401 = vld [vmem:[#allocation4 + $0xe08] sm:$0xff]
    %v2402 = vld [vmem:[#allocation4 + $0xe10] sm:$0xff]
    %v2403 = vld [vmem:[#allocation4 + $0xe18] sm:$0xff]
    %v2404 = vld [vmem:[#allocation4 + $0xe20] sm:$0xff]
    %v2405 = vld [vmem:[#allocation4 + $0xe28] sm:$0xff]
    %v2406 = vld [vmem:[#allocation4 + $0xe30] sm:$0xff]
    %v2407 = vld [vmem:[#allocation4 + $0xe38] sm:$0xff]
    %v2408 = vld [vmem:[#allocation4 + $0xe40] sm:$0xff]
    %v2409 = vld [vmem:[#allocation4 + $0xe48] sm:$0xff]
    %v2410 = vld [vmem:[#allocation4 + $0xe50] sm:$0xff]
    %v2411 = vld [vmem:[#allocation4 + $0xe58] sm:$0xff]
    %v2412 = vld [vmem:[#allocation4 + $0xe60] sm:$0xff]
    %v2413 = vld [vmem:[#allocation4 + $0xe68] sm:$0xff]
    %v2414 = vld [vmem:[#allocation4 + $0xe70] sm:$0xff]
    %v2415 = vld [vmem:[#allocation4 + $0xe78] sm:$0xff]
    %v2416 = vld [vmem:[#allocation4 + $0xe80] sm:$0xff]
    %v2417 = vld [vmem:[#allocation4 + $0xe88] sm:$0xff]
    %v2418 = vld [vmem:[#allocation4 + $0xe90] sm:$0xff]
    %v2419 = vld [vmem:[#allocation4 + $0xe98] sm:$0xff]
    %v2420 = vld [vmem:[#allocation4 + $0xea0] sm:$0xff]
    %v2421 = vld [vmem:[#allocation4 + $0xea8] sm:$0xff]
    %v2422 = vld [vmem:[#allocation4 + $0xeb0] sm:$0xff]
    %v2423 = vld [vmem:[#allocation4 + $0xeb8] sm:$0xff]
    %v2424 = vld [vmem:[#allocation4 + $0xec0] sm:$0xff]
    %v2425 = vld [vmem:[#allocation4 + $0xec8] sm:$0xff]
    %v2426 = vld [vmem:[#allocation4 + $0xed0] sm:$0xff]
    %v2427 = vld [vmem:[#allocation4 + $0xed8] sm:$0xff]
    %v2428 = vld [vmem:[#allocation4 + $0xee0] sm:$0xff]
    %v2429 = vld [vmem:[#allocation4 + $0xee8] sm:$0xff]
    %v2430 = vld [vmem:[#allocation4 + $0xef0] sm:$0xff]
    %v2431 = vld [vmem:[#allocation4 + $0xef8] sm:$0xff]
    %v2432 = vld [vmem:[#allocation4 + $0xf00] sm:$0xff]
    %v2433 = vld [vmem:[#allocation4 + $0xf08] sm:$0xff]
    %v2434 = vld [vmem:[#allocation4 + $0xf10] sm:$0xff]
    %v2435 = vld [vmem:[#allocation4 + $0xf18] sm:$0xff]
    %v2436 = vld [vmem:[#allocation4 + $0xf20] sm:$0xff]
    %v2437 = vld [vmem:[#allocation4 + $0xf28] sm:$0xff]
    %v2438 = vld [vmem:[#allocation4 + $0xf30] sm:$0xff]
    %v2439 = vld [vmem:[#allocation4 + $0xf38] sm:$0xff]
    %v2440 = vld [vmem:[#allocation4 + $0xf40] sm:$0xff]
    %v2441 = vld [vmem:[#allocation4 + $0xf48] sm:$0xff]
    %v2442 = vld [vmem:[#allocation4 + $0xf50] sm:$0xff]
    %v2443 = vld [vmem:[#allocation4 + $0xf58] sm:$0xff]
    %v2444 = vld [vmem:[#allocation4 + $0xf60] sm:$0xff]
    %v2445 = vld [vmem:[#allocation4 + $0xf68] sm:$0xff]
    %v2446 = vld [vmem:[#allocation4 + $0xf70] sm:$0xff]
    %v2447 = vld [vmem:[#allocation4 + $0xf78] sm:$0xff]
    %v2448 = vld [vmem:[#allocation4 + $0xf80] sm:$0xff]
    %v2449 = vld [vmem:[#allocation4 + $0xf88] sm:$0xff]
    %v2450 = vld [vmem:[#allocation4 + $0xf90] sm:$0xff]
    %v2451 = vld [vmem:[#allocation4 + $0xf98] sm:$0xff]
    %v2452 = vld [vmem:[#allocation4 + $0xfa0] sm:$0xff]
    %v2453 = vld [vmem:[#allocation4 + $0xfa8] sm:$0xff]
    %v2454 = vld [vmem:[#allocation4 + $0xfb0] sm:$0xff]
    %v2455 = vld [vmem:[#allocation4 + $0xfb8] sm:$0xff]
    %v2456 = vld [vmem:[#allocation4 + $0xfc0] sm:$0xff]
    %v2457 = vld [vmem:[#allocation4 + $0xfc8] sm:$0xff]
    %v2458 = vld [vmem:[#allocation4 + $0xfd0] sm:$0xff]
    %v2459 = vld [vmem:[#allocation4 + $0xfd8] sm:$0xff]
    %v2460 = vld [vmem:[#allocation4 + $0xfe0] sm:$0xff]
    %v2461 = vld [vmem:[#allocation4 + $0xfe8] sm:$0xff]
    %v2462 = vld [vmem:[#allocation4 + $0xff0] sm:$0xff]
    %v2463 = vld [vmem:[#allocation4 + $0xff8] sm:$0xff]
    %v2464 = vld [vmem:[#allocation4 + $0x1000] sm:$0xff]
    %v2465 = vld [vmem:[#allocation4 + $0x1008] sm:$0xff]
    %v2466 = vld [vmem:[#allocation4 + $0x1010] sm:$0xff]
    %v2467 = vld [vmem:[#allocation4 + $0x1018] sm:$0xff]
    %v2468 = vld [vmem:[#allocation4 + $0x1020] sm:$0xff]
    %v2469 = vld [vmem:[#allocation4 + $0x1028] sm:$0xff]
    %v2470 = vld [vmem:[#allocation4 + $0x1030] sm:$0xff]
    %v2471 = vld [vmem:[#allocation4 + $0x1038] sm:$0xff]
    %v2472 = vld [vmem:[#allocation4 + $0x1040] sm:$0xff]
    %v2473 = vld [vmem:[#allocation4 + $0x1048] sm:$0xff]
    %v2474 = vld [vmem:[#allocation4 + $0x1050] sm:$0xff]
    %v2475 = vld [vmem:[#allocation4 + $0x1058] sm:$0xff]
    %v2476 = vld [vmem:[#allocation4 + $0x1060] sm:$0xff]
    %v2477 = vld [vmem:[#allocation4 + $0x1068] sm:$0xff]
    %v2478 = vld [vmem:[#allocation4 + $0x1070] sm:$0xff]
    %v2479 = vld [vmem:[#allocation4 + $0x1078] sm:$0xff]
    %v2480 = vld [vmem:[#allocation4 + $0x1080] sm:$0xff]
    %v2481 = vld [vmem:[#allocation4 + $0x1088] sm:$0xff]
    %v2482 = vld [vmem:[#allocation4 + $0x1090] sm:$0xff]
    %v2483 = vld [vmem:[#allocation4 + $0x1098] sm:$0xff]
    %v2484 = vld [vmem:[#allocation4 + $0x10a0] sm:$0xff]
    %v2485 = vld [vmem:[#allocation4 + $0x10a8] sm:$0xff]
    %v2486 = vld [vmem:[#allocation4 + $0x10b0] sm:$0xff]
    %v2487 = vld [vmem:[#allocation4 + $0x10b8] sm:$0xff]
    %v2488 = vld [vmem:[#allocation4 + $0x10c0] sm:$0xff]
    %v2489 = vld [vmem:[#allocation4 + $0x10c8] sm:$0xff]
    %v2490 = vld [vmem:[#allocation4 + $0x10d0] sm:$0xff]
    %v2491 = vld [vmem:[#allocation4 + $0x10d8] sm:$0xff]
    %v2492 = vld [vmem:[#allocation4 + $0x10e0] sm:$0xff]
    %v2493 = vld [vmem:[#allocation4 + $0x10e8] sm:$0xff]
    %v2494 = vld [vmem:[#allocation4 + $0x10f0] sm:$0xff]
    %v2495 = vld [vmem:[#allocation4 + $0x10f8] sm:$0xff]
    %v2496 = vld [vmem:[#allocation4 + $0x1100] sm:$0xff]
    %v2497 = vld [vmem:[#allocation4 + $0x1108] sm:$0xff]
    %v2498 = vld [vmem:[#allocation4 + $0x1110] sm:$0xff]
    %v2499 = vld [vmem:[#allocation4 + $0x1118] sm:$0xff]
    %v2500 = vld [vmem:[#allocation4 + $0x1120] sm:$0xff]
    %v2501 = vld [vmem:[#allocation4 + $0x1128] sm:$0xff]
    %v2502 = vld [vmem:[#allocation4 + $0x1130] sm:$0xff]
    %v2503 = vld [vmem:[#allocation4 + $0x1138] sm:$0xff]
    %v2504 = vld [vmem:[#allocation4 + $0x1140] sm:$0xff]
    %v2505 = vld [vmem:[#allocation4 + $0x1148] sm:$0xff]
    %v2506 = vld [vmem:[#allocation4 + $0x1150] sm:$0xff]
    %v2507 = vld [vmem:[#allocation4 + $0x1158] sm:$0xff]
    %v2508 = vld [vmem:[#allocation4 + $0x1160] sm:$0xff]
    %v2509 = vld [vmem:[#allocation4 + $0x1168] sm:$0xff]
    %v2510 = vld [vmem:[#allocation4 + $0x1170] sm:$0xff]
    %v2511 = vld [vmem:[#allocation4 + $0x1178] sm:$0xff]
    %v2512 = vld [vmem:[#allocation4 + $0x1180] sm:$0xff]
    %v2513 = vld [vmem:[#allocation4 + $0x1188] sm:$0xff]
    %v2514 = vld [vmem:[#allocation4 + $0x1190] sm:$0xff]
    %v2515 = vld [vmem:[#allocation4 + $0x1198] sm:$0xff]
    %v2516 = vld [vmem:[#allocation4 + $0x11a0] sm:$0xff]
    %v2517 = vld [vmem:[#allocation4 + $0x11a8] sm:$0xff]
    %v2518 = vld [vmem:[#allocation4 + $0x11b0] sm:$0xff]
    %v2519 = vld [vmem:[#allocation4 + $0x11b8] sm:$0xff]
    %v2520 = vld [vmem:[#allocation4 + $0x11c0] sm:$0xff]
    %v2521 = vld [vmem:[#allocation4 + $0x11c8] sm:$0xff]
    %v2522 = vld [vmem:[#allocation4 + $0x11d0] sm:$0xff]
    %v2523 = vld [vmem:[#allocation4 + $0x11d8] sm:$0xff]
    %v2524 = vld [vmem:[#allocation4 + $0x11e0] sm:$0xff]
    %v2525 = vld [vmem:[#allocation4 + $0x11e8] sm:$0xff]
    %v2526 = vld [vmem:[#allocation4 + $0x11f0] sm:$0xff]
    %v2527 = vld [vmem:[#allocation4 + $0x11f8] sm:$0xff]
    %2528 = vmatprep.subr.mxu0 %v2337
    %2529 = vmatpush1.msra.mxu0 %v2336
    %2530 = vmatprep.subr.mxu0 %v2343
    %2531 = vmatpush1.msra.mxu0 %v2342
    %2532 = vmatprep.subr.mxu0 %v2349
    %2533 = vmatpush1.msra.mxu0 %v2348
    %2534 = vmatprep.subr.mxu0 %v2355
    %2535 = vmatpush1.msra.mxu0 %v2354
    %2536 = vmatprep.subr.mxu0 %v2361
    %2537 = vmatpush1.msra.mxu0 %v2360
    %2538 = vmatprep.subr.mxu0 %v2367
    %2539 = vmatpush1.msra.mxu0 %v2366
    %2540 = vmatprep.subr.mxu0 %v2373
    %2541 = vmatpush1.msra.mxu0 %v2372
    %2542 = vmatprep.subr.mxu0 %v2379
    %2543 = vmatpush1.msra.mxu0 %v2378
    %2544 = vmatprep.subr.mxu0 %v2385
    %2545 = vmatpush1.msra.mxu0 %v2384
    %2546 = vmatprep.subr.mxu0 %v2391
    %2547 = vmatpush1.msra.mxu0 %v2390
    %2548 = vmatprep.subr.mxu0 %v2397
    %2549 = vmatpush1.msra.mxu0 %v2396
    %2550 = vmatprep.subr.mxu0 %v2403
    %2551 = vmatpush1.msra.mxu0 %v2402
    %2552 = vmatprep.subr.mxu0 %v2409
    %2553 = vmatpush1.msra.mxu0 %v2408
    %2554 = vmatprep.subr.mxu0 %v2415
    %2555 = vmatpush1.msra.mxu0 %v2414
    %2556 = vmatprep.subr.mxu0 %v2421
    %2557 = vmatpush1.msra.mxu0 %v2420
    %2558 = vmatprep.subr.mxu0 %v2427
    %2559 = vmatpush1.msra.mxu0 %v2426
    %2560 = vmatprep.subr.mxu0 %v2433
    %2561 = vmatpush1.msra.mxu0 %v2432
    %2562 = vmatprep.subr.mxu0 %v2439
    %2563 = vmatpush1.msra.mxu0 %v2438
    %2564 = vmatprep.subr.mxu0 %v2445
    %2565 = vmatpush1.msra.mxu0 %v2444
    %2566 = vmatprep.subr.mxu0 %v2451
    %2567 = vmatpush1.msra.mxu0 %v2450
    %2568 = vmatprep.subr.mxu0 %v2457
    %2569 = vmatpush1.msra.mxu0 %v2456
    %2570 = vmatprep.subr.mxu0 %v2463
    %2571 = vmatpush1.msra.mxu0 %v2462
    %2572 = vmatprep.subr.mxu0 %v2469
    %2573 = vmatpush1.msra.mxu0 %v2468
    %2574 = vmatprep.subr.mxu0 %v2475
    %2575 = vmatpush1.msra.mxu0 %v2474
    %2576 = vmatprep.subr.mxu0 %v2481
    %2577 = vmatpush1.msra.mxu0 %v2480
    %2578 = vmatprep.subr.mxu0 %v2487
    %2579 = vmatpush1.msra.mxu0 %v2486
    %2580 = vmatprep.subr.mxu0 %v2493
    %2581 = vmatpush1.msra.mxu0 %v2492
    %2582 = vmatprep.subr.mxu0 %v2499
    %2583 = vmatpush1.msra.mxu0 %v2498
    %2584 = vmatprep.subr.mxu0 %v2505
    %2585 = vmatpush1.msra.mxu0 %v2504
    %2586 = vmatprep.subr.mxu0 %v2511
    %2587 = vmatpush1.msra.mxu0 %v2510
    %2588 = vmatprep.subr.mxu0 %v2517
    %2589 = vmatpush1.msra.mxu0 %v2516
    %2590 = vmatprep.subr.mxu0 %v2523
    %2591 = vmatpush1.msra.mxu0 %v2522
    %2592 = vmatprep.mubr.f32.mxu0 %v2327
    %2593 = vmatmul.mubr.f32.gmra.mrb[0].mxu0 %v2326
    %v2594 = vpop.f32.mrb[0].mxu0
    %v2595 = vadd.f32 0.0, %v2594
    %v2596 = vpop.f32.mrb[0].mxu0
    %v2597 = vadd.f32 0.0, %v2596
    %2598 = vmatprep.mubr.f32.mxu0 %v2329
    %2599 = vmatmul.mubr.f32.gmra.mrb[0].mxu0 %v2328
    %v2600 = vpop.f32.mrb[0].mxu0
    %v2601 = vadd.f32 0.0, %v2600
    %v2602 = vpop.f32.mrb[0].mxu0
    %v2603 = vadd.f32 0.0, %v2602
    %2604 = vmatprep.mubr.f32.mxu0 %v2331
    %2605 = vmatmul.mubr.f32.gmra.mrb[0].mxu0 %v2330
    %v2606 = vpop.f32.mrb[0].mxu0
    %v2607 = vadd.f32 0.0, %v2606
    %v2608 = vpop.f32.mrb[0].mxu0
    %v2609 = vadd.f32 0.0, %v2608
    %2610 = vmatprep.mubr.f32.mxu0 %v2333
    %2611 = vmatmul.mubr.f32.gmra.mrb[0].mxu0 %v2332
    %v2612 = vpop.f32.mrb[0].mxu0
    %v2613 = vadd.f32 0.0, %v2612
    %v2614 = vpop.f32.mrb[0].mxu0
    %v2615 = vadd.f32 0.0, %v2614
    %2616 = vmatprep.mubr.f32.mxu0 %v2335
    %2617 = vmatmul.mubr.f32.gmra.mrb[0].mxu0 %v2334
    %v2618 = vpop.f32.mrb[0].mxu0
    %v2619 = vadd.f32 0.0, %v2618
    %v2620 = vpop.f32.mrb[0].mxu0
    %v2621 = vadd.f32 0.0, %v2620
    %2622 = vdwg.mxu0
    %2623 = vmatprep.subr.mxu0 %v2339
    %2624 = vmatpush1.msra.mxu0 %v2338
    %2625 = vmatprep.subr.mxu0 %v2345
    %2626 = vmatpush1.msra.mxu0 %v2344
    %2627 = vmatprep.subr.mxu0 %v2351
    %2628 = vmatpush1.msra.mxu0 %v2350
    %2629 = vmatprep.subr.mxu0 %v2357
    %2630 = vmatpush1.msra.mxu0 %v2356
    %2631 = vmatprep.subr.mxu0 %v2363
    %2632 = vmatpush1.msra.mxu0 %v2362
    %2633 = vmatprep.subr.mxu0 %v2369
    %2634 = vmatpush1.msra.mxu0 %v2368
    %2635 = vmatprep.subr.mxu0 %v2375
    %2636 = vmatpush1.msra.mxu0 %v2374
    %2637 = vmatprep.subr.mxu0 %v2381
    %2638 = vmatpush1.msra.mxu0 %v2380
    %2639 = vmatprep.subr.mxu0 %v2387
    %2640 = vmatpush1.msra.mxu0 %v2386
    %2641 = vmatprep.subr.mxu0 %v2393
    %2642 = vmatpush1.msra.mxu0 %v2392
    %2643 = vmatprep.subr.mxu0 %v2399
    %2644 = vmatpush1.msra.mxu0 %v2398
    %2645 = vmatprep.subr.mxu0 %v2405
    %2646 = vmatpush1.msra.mxu0 %v2404
    %2647 = vmatprep.subr.mxu0 %v2411
    %2648 = vmatpush1.msra.mxu0 %v2410
    %2649 = vmatprep.subr.mxu0 %v2417
    %2650 = vmatpush1.msra.mxu0 %v2416
    %2651 = vmatprep.subr.mxu0 %v2423
    %2652 = vmatpush1.msra.mxu0 %v2422
    %2653 = vmatprep.subr.mxu0 %v2429
    %2654 = vmatpush1.msra.mxu0 %v2428
    %2655 = vmatprep.subr.mxu0 %v2435
    %2656 = vmatpush1.msra.mxu0 %v2434
    %2657 = vmatprep.subr.mxu0 %v2441
    %2658 = vmatpush1.msra.mxu0 %v2440
    %2659 = vmatprep.subr.mxu0 %v2447
    %2660 = vmatpush1.msra.mxu0 %v2446
    %2661 = vmatprep.subr.mxu0 %v2453
    %2662 = vmatpush1.msra.mxu0 %v2452
    %2663 = vmatprep.subr.mxu0 %v2459
    %2664 = vmatpush1.msra.mxu0 %v2458
    %2665 = vmatprep.subr.mxu0 %v2465
    %2666 = vmatpush1.msra.mxu0 %v2464
    %2667 = vmatprep.subr.mxu0 %v2471
    %2668 = vmatpush1.msra.mxu0 %v2470
    %2669 = vmatprep.subr.mxu0 %v2477
    %2670 = vmatpush1.msra.mxu0 %v2476
    %2671 = vmatprep.subr.mxu0 %v2483
    %2672 = vmatpush1.msra.mxu0 %v2482
    %2673 = vmatprep.subr.mxu0 %v2489
    %2674 = vmatpush1.msra.mxu0 %v2488
    %2675 = vmatprep.subr.mxu0 %v2495
    %2676 = vmatpush1.msra.mxu0 %v2494
    %2677 = vmatprep.subr.mxu0 %v2501
    %2678 = vmatpush1.msra.mxu0 %v2500
    %2679 = vmatprep.subr.mxu0 %v2507
    %2680 = vmatpush1.msra.mxu0 %v2506
    %2681 = vmatprep.subr.mxu0 %v2513
    %2682 = vmatpush1.msra.mxu0 %v2512
    %2683 = vmatprep.subr.mxu0 %v2519
    %2684 = vmatpush1.msra.mxu0 %v2518
    %2685 = vmatprep.subr.mxu0 %v2525
    %2686 = vmatpush1.msra.mxu0 %v2524
    %2687 = vmatprep.mubr.f32.mxu0 %v2327
    %2688 = vmatmul.mubr.f32.gmra.mrb[0].mxu0 %v2326
    %v2689 = vpop.f32.mrb[0].mxu0
    %v2690 = vadd.f32 0.0, %v2689
    %v2691 = vpop.f32.mrb[0].mxu0
    %v2692 = vadd.f32 0.0, %v2691
    %2693 = vmatprep.mubr.f32.mxu0 %v2329
    %2694 = vmatmul.mubr.f32.gmra.mrb[0].mxu0 %v2328
    %v2695 = vpop.f32.mrb[0].mxu0
    %v2696 = vadd.f32 0.0, %v2695
    %v2697 = vpop.f32.mrb[0].mxu0
    %v2698 = vadd.f32 0.0, %v2697
    %2699 = vmatprep.mubr.f32.mxu0 %v2331
    %2700 = vmatmul.mubr.f32.gmra.mrb[0].mxu0 %v2330
    %v2701 = vpop.f32.mrb[0].mxu0
    %v2702 = vadd.f32 0.0, %v2701
    %v2703 = vpop.f32.mrb[0].mxu0
    %v2704 = vadd.f32 0.0, %v2703
    %2705 = vmatprep.mubr.f32.mxu0 %v2333
    %2706 = vmatmul.mubr.f32.gmra.mrb[0].mxu0 %v2332
    %v2707 = vpop.f32.mrb[0].mxu0
    %v2708 = vadd.f32 0.0, %v2707
    %v2709 = vpop.f32.mrb[0].mxu0
    %v2710 = vadd.f32 0.0, %v2709
    %2711 = vmatprep.mubr.f32.mxu0 %v2335
    %2712 = vmatmul.mubr.f32.gmra.mrb[0].mxu0 %v2334
    %v2713 = vpop.f32.mrb[0].mxu0
    %v2714 = vadd.f32 0.0, %v2713
    %v2715 = vpop.f32.mrb[0].mxu0
    %v2716 = vadd.f32 0.0, %v2715
    %2717 = vdwg.mxu0
    %2718 = vmatprep.subr.mxu0 %v2341
    %2719 = vmatpush1.msra.mxu0 %v2340
    %2720 = vmatprep.subr.mxu0 %v2347
    %2721 = vmatpush1.msra.mxu0 %v2346
    %2722 = vmatprep.subr.mxu0 %v2353
    %2723 = vmatpush1.msra.mxu0 %v2352
    %2724 = vmatprep.subr.mxu0 %v2359
    %2725 = vmatpush1.msra.mxu0 %v2358
    %2726 = vmatprep.subr.mxu0 %v2365
    %2727 = vmatpush1.msra.mxu0 %v2364
    %2728 = vmatprep.subr.mxu0 %v2371
    %2729 = vmatpush1.msra.mxu0 %v2370
    %2730 = vmatprep.subr.mxu0 %v2377
    %2731 = vmatpush1.msra.mxu0 %v2376
    %2732 = vmatprep.subr.mxu0 %v2383
    %2733 = vmatpush1.msra.mxu0 %v2382
    %2734 = vmatprep.subr.mxu0 %v2389
    %2735 = vmatpush1.msra.mxu0 %v2388
    %2736 = vmatprep.subr.mxu0 %v2395
    %2737 = vmatpush1.msra.mxu0 %v2394
    %2738 = vmatprep.subr.mxu0 %v2401
    %2739 = vmatpush1.msra.mxu0 %v2400
    %2740 = vmatprep.subr.mxu0 %v2407
    %2741 = vmatpush1.msra.mxu0 %v2406
    %2742 = vmatprep.subr.mxu0 %v2413
    %2743 = vmatpush1.msra.mxu0 %v2412
    %2744 = vmatprep.subr.mxu0 %v2419
    %2745 = vmatpush1.msra.mxu0 %v2418
    %2746 = vmatprep.subr.mxu0 %v2425
    %2747 = vmatpush1.msra.mxu0 %v2424
    %2748 = vmatprep.subr.mxu0 %v2431
    %2749 = vmatpush1.msra.mxu0 %v2430
    %2750 = vmatprep.subr.mxu0 %v2437
    %2751 = vmatpush1.msra.mxu0 %v2436
    %2752 = vmatprep.subr.mxu0 %v2443
    %2753 = vmatpush1.msra.mxu0 %v2442
    %2754 = vmatprep.subr.mxu0 %v2449
    %2755 = vmatpush1.msra.mxu0 %v2448
    %2756 = vmatprep.subr.mxu0 %v2455
    %2757 = vmatpush1.msra.mxu0 %v2454
    %2758 = vmatprep.subr.mxu0 %v2461
    %2759 = vmatpush1.msra.mxu0 %v2460
    %2760 = vmatprep.subr.mxu0 %v2467
    %2761 = vmatpush1.msra.mxu0 %v2466
    %2762 = vmatprep.subr.mxu0 %v2473
    %2763 = vmatpush1.msra.mxu0 %v2472
    %2764 = vmatprep.subr.mxu0 %v2479
    %2765 = vmatpush1.msra.mxu0 %v2478
    %2766 = vmatprep.subr.mxu0 %v2485
    %2767 = vmatpush1.msra.mxu0 %v2484
    %2768 = vmatprep.subr.mxu0 %v2491
    %2769 = vmatpush1.msra.mxu0 %v2490
    %2770 = vmatprep.subr.mxu0 %v2497
    %2771 = vmatpush1.msra.mxu0 %v2496
    %2772 = vmatprep.subr.mxu0 %v2503
    %2773 = vmatpush1.msra.mxu0 %v2502
    %2774 = vmatprep.subr.mxu0 %v2509
    %2775 = vmatpush1.msra.mxu0 %v2508
    %2776 = vmatprep.subr.mxu0 %v2515
    %2777 = vmatpush1.msra.mxu0 %v2514
    %2778 = vmatprep.subr.mxu0 %v2521
    %2779 = vmatpush1.msra.mxu0 %v2520
    %2780 = vmatprep.subr.mxu0 %v2527
    %2781 = vmatpush1.msra.mxu0 %v2526
    %2782 = vmatprep.mubr.f32.mxu0 %v2327
    %2783 = vmatmul.mubr.f32.gmra.mrb[0].mxu0 %v2326
    %v2784 = vpop.f32.mrb[0].mxu0
    %v2785 = vadd.f32 0.0, %v2784
    %v2786 = vpop.f32.mrb[0].mxu0
    %v2787 = vadd.f32 0.0, %v2786
    %2788 = vmatprep.mubr.f32.mxu0 %v2329
    %2789 = vmatmul.mubr.f32.gmra.mrb[0].mxu0 %v2328
    %v2790 = vpop.f32.mrb[0].mxu0
    %v2791 = vadd.f32 0.0, %v2790
    %v2792 = vpop.f32.mrb[0].mxu0
    %v2793 = vadd.f32 0.0, %v2792
    %2794 = vmatprep.mubr.f32.mxu0 %v2331
    %2795 = vmatmul.mubr.f32.gmra.mrb[0].mxu0 %v2330
    %v2796 = vpop.f32.mrb[0].mxu0
    %v2797 = vadd.f32 0.0, %v2796
    %v2798 = vpop.f32.mrb[0].mxu0
    %v2799 = vadd.f32 0.0, %v2798
    %2800 = vmatprep.mubr.f32.mxu0 %v2333
    %2801 = vmatmul.mubr.f32.gmra.mrb[0].mxu0 %v2332
    %v2802 = vpop.f32.mrb[0].mxu0
    %v2803 = vadd.f32 0.0, %v2802
    %v2804 = vpop.f32.mrb[0].mxu0
    %v2805 = vadd.f32 0.0, %v2804
    %2806 = vmatprep.mubr.f32.mxu0 %v2335
    %2807 = vmatmul.mubr.f32.gmra.mrb[0].mxu0 %v2334
    %v2808 = vpop.f32.mrb[0].mxu0
    %v2809 = vadd.f32 0.0, %v2808
    %v2810 = vpop.f32.mrb[0].mxu0
    %v2811 = vadd.f32 0.0, %v2810
    %2812 = vdwg.mxu0
    %v2813 = vld [vmem:[#allocation6 + $0xf0] sm:$0xff]
    %v2814 = vld [vmem:[#allocation6 + $0xf8] sm:$0xff]
    %v2815 = vld [vmem:[#allocation6 + $0x100] sm:$0xff]
    %v2816 = vld [vmem:[#allocation6 + $0x108] sm:$0xff]
    %v2817 = vld [vmem:[#allocation6 + $0x110] sm:$0xff]
    %v2818 = vld [vmem:[#allocation6 + $0x118] sm:$0xff]
    %v2819 = vld [vmem:[#allocation6 + $0x120] sm:$0xff]
    %v2820 = vld [vmem:[#allocation6 + $0x128] sm:$0xff]
    %v2821 = vld [vmem:[#allocation6 + $0x130] sm:$0xff]
    %v2822 = vld [vmem:[#allocation6 + $0x138] sm:$0xff]
    %v2823 = vld [vmem:[#allocation2 + $0x168] sm:$0xff]
    %v2824 = vld [vmem:[#allocation2 + $0x170] sm:$0xff]
    %v2825 = vld [vmem:[#allocation2 + $0x178] sm:$0xff]
    %v2826 = vld [vmem:[#allocation2 + $0x180] sm:$0xff]
    %v2827 = vld [vmem:[#allocation2 + $0x188] sm:$0xff]
    %vm2828 = vcmask 326656
    %v2830 = vsel %vm2828, %v2823, 0
    %v2833 = vsel %vm2828, %v2824, 0
    %v2836 = vsel %vm2828, %v2825, 0
    %v2839 = vsel %vm2828, %v2826, 0
    %v2842 = vsel %vm2828, %v2827, 0
    %2844 = vmatprep.subr.mxu0 %v2597
    %2845 = vmatpush1.msra.mxu0 %v2595
    %2846 = vmatprep.subr.mxu0 %v2603
    %2847 = vmatpush1.msra.mxu0 %v2601
    %2848 = vmatprep.subr.mxu0 %v2609
    %2849 = vmatpush1.msra.mxu0 %v2607
    %2850 = vmatprep.subr.mxu0 %v2615
    %2851 = vmatpush1.msra.mxu0 %v2613
    %2852 = vmatprep.subr.mxu0 %v2621
    %2853 = vmatpush1.msra.mxu0 %v2619
    %2854 = vmatprep.subr.mxu0 0.0
    %2855 = vmatpush1.msra.mxu0 0.0
    %2856 = vmatprep.subr.mxu0 0.0
    %2857 = vmatpush1.msra.mxu0 0.0
    %2858 = vmatprep.subr.mxu0 0.0
    %2859 = vmatpush1.msra.mxu0 0.0
    %2860 = vmatprep.subr.mxu0 0.0
    %2861 = vmatpush1.msra.mxu0 0.0
    %2862 = vmatprep.subr.mxu0 0.0
    %2863 = vmatpush1.msra.mxu0 0.0
    %2864 = vmatprep.subr.mxu0 0.0
    %2865 = vmatpush1.msra.mxu0 0.0
    %2866 = vmatprep.subr.mxu0 0.0
    %2867 = vmatpush1.msra.mxu0 0.0
    %2868 = vmatprep.subr.mxu0 0.0
    %2869 = vmatpush1.msra.mxu0 0.0
    %2870 = vmatprep.subr.mxu0 0.0
    %2871 = vmatpush1.msra.mxu0 0.0
    %2872 = vmatprep.subr.mxu0 0.0
    %2873 = vmatpush1.msra.mxu0 0.0
    %2874 = vmatprep.subr.mxu0 0.0
    %2875 = vmatpush1.msra.mxu0 0.0
    %2876 = vmatprep.subr.mxu0 0.0
    %2877 = vmatpush1.msra.mxu0 0.0
    %2878 = vmatprep.subr.mxu0 0.0
    %2879 = vmatpush1.msra.mxu0 0.0
    %2880 = vmatprep.subr.mxu0 0.0
    %2881 = vmatpush1.msra.mxu0 0.0
    %2882 = vmatprep.subr.mxu0 0.0
    %2883 = vmatpush1.msra.mxu0 0.0
    %2884 = vmatprep.subr.mxu0 0.0
    %2885 = vmatpush1.msra.mxu0 0.0
    %2886 = vmatprep.subr.mxu0 0.0
    %2887 = vmatpush1.msra.mxu0 0.0
    %2888 = vmatprep.subr.mxu0 0.0
    %2889 = vmatpush1.msra.mxu0 0.0
    %2890 = vmatprep.subr.mxu0 0.0
    %2891 = vmatpush1.msra.mxu0 0.0
    %2892 = vmatprep.subr.mxu0 0.0
    %2893 = vmatpush1.msra.mxu0 0.0
    %2894 = vmatprep.subr.mxu0 0.0
    %2895 = vmatpush1.msra.mxu0 0.0
    %2896 = vmatprep.subr.mxu0 0.0
    %2897 = vmatpush1.msra.mxu0 0.0
    %2898 = vmatprep.subr.mxu0 0.0
    %2899 = vmatpush1.msra.mxu0 0.0
    %2900 = vmatprep.subr.mxu0 0.0
    %2901 = vmatpush1.msra.mxu0 0.0
    %2902 = vmatprep.subr.mxu0 0.0
    %2903 = vmatpush1.msra.mxu0 0.0
    %2904 = vmatprep.subr.mxu0 0.0
    %2905 = vmatpush1.msra.mxu0 0.0
    %2906 = vmatprep.subr.mxu0 0.0
    %2907 = vmatpush1.msra.mxu0 0.0
    %2908 = vmatprep.mubr.f32.mxu0 0.0
    %2909 = vmatmul.mubr.f32.gmra.mrb[0].mxu0 %v2830
    %v2910 = vpop.f32.mrb[0].mxu0
    %v2911 = vadd.f32 0.0, %v2910
    %v2912 = vpop.f32.mrb[0].mxu0
    %v2913 = vadd.f32 0.0, %v2912
    %2914 = vmatprep.mubr.f32.mxu0 0.0
    %2915 = vmatmul.mubr.f32.gmra.mrb[0].mxu0 %v2833
    %v2916 = vpop.f32.mrb[0].mxu0
    %v2917 = vadd.f32 0.0, %v2916
    %v2918 = vpop.f32.mrb[0].mxu0
    %v2919 = vadd.f32 0.0, %v2918
    %2920 = vmatprep.mubr.f32.mxu0 0.0
    %2921 = vmatmul.mubr.f32.gmra.mrb[0].mxu0 %v2836
    %v2922 = vpop.f32.mrb[0].mxu0
    %v2923 = vadd.f32 0.0, %v2922
    %v2924 = vpop.f32.mrb[0].mxu0
    %v2925 = vadd.f32 0.0, %v2924
    %2926 = vmatprep.mubr.f32.mxu0 0.0
    %2927 = vmatmul.mubr.f32.gmra.mrb[0].mxu0 %v2839
    %v2928 = vpop.f32.mrb[0].mxu0
    %v2929 = vadd.f32 0.0, %v2928
    %v2930 = vpop.f32.mrb[0].mxu0
    %v2931 = vadd.f32 0.0, %v2930
    %2932 = vmatprep.mubr.f32.mxu0 0.0
    %2933 = vmatmul.mubr.f32.gmra.mrb[0].mxu0 %v2842
    %v2934 = vpop.f32.mrb[0].mxu0
    %v2935 = vadd.f32 0.0, %v2934
    %v2936 = vpop.f32.mrb[0].mxu0
    %v2937 = vadd.f32 0.0, %v2936
    %2938 = vdwg.mxu0
    %v2939 = vadd.f32 %v2813, %v2911
    %v2940 = vadd.f32 %v2814, %v2913
    %v2941 = vadd.f32 %v2815, %v2917
    %v2942 = vadd.f32 %v2816, %v2919
    %v2943 = vadd.f32 %v2817, %v2923
    %v2944 = vadd.f32 %v2818, %v2925
    %v2945 = vadd.f32 %v2819, %v2929
    %v2946 = vadd.f32 %v2820, %v2931
    %v2947 = vadd.f32 %v2821, %v2935
    %v2948 = vadd.f32 %v2822, %v2937
    %v2949 = vld [vmem:[#allocation2 + $0x190] sm:$0xff]
    %v2950 = vld [vmem:[#allocation2 + $0x198] sm:$0xff]
    %v2951 = vld [vmem:[#allocation2 + $0x1a0] sm:$0xff]
    %v2952 = vld [vmem:[#allocation2 + $0x1a8] sm:$0xff]
    %v2953 = vld [vmem:[#allocation2 + $0x1b0] sm:$0xff]
    %v2955 = vsel %vm2828, %v2949, 0
    %v2958 = vsel %vm2828, %v2950, 0
    %v2961 = vsel %vm2828, %v2951, 0
    %v2964 = vsel %vm2828, %v2952, 0
    %v2967 = vsel %vm2828, %v2953, 0
    %2969 = vmatprep.subr.mxu0 %v2692
    %2970 = vmatpush1.msra.mxu0 %v2690
    %2971 = vmatprep.subr.mxu0 %v2698
    %2972 = vmatpush1.msra.mxu0 %v2696
    %2973 = vmatprep.subr.mxu0 %v2704
    %2974 = vmatpush1.msra.mxu0 %v2702
    %2975 = vmatprep.subr.mxu0 %v2710
    %2976 = vmatpush1.msra.mxu0 %v2708
    %2977 = vmatprep.subr.mxu0 %v2716
    %2978 = vmatpush1.msra.mxu0 %v2714
    %2979 = vmatprep.subr.mxu0 0.0
    %2980 = vmatpush1.msra.mxu0 0.0
    %2981 = vmatprep.subr.mxu0 0.0
    %2982 = vmatpush1.msra.mxu0 0.0
    %2983 = vmatprep.subr.mxu0 0.0
    %2984 = vmatpush1.msra.mxu0 0.0
    %2985 = vmatprep.subr.mxu0 0.0
    %2986 = vmatpush1.msra.mxu0 0.0
    %2987 = vmatprep.subr.mxu0 0.0
    %2988 = vmatpush1.msra.mxu0 0.0
    %2989 = vmatprep.subr.mxu0 0.0
    %2990 = vmatpush1.msra.mxu0 0.0
    %2991 = vmatprep.subr.mxu0 0.0
    %2992 = vmatpush1.msra.mxu0 0.0
    %2993 = vmatprep.subr.mxu0 0.0
    %2994 = vmatpush1.msra.mxu0 0.0
    %2995 = vmatprep.subr.mxu0 0.0
    %2996 = vmatpush1.msra.mxu0 0.0
    %2997 = vmatprep.subr.mxu0 0.0
    %2998 = vmatpush1.msra.mxu0 0.0
    %2999 = vmatprep.subr.mxu0 0.0
    %3000 = vmatpush1.msra.mxu0 0.0
    %3001 = vmatprep.subr.mxu0 0.0
    %3002 = vmatpush1.msra.mxu0 0.0
    %3003 = vmatprep.subr.mxu0 0.0
    %3004 = vmatpush1.msra.mxu0 0.0
    %3005 = vmatprep.subr.mxu0 0.0
    %3006 = vmatpush1.msra.mxu0 0.0
    %3007 = vmatprep.subr.mxu0 0.0
    %3008 = vmatpush1.msra.mxu0 0.0
    %3009 = vmatprep.subr.mxu0 0.0
    %3010 = vmatpush1.msra.mxu0 0.0
    %3011 = vmatprep.subr.mxu0 0.0
    %3012 = vmatpush1.msra.mxu0 0.0
    %3013 = vmatprep.subr.mxu0 0.0
    %3014 = vmatpush1.msra.mxu0 0.0
    %3015 = vmatprep.subr.mxu0 0.0
    %3016 = vmatpush1.msra.mxu0 0.0
    %3017 = vmatprep.subr.mxu0 0.0
    %3018 = vmatpush1.msra.mxu0 0.0
    %3019 = vmatprep.subr.mxu0 0.0
    %3020 = vmatpush1.msra.mxu0 0.0
    %3021 = vmatprep.subr.mxu0 0.0
    %3022 = vmatpush1.msra.mxu0 0.0
    %3023 = vmatprep.subr.mxu0 0.0
    %3024 = vmatpush1.msra.mxu0 0.0
    %3025 = vmatprep.subr.mxu0 0.0
    %3026 = vmatpush1.msra.mxu0 0.0
    %3027 = vmatprep.subr.mxu0 0.0
    %3028 = vmatpush1.msra.mxu0 0.0
    %3029 = vmatprep.subr.mxu0 0.0
    %3030 = vmatpush1.msra.mxu0 0.0
    %3031 = vmatprep.subr.mxu0 0.0
    %3032 = vmatpush1.msra.mxu0 0.0
    %3033 = vmatprep.mubr.f32.mxu0 0.0
    %3034 = vmatmul.mubr.f32.gmra.mrb[0].mxu0 %v2955
    %v3035 = vpop.f32.mrb[0].mxu0
    %v3036 = vadd.f32 0.0, %v3035
    %v3037 = vpop.f32.mrb[0].mxu0
    %v3038 = vadd.f32 0.0, %v3037
    %3039 = vmatprep.mubr.f32.mxu0 0.0
    %3040 = vmatmul.mubr.f32.gmra.mrb[0].mxu0 %v2958
    %v3041 = vpop.f32.mrb[0].mxu0
    %v3042 = vadd.f32 0.0, %v3041
    %v3043 = vpop.f32.mrb[0].mxu0
    %v3044 = vadd.f32 0.0, %v3043
    %3045 = vmatprep.mubr.f32.mxu0 0.0
    %3046 = vmatmul.mubr.f32.gmra.mrb[0].mxu0 %v2961
    %v3047 = vpop.f32.mrb[0].mxu0
    %v3048 = vadd.f32 0.0, %v3047
    %v3049 = vpop.f32.mrb[0].mxu0
    %v3050 = vadd.f32 0.0, %v3049
    %3051 = vmatprep.mubr.f32.mxu0 0.0
    %3052 = vmatmul.mubr.f32.gmra.mrb[0].mxu0 %v2964
    %v3053 = vpop.f32.mrb[0].mxu0
    %v3054 = vadd.f32 0.0, %v3053
    %v3055 = vpop.f32.mrb[0].mxu0
    %v3056 = vadd.f32 0.0, %v3055
    %3057 = vmatprep.mubr.f32.mxu0 0.0
    %3058 = vmatmul.mubr.f32.gmra.mrb[0].mxu0 %v2967
    %v3059 = vpop.f32.mrb[0].mxu0
    %v3060 = vadd.f32 0.0, %v3059
    %v3061 = vpop.f32.mrb[0].mxu0
    %v3062 = vadd.f32 0.0, %v3061
    %3063 = vdwg.mxu0
    %v3064 = vadd.f32 %v2939, %v3036
    %v3065 = vadd.f32 %v2940, %v3038
    %v3066 = vadd.f32 %v2941, %v3042
    %v3067 = vadd.f32 %v2942, %v3044
    %v3068 = vadd.f32 %v2943, %v3048
    %v3069 = vadd.f32 %v2944, %v3050
    %v3070 = vadd.f32 %v2945, %v3054
    %v3071 = vadd.f32 %v2946, %v3056
    %v3072 = vadd.f32 %v2947, %v3060
    %v3073 = vadd.f32 %v2948, %v3062
    %v3074 = vld [vmem:[#allocation2 + $0x1b8] sm:$0xff]
    %v3075 = vld [vmem:[#allocation2 + $0x1c0] sm:$0xff]
    %v3076 = vld [vmem:[#allocation2 + $0x1c8] sm:$0xff]
    %v3077 = vld [vmem:[#allocation2 + $0x1d0] sm:$0xff]
    %v3078 = vld [vmem:[#allocation2 + $0x1d8] sm:$0xff]
    %v3080 = vsel %vm2828, %v3074, 0
    %v3083 = vsel %vm2828, %v3075, 0
    %v3086 = vsel %vm2828, %v3076, 0
    %v3089 = vsel %vm2828, %v3077, 0
    %v3092 = vsel %vm2828, %v3078, 0
    %3094 = vmatprep.subr.mxu0 %v2787
    %3095 = vmatpush1.msra.mxu0 %v2785
    %3096 = vmatprep.subr.mxu0 %v2793
    %3097 = vmatpush1.msra.mxu0 %v2791
    %3098 = vmatprep.subr.mxu0 %v2799
    %3099 = vmatpush1.msra.mxu0 %v2797
    %3100 = vmatprep.subr.mxu0 %v2805
    %3101 = vmatpush1.msra.mxu0 %v2803
    %3102 = vmatprep.subr.mxu0 %v2811
    %3103 = vmatpush1.msra.mxu0 %v2809
    %3104 = vmatprep.subr.mxu0 0.0
    %3105 = vmatpush1.msra.mxu0 0.0
    %3106 = vmatprep.subr.mxu0 0.0
    %3107 = vmatpush1.msra.mxu0 0.0
    %3108 = vmatprep.subr.mxu0 0.0
    %3109 = vmatpush1.msra.mxu0 0.0
    %3110 = vmatprep.subr.mxu0 0.0
    %3111 = vmatpush1.msra.mxu0 0.0
    %3112 = vmatprep.subr.mxu0 0.0
    %3113 = vmatpush1.msra.mxu0 0.0
    %3114 = vmatprep.subr.mxu0 0.0
    %3115 = vmatpush1.msra.mxu0 0.0
    %3116 = vmatprep.subr.mxu0 0.0
    %3117 = vmatpush1.msra.mxu0 0.0
    %3118 = vmatprep.subr.mxu0 0.0
    %3119 = vmatpush1.msra.mxu0 0.0
    %3120 = vmatprep.subr.mxu0 0.0
    %3121 = vmatpush1.msra.mxu0 0.0
    %3122 = vmatprep.subr.mxu0 0.0
    %3123 = vmatpush1.msra.mxu0 0.0
    %3124 = vmatprep.subr.mxu0 0.0
    %3125 = vmatpush1.msra.mxu0 0.0
    %3126 = vmatprep.subr.mxu0 0.0
    %3127 = vmatpush1.msra.mxu0 0.0
    %3128 = vmatprep.subr.mxu0 0.0
    %3129 = vmatpush1.msra.mxu0 0.0
    %3130 = vmatprep.subr.mxu0 0.0
    %3131 = vmatpush1.msra.mxu0 0.0
    %3132 = vmatprep.subr.mxu0 0.0
    %3133 = vmatpush1.msra.mxu0 0.0
    %3134 = vmatprep.subr.mxu0 0.0
    %3135 = vmatpush1.msra.mxu0 0.0
    %3136 = vmatprep.subr.mxu0 0.0
    %3137 = vmatpush1.msra.mxu0 0.0
    %3138 = vmatprep.subr.mxu0 0.0
    %3139 = vmatpush1.msra.mxu0 0.0
    %3140 = vmatprep.subr.mxu0 0.0
    %3141 = vmatpush1.msra.mxu0 0.0
    %3142 = vmatprep.subr.mxu0 0.0
    %3143 = vmatpush1.msra.mxu0 0.0
    %3144 = vmatprep.subr.mxu0 0.0
    %3145 = vmatpush1.msra.mxu0 0.0
    %3146 = vmatprep.subr.mxu0 0.0
    %3147 = vmatpush1.msra.mxu0 0.0
    %3148 = vmatprep.subr.mxu0 0.0
    %3149 = vmatpush1.msra.mxu0 0.0
    %3150 = vmatprep.subr.mxu0 0.0
    %3151 = vmatpush1.msra.mxu0 0.0
    %3152 = vmatprep.subr.mxu0 0.0
    %3153 = vmatpush1.msra.mxu0 0.0
    %3154 = vmatprep.subr.mxu0 0.0
    %3155 = vmatpush1.msra.mxu0 0.0
    %3156 = vmatprep.subr.mxu0 0.0
    %3157 = vmatpush1.msra.mxu0 0.0
    %3158 = vmatprep.mubr.f32.mxu0 0.0
    %3159 = vmatmul.mubr.f32.gmra.mrb[0].mxu0 %v3080
    %v3160 = vpop.f32.mrb[0].mxu0
    %v3161 = vadd.f32 0.0, %v3160
    %v3162 = vpop.f32.mrb[0].mxu0
    %v3163 = vadd.f32 0.0, %v3162
    %3164 = vmatprep.mubr.f32.mxu0 0.0
    %3165 = vmatmul.mubr.f32.gmra.mrb[0].mxu0 %v3083
    %v3166 = vpop.f32.mrb[0].mxu0
    %v3167 = vadd.f32 0.0, %v3166
    %v3168 = vpop.f32.mrb[0].mxu0
    %v3169 = vadd.f32 0.0, %v3168
    %3170 = vmatprep.mubr.f32.mxu0 0.0
    %3171 = vmatmul.mubr.f32.gmra.mrb[0].mxu0 %v3086
    %v3172 = vpop.f32.mrb[0].mxu0
    %v3173 = vadd.f32 0.0, %v3172
    %v3174 = vpop.f32.mrb[0].mxu0
    %v3175 = vadd.f32 0.0, %v3174
    %3176 = vmatprep.mubr.f32.mxu0 0.0
    %3177 = vmatmul.mubr.f32.gmra.mrb[0].mxu0 %v3089
    %v3178 = vpop.f32.mrb[0].mxu0
    %v3179 = vadd.f32 0.0, %v3178
    %v3180 = vpop.f32.mrb[0].mxu0
    %v3181 = vadd.f32 0.0, %v3180
    %3182 = vmatprep.mubr.f32.mxu0 0.0
    %3183 = vmatmul.mubr.f32.gmra.mrb[0].mxu0 %v3092
    %v3184 = vpop.f32.mrb[0].mxu0
    %v3185 = vadd.f32 0.0, %v3184
    %v3186 = vpop.f32.mrb[0].mxu0
    %v3187 = vadd.f32 0.0, %v3186
    %3188 = vdwg.mxu0
    %v3189 = vadd.f32 %v3064, %v3161
    %v3190 = vadd.f32 %v3065, %v3163
    %v3191 = vadd.f32 %v3066, %v3167
    %v3192 = vadd.f32 %v3067, %v3169
    %v3193 = vadd.f32 %v3068, %v3173
    %v3194 = vadd.f32 %v3069, %v3175
    %v3195 = vadd.f32 %v3070, %v3179
    %v3196 = vadd.f32 %v3071, %v3181
    %v3197 = vadd.f32 %v3072, %v3185
    %v3198 = vadd.f32 %v3073, %v3187
    %v3199 = vmax.f32 %v3189, 0.0
    %v3200 = vmax.f32 %v3190, 0.0
    %v3201 = vmax.f32 %v3191, 0.0
    %v3202 = vmax.f32 %v3192, 0.0
    %v3203 = vmax.f32 %v3193, 0.0
    %v3204 = vmax.f32 %v3194, 0.0
    %v3205 = vmax.f32 %v3195, 0.0
    %v3206 = vmax.f32 %v3196, 0.0
    %v3207 = vmax.f32 %v3197, 0.0
    %v3208 = vmax.f32 %v3198, 0.0
    %v3209 = vld [vmem:[#allocation4 + $0x1200] sm:$0xff]
    %v3210 = vld [vmem:[#allocation4 + $0x1208] sm:$0xff]
    %v3211 = vld [vmem:[#allocation4 + $0x1210] sm:$0xff]
    %v3212 = vld [vmem:[#allocation4 + $0x1218] sm:$0xff]
    %v3213 = vld [vmem:[#allocation4 + $0x1230] sm:$0xff]
    %v3214 = vld [vmem:[#allocation4 + $0x1238] sm:$0xff]
    %v3215 = vld [vmem:[#allocation4 + $0x1240] sm:$0xff]
    %v3216 = vld [vmem:[#allocation4 + $0x1248] sm:$0xff]
    %v3217 = vld [vmem:[#allocation4 + $0x1260] sm:$0xff]
    %v3218 = vld [vmem:[#allocation4 + $0x1268] sm:$0xff]
    %v3219 = vld [vmem:[#allocation4 + $0x1270] sm:$0xff]
    %v3220 = vld [vmem:[#allocation4 + $0x1278] sm:$0xff]
    %v3221 = vld [vmem:[#allocation4 + $0x1290] sm:$0xff]
    %v3222 = vld [vmem:[#allocation4 + $0x1298] sm:$0xff]
    %v3223 = vld [vmem:[#allocation4 + $0x12a0] sm:$0xff]
    %v3224 = vld [vmem:[#allocation4 + $0x12a8] sm:$0xff]
    %v3225 = vld [vmem:[#allocation4 + $0x12c0] sm:$0xff]
    %v3226 = vld [vmem:[#allocation4 + $0x12c8] sm:$0xff]
    %v3227 = vld [vmem:[#allocation4 + $0x12d0] sm:$0xff]
    %v3228 = vld [vmem:[#allocation4 + $0x12d8] sm:$0xff]
    %v3229 = vld [vmem:[#allocation4 + $0x12f0] sm:$0xff]
    %v3230 = vld [vmem:[#allocation4 + $0x12f8] sm:$0xff]
    %v3231 = vld [vmem:[#allocation4 + $0x1300] sm:$0xff]
    %v3232 = vld [vmem:[#allocation4 + $0x1308] sm:$0xff]
    %v3233 = vld [vmem:[#allocation4 + $0x1320] sm:$0xff]
    %v3234 = vld [vmem:[#allocation4 + $0x1328] sm:$0xff]
    %v3235 = vld [vmem:[#allocation4 + $0x1330] sm:$0xff]
    %v3236 = vld [vmem:[#allocation4 + $0x1338] sm:$0xff]
    %v3237 = vld [vmem:[#allocation4 + $0x1350] sm:$0xff]
    %v3238 = vld [vmem:[#allocation4 + $0x1358] sm:$0xff]
    %v3239 = vld [vmem:[#allocation4 + $0x1360] sm:$0xff]
    %v3240 = vld [vmem:[#allocation4 + $0x1368] sm:$0xff]
    %v3241 = vld [vmem:[#allocation4 + $0x1380] sm:$0xff]
    %v3242 = vld [vmem:[#allocation4 + $0x1388] sm:$0xff]
    %v3243 = vld [vmem:[#allocation4 + $0x1390] sm:$0xff]
    %v3244 = vld [vmem:[#allocation4 + $0x1398] sm:$0xff]
    %v3245 = vld [vmem:[#allocation4 + $0x13b0] sm:$0xff]
    %v3246 = vld [vmem:[#allocation4 + $0x13b8] sm:$0xff]
    %v3247 = vld [vmem:[#allocation4 + $0x13c0] sm:$0xff]
    %v3248 = vld [vmem:[#allocation4 + $0x13c8] sm:$0xff]
    %v3249 = vld [vmem:[#allocation4 + $0x13e0] sm:$0xff]
    %v3250 = vld [vmem:[#allocation4 + $0x13e8] sm:$0xff]
    %v3251 = vld [vmem:[#allocation4 + $0x13f0] sm:$0xff]
    %v3252 = vld [vmem:[#allocation4 + $0x13f8] sm:$0xff]
    %v3253 = vld [vmem:[#allocation4 + $0x1410] sm:$0xff]
    %v3254 = vld [vmem:[#allocation4 + $0x1418] sm:$0xff]
    %v3255 = vld [vmem:[#allocation4 + $0x1420] sm:$0xff]
    %v3256 = vld [vmem:[#allocation4 + $0x1428] sm:$0xff]
    %v3257 = vld [vmem:[#allocation4 + $0x1440] sm:$0xff]
    %v3258 = vld [vmem:[#allocation4 + $0x1448] sm:$0xff]
    %v3259 = vld [vmem:[#allocation4 + $0x1450] sm:$0xff]
    %v3260 = vld [vmem:[#allocation4 + $0x1458] sm:$0xff]
    %v3261 = vld [vmem:[#allocation4 + $0x1470] sm:$0xff]
    %v3262 = vld [vmem:[#allocation4 + $0x1478] sm:$0xff]
    %v3263 = vld [vmem:[#allocation4 + $0x1480] sm:$0xff]
    %v3264 = vld [vmem:[#allocation4 + $0x1488] sm:$0xff]
    %v3265 = vld [vmem:[#allocation4 + $0x14a0] sm:$0xff]
    %v3266 = vld [vmem:[#allocation4 + $0x14a8] sm:$0xff]
    %v3267 = vld [vmem:[#allocation4 + $0x14b0] sm:$0xff]
    %v3268 = vld [vmem:[#allocation4 + $0x14b8] sm:$0xff]
    %v3269 = vld [vmem:[#allocation4 + $0x14d0] sm:$0xff]
    %v3270 = vld [vmem:[#allocation4 + $0x14d8] sm:$0xff]
    %v3271 = vld [vmem:[#allocation4 + $0x14e0] sm:$0xff]
    %v3272 = vld [vmem:[#allocation4 + $0x14e8] sm:$0xff]
    %v3273 = vld [vmem:[#allocation4 + $0x1500] sm:$0xff]
    %v3274 = vld [vmem:[#allocation4 + $0x1508] sm:$0xff]
    %v3275 = vld [vmem:[#allocation4 + $0x1510] sm:$0xff]
    %v3276 = vld [vmem:[#allocation4 + $0x1518] sm:$0xff]
    %v3277 = vld [vmem:[#allocation4 + $0x1530] sm:$0xff]
    %v3278 = vld [vmem:[#allocation4 + $0x1538] sm:$0xff]
    %v3279 = vld [vmem:[#allocation4 + $0x1540] sm:$0xff]
    %v3280 = vld [vmem:[#allocation4 + $0x1548] sm:$0xff]
    %v3281 = vld [vmem:[#allocation4 + $0x1560] sm:$0xff]
    %v3282 = vld [vmem:[#allocation4 + $0x1568] sm:$0xff]
    %v3283 = vld [vmem:[#allocation4 + $0x1570] sm:$0xff]
    %v3284 = vld [vmem:[#allocation4 + $0x1578] sm:$0xff]
    %v3285 = vld [vmem:[#allocation4 + $0x1590] sm:$0xff]
    %v3286 = vld [vmem:[#allocation4 + $0x1598] sm:$0xff]
    %v3287 = vld [vmem:[#allocation4 + $0x15a0] sm:$0xff]
    %v3288 = vld [vmem:[#allocation4 + $0x15a8] sm:$0xff]
    %v3289 = vld [vmem:[#allocation4 + $0x15c0] sm:$0xff]
    %v3290 = vld [vmem:[#allocation4 + $0x15c8] sm:$0xff]
    %v3291 = vld [vmem:[#allocation4 + $0x15d0] sm:$0xff]
    %v3292 = vld [vmem:[#allocation4 + $0x15d8] sm:$0xff]
    %v3293 = vld [vmem:[#allocation4 + $0x15f0] sm:$0xff]
    %v3294 = vld [vmem:[#allocation4 + $0x15f8] sm:$0xff]
    %v3295 = vld [vmem:[#allocation4 + $0x1600] sm:$0xff]
    %v3296 = vld [vmem:[#allocation4 + $0x1608] sm:$0xff]
    %v3297 = vld [vmem:[#allocation4 + $0x1620] sm:$0xff]
    %v3298 = vld [vmem:[#allocation4 + $0x1628] sm:$0xff]
    %v3299 = vld [vmem:[#allocation4 + $0x1630] sm:$0xff]
    %v3300 = vld [vmem:[#allocation4 + $0x1638] sm:$0xff]
    %v3301 = vld [vmem:[#allocation4 + $0x1650] sm:$0xff]
    %v3302 = vld [vmem:[#allocation4 + $0x1658] sm:$0xff]
    %v3303 = vld [vmem:[#allocation4 + $0x1660] sm:$0xff]
    %v3304 = vld [vmem:[#allocation4 + $0x1668] sm:$0xff]
    %v3305 = vld [vmem:[#allocation4 + $0x1680] sm:$0xff]
    %v3306 = vld [vmem:[#allocation4 + $0x1688] sm:$0xff]
    %v3307 = vld [vmem:[#allocation4 + $0x1690] sm:$0xff]
    %v3308 = vld [vmem:[#allocation4 + $0x1698] sm:$0xff]
    %v3309 = vld [vmem:[#allocation4 + $0x16b0] sm:$0xff]
    %v3310 = vld [vmem:[#allocation4 + $0x16b8] sm:$0xff]
    %v3311 = vld [vmem:[#allocation4 + $0x16c0] sm:$0xff]
    %v3312 = vld [vmem:[#allocation4 + $0x16c8] sm:$0xff]
    %v3313 = vld [vmem:[#allocation4 + $0x16e0] sm:$0xff]
    %v3314 = vld [vmem:[#allocation4 + $0x16e8] sm:$0xff]
    %v3315 = vld [vmem:[#allocation4 + $0x16f0] sm:$0xff]
    %v3316 = vld [vmem:[#allocation4 + $0x16f8] sm:$0xff]
    %v3317 = vld [vmem:[#allocation4 + $0x1710] sm:$0xff]
    %v3318 = vld [vmem:[#allocation4 + $0x1718] sm:$0xff]
    %v3319 = vld [vmem:[#allocation4 + $0x1720] sm:$0xff]
    %v3320 = vld [vmem:[#allocation4 + $0x1728] sm:$0xff]
    %v3321 = vld [vmem:[#allocation4 + $0x1740] sm:$0xff]
    %v3322 = vld [vmem:[#allocation4 + $0x1748] sm:$0xff]
    %v3323 = vld [vmem:[#allocation4 + $0x1750] sm:$0xff]
    %v3324 = vld [vmem:[#allocation4 + $0x1758] sm:$0xff]
    %v3325 = vld [vmem:[#allocation4 + $0x1770] sm:$0xff]
    %v3326 = vld [vmem:[#allocation4 + $0x1778] sm:$0xff]
    %v3327 = vld [vmem:[#allocation4 + $0x1780] sm:$0xff]
    %v3328 = vld [vmem:[#allocation4 + $0x1788] sm:$0xff]
    %v3329 = vld [vmem:[#allocation4 + $0x17a0] sm:$0xff]
    %v3330 = vld [vmem:[#allocation4 + $0x17a8] sm:$0xff]
    %v3331 = vld [vmem:[#allocation4 + $0x17b0] sm:$0xff]
    %v3332 = vld [vmem:[#allocation4 + $0x17b8] sm:$0xff]
    %v3333 = vld [vmem:[#allocation4 + $0x17d0] sm:$0xff]
    %v3334 = vld [vmem:[#allocation4 + $0x17d8] sm:$0xff]
    %v3335 = vld [vmem:[#allocation4 + $0x17e0] sm:$0xff]
    %v3336 = vld [vmem:[#allocation4 + $0x17e8] sm:$0xff]
    %3337 = vmatprep.subr.mxu0 %v3210
    %3338 = vmatpush1.msra.mxu0 %v3209
    %3339 = vmatprep.subr.mxu0 %v3214
    %3340 = vmatpush1.msra.mxu0 %v3213
    %3341 = vmatprep.subr.mxu0 %v3218
    %3342 = vmatpush1.msra.mxu0 %v3217
    %3343 = vmatprep.subr.mxu0 %v3222
    %3344 = vmatpush1.msra.mxu0 %v3221
    %3345 = vmatprep.subr.mxu0 %v3226
    %3346 = vmatpush1.msra.mxu0 %v3225
    %3347 = vmatprep.subr.mxu0 %v3230
    %3348 = vmatpush1.msra.mxu0 %v3229
    %3349 = vmatprep.subr.mxu0 %v3234
    %3350 = vmatpush1.msra.mxu0 %v3233
    %3351 = vmatprep.subr.mxu0 %v3238
    %3352 = vmatpush1.msra.mxu0 %v3237
    %3353 = vmatprep.subr.mxu0 %v3242
    %3354 = vmatpush1.msra.mxu0 %v3241
    %3355 = vmatprep.subr.mxu0 %v3246
    %3356 = vmatpush1.msra.mxu0 %v3245
    %3357 = vmatprep.subr.mxu0 %v3250
    %3358 = vmatpush1.msra.mxu0 %v3249
    %3359 = vmatprep.subr.mxu0 %v3254
    %3360 = vmatpush1.msra.mxu0 %v3253
    %3361 = vmatprep.subr.mxu0 %v3258
    %3362 = vmatpush1.msra.mxu0 %v3257
    %3363 = vmatprep.subr.mxu0 %v3262
    %3364 = vmatpush1.msra.mxu0 %v3261
    %3365 = vmatprep.subr.mxu0 %v3266
    %3366 = vmatpush1.msra.mxu0 %v3265
    %3367 = vmatprep.subr.mxu0 %v3270
    %3368 = vmatpush1.msra.mxu0 %v3269
    %3369 = vmatprep.subr.mxu0 %v3274
    %3370 = vmatpush1.msra.mxu0 %v3273
    %3371 = vmatprep.subr.mxu0 %v3278
    %3372 = vmatpush1.msra.mxu0 %v3277
    %3373 = vmatprep.subr.mxu0 %v3282
    %3374 = vmatpush1.msra.mxu0 %v3281
    %3375 = vmatprep.subr.mxu0 %v3286
    %3376 = vmatpush1.msra.mxu0 %v3285
    %3377 = vmatprep.subr.mxu0 %v3290
    %3378 = vmatpush1.msra.mxu0 %v3289
    %3379 = vmatprep.subr.mxu0 %v3294
    %3380 = vmatpush1.msra.mxu0 %v3293
    %3381 = vmatprep.subr.mxu0 %v3298
    %3382 = vmatpush1.msra.mxu0 %v3297
    %3383 = vmatprep.subr.mxu0 %v3302
    %3384 = vmatpush1.msra.mxu0 %v3301
    %3385 = vmatprep.subr.mxu0 %v3306
    %3386 = vmatpush1.msra.mxu0 %v3305
    %3387 = vmatprep.subr.mxu0 %v3310
    %3388 = vmatpush1.msra.mxu0 %v3309
    %3389 = vmatprep.subr.mxu0 %v3314
    %3390 = vmatpush1.msra.mxu0 %v3313
    %3391 = vmatprep.subr.mxu0 %v3318
    %3392 = vmatpush1.msra.mxu0 %v3317
    %3393 = vmatprep.subr.mxu0 %v3322
    %3394 = vmatpush1.msra.mxu0 %v3321
    %3395 = vmatprep.subr.mxu0 %v3326
    %3396 = vmatpush1.msra.mxu0 %v3325
    %3397 = vmatprep.subr.mxu0 %v3330
    %3398 = vmatpush1.msra.mxu0 %v3329
    %3399 = vmatprep.subr.mxu0 %v3334
    %3400 = vmatpush1.msra.mxu0 %v3333
    %3401 = vmatprep.mubr.f32.mxu0 %v3200
    %3402 = vmatmul.mubr.f32.gmra.mrb[0].mxu0 %v3199
    %v3403 = vpop.f32.mrb[0].mxu0
    %v3404 = vadd.f32 0.0, %v3403
    %v3405 = vpop.f32.mrb[0].mxu0
    %v3406 = vadd.f32 0.0, %v3405
    %3407 = vmatprep.mubr.f32.mxu0 %v3202
    %3408 = vmatmul.mubr.f32.gmra.mrb[0].mxu0 %v3201
    %v3409 = vpop.f32.mrb[0].mxu0
    %v3410 = vadd.f32 0.0, %v3409
    %v3411 = vpop.f32.mrb[0].mxu0
    %v3412 = vadd.f32 0.0, %v3411
    %3413 = vmatprep.mubr.f32.mxu0 %v3204
    %3414 = vmatmul.mubr.f32.gmra.mrb[0].mxu0 %v3203
    %v3415 = vpop.f32.mrb[0].mxu0
    %v3416 = vadd.f32 0.0, %v3415
    %v3417 = vpop.f32.mrb[0].mxu0
    %v3418 = vadd.f32 0.0, %v3417
    %3419 = vmatprep.mubr.f32.mxu0 %v3206
    %3420 = vmatmul.mubr.f32.gmra.mrb[0].mxu0 %v3205
    %v3421 = vpop.f32.mrb[0].mxu0
    %v3422 = vadd.f32 0.0, %v3421
    %v3423 = vpop.f32.mrb[0].mxu0
    %v3424 = vadd.f32 0.0, %v3423
    %3425 = vmatprep.mubr.f32.mxu0 %v3208
    %3426 = vmatmul.mubr.f32.gmra.mrb[0].mxu0 %v3207
    %v3427 = vpop.f32.mrb[0].mxu0
    %v3428 = vadd.f32 0.0, %v3427
    %v3429 = vpop.f32.mrb[0].mxu0
    %v3430 = vadd.f32 0.0, %v3429
    %3431 = vdwg.mxu0
    %3432 = vmatprep.subr.mxu0 %v3212
    %3433 = vmatpush1.msra.mxu0 %v3211
    %3434 = vmatprep.subr.mxu0 %v3216
    %3435 = vmatpush1.msra.mxu0 %v3215
    %3436 = vmatprep.subr.mxu0 %v3220
    %3437 = vmatpush1.msra.mxu0 %v3219
    %3438 = vmatprep.subr.mxu0 %v3224
    %3439 = vmatpush1.msra.mxu0 %v3223
    %3440 = vmatprep.subr.mxu0 %v3228
    %3441 = vmatpush1.msra.mxu0 %v3227
    %3442 = vmatprep.subr.mxu0 %v3232
    %3443 = vmatpush1.msra.mxu0 %v3231
    %3444 = vmatprep.subr.mxu0 %v3236
    %3445 = vmatpush1.msra.mxu0 %v3235
    %3446 = vmatprep.subr.mxu0 %v3240
    %3447 = vmatpush1.msra.mxu0 %v3239
    %3448 = vmatprep.subr.mxu0 %v3244
    %3449 = vmatpush1.msra.mxu0 %v3243
    %3450 = vmatprep.subr.mxu0 %v3248
    %3451 = vmatpush1.msra.mxu0 %v3247
    %3452 = vmatprep.subr.mxu0 %v3252
    %3453 = vmatpush1.msra.mxu0 %v3251
    %3454 = vmatprep.subr.mxu0 %v3256
    %3455 = vmatpush1.msra.mxu0 %v3255
    %3456 = vmatprep.subr.mxu0 %v3260
    %3457 = vmatpush1.msra.mxu0 %v3259
    %3458 = vmatprep.subr.mxu0 %v3264
    %3459 = vmatpush1.msra.mxu0 %v3263
    %3460 = vmatprep.subr.mxu0 %v3268
    %3461 = vmatpush1.msra.mxu0 %v3267
    %3462 = vmatprep.subr.mxu0 %v3272
    %3463 = vmatpush1.msra.mxu0 %v3271
    %3464 = vmatprep.subr.mxu0 %v3276
    %3465 = vmatpush1.msra.mxu0 %v3275
    %3466 = vmatprep.subr.mxu0 %v3280
    %3467 = vmatpush1.msra.mxu0 %v3279
    %3468 = vmatprep.subr.mxu0 %v3284
    %3469 = vmatpush1.msra.mxu0 %v3283
    %3470 = vmatprep.subr.mxu0 %v3288
    %3471 = vmatpush1.msra.mxu0 %v3287
    %3472 = vmatprep.subr.mxu0 %v3292
    %3473 = vmatpush1.msra.mxu0 %v3291
    %3474 = vmatprep.subr.mxu0 %v3296
    %3475 = vmatpush1.msra.mxu0 %v3295
    %3476 = vmatprep.subr.mxu0 %v3300
    %3477 = vmatpush1.msra.mxu0 %v3299
    %3478 = vmatprep.subr.mxu0 %v3304
    %3479 = vmatpush1.msra.mxu0 %v3303
    %3480 = vmatprep.subr.mxu0 %v3308
    %3481 = vmatpush1.msra.mxu0 %v3307
    %3482 = vmatprep.subr.mxu0 %v3312
    %3483 = vmatpush1.msra.mxu0 %v3311
    %3484 = vmatprep.subr.mxu0 %v3316
    %3485 = vmatpush1.msra.mxu0 %v3315
    %3486 = vmatprep.subr.mxu0 %v3320
    %3487 = vmatpush1.msra.mxu0 %v3319
    %3488 = vmatprep.subr.mxu0 %v3324
    %3489 = vmatpush1.msra.mxu0 %v3323
    %3490 = vmatprep.subr.mxu0 %v3328
    %3491 = vmatpush1.msra.mxu0 %v3327
    %3492 = vmatprep.subr.mxu0 %v3332
    %3493 = vmatpush1.msra.mxu0 %v3331
    %3494 = vmatprep.subr.mxu0 %v3336
    %3495 = vmatpush1.msra.mxu0 %v3335
    %3496 = vmatprep.mubr.f32.mxu0 %v3200
    %3497 = vmatmul.mubr.f32.gmra.mrb[0].mxu0 %v3199
    %v3498 = vpop.f32.mrb[0].mxu0
    %v3499 = vadd.f32 0.0, %v3498
    %v3500 = vpop.f32.mrb[0].mxu0
    %v3501 = vadd.f32 0.0, %v3500
    %3502 = vmatprep.mubr.f32.mxu0 %v3202
    %3503 = vmatmul.mubr.f32.gmra.mrb[0].mxu0 %v3201
    %v3504 = vpop.f32.mrb[0].mxu0
    %v3505 = vadd.f32 0.0, %v3504
    %v3506 = vpop.f32.mrb[0].mxu0
    %v3507 = vadd.f32 0.0, %v3506
    %3508 = vmatprep.mubr.f32.mxu0 %v3204
    %3509 = vmatmul.mubr.f32.gmra.mrb[0].mxu0 %v3203
    %v3510 = vpop.f32.mrb[0].mxu0
    %v3511 = vadd.f32 0.0, %v3510
    %v3512 = vpop.f32.mrb[0].mxu0
    %v3513 = vadd.f32 0.0, %v3512
    %3514 = vmatprep.mubr.f32.mxu0 %v3206
    %3515 = vmatmul.mubr.f32.gmra.mrb[0].mxu0 %v3205
    %v3516 = vpop.f32.mrb[0].mxu0
    %v3517 = vadd.f32 0.0, %v3516
    %v3518 = vpop.f32.mrb[0].mxu0
    %v3519 = vadd.f32 0.0, %v3518
    %3520 = vmatprep.mubr.f32.mxu0 %v3208
    %3521 = vmatmul.mubr.f32.gmra.mrb[0].mxu0 %v3207
    %v3522 = vpop.f32.mrb[0].mxu0
    %v3523 = vadd.f32 0.0, %v3522
    %v3524 = vpop.f32.mrb[0].mxu0
    %v3525 = vadd.f32 0.0, %v3524
    %3526 = vdwg.mxu0
    %v3527 = vld [vmem:[#allocation6 + $0x140] sm:$0xff]
    %v3528 = vld [vmem:[#allocation6 + $0x150] sm:$0xff]
    %v3529 = vld [vmem:[#allocation6 + $0x160] sm:$0xff]
    %v3530 = vld [vmem:[#allocation6 + $0x170] sm:$0xff]
    %v3531 = vld [vmem:[#allocation6 + $0x180] sm:$0xff]
    %v3532 = vld [vmem:[#allocation6 + $0x190] sm:$0xff]
    %v3533 = vld [vmem:[#allocation2 + $0x1e0] sm:$0xff]
    %v3534 = vld [vmem:[#allocation2 + $0x1e8] sm:$0xff]
    %v3535 = vld [vmem:[#allocation2 + $0x1f0] sm:$0xff]
    %v3536 = vld [vmem:[#allocation2 + $0x1f8] sm:$0xff]
    %v3537 = vld [vmem:[#allocation2 + $0x200] sm:$0xff]
    %v3538 = vld [vmem:[#allocation2 + $0x208] sm:$0xff]
    %v3540 = vsel %vm2828, %v3533, 0
    %v3543 = vsel %vm2828, %v3534, 0
    %v3546 = vsel %vm2828, %v3535, 0
    %v3549 = vsel %vm2828, %v3536, 0
    %v3552 = vsel %vm2828, %v3537, 0
    %v3555 = vsel %vm2828, %v3538, 0
    %3557 = vmatprep.subr.mxu0 0.0
    %3558 = vmatpush1.msra.mxu0 %v3404
    %3559 = vmatprep.subr.mxu0 0.0
    %3560 = vmatpush1.msra.mxu0 %v3410
    %3561 = vmatprep.subr.mxu0 0.0
    %3562 = vmatpush1.msra.mxu0 %v3416
    %3563 = vmatprep.subr.mxu0 0.0
    %3564 = vmatpush1.msra.mxu0 %v3422
    %3565 = vmatprep.subr.mxu0 0.0
    %3566 = vmatpush1.msra.mxu0 %v3428
    %3567 = vmatprep.subr.mxu0 0.0
    %3568 = vmatpush1.msra.mxu0 0.0
    %3569 = vmatprep.subr.mxu0 0.0
    %3570 = vmatpush1.msra.mxu0 0.0
    %3571 = vmatprep.subr.mxu0 0.0
    %3572 = vmatpush1.msra.mxu0 0.0
    %3573 = vmatprep.subr.mxu0 0.0
    %3574 = vmatpush1.msra.mxu0 0.0
    %3575 = vmatprep.subr.mxu0 0.0
    %3576 = vmatpush1.msra.mxu0 0.0
    %3577 = vmatprep.subr.mxu0 0.0
    %3578 = vmatpush1.msra.mxu0 0.0
    %3579 = vmatprep.subr.mxu0 0.0
    %3580 = vmatpush1.msra.mxu0 0.0
    %3581 = vmatprep.subr.mxu0 0.0
    %3582 = vmatpush1.msra.mxu0 0.0
    %3583 = vmatprep.subr.mxu0 0.0
    %3584 = vmatpush1.msra.mxu0 0.0
    %3585 = vmatprep.subr.mxu0 0.0
    %3586 = vmatpush1.msra.mxu0 0.0
    %3587 = vmatprep.subr.mxu0 0.0
    %3588 = vmatpush1.msra.mxu0 0.0
    %3589 = vmatprep.subr.mxu0 0.0
    %3590 = vmatpush1.msra.mxu0 0.0
    %3591 = vmatprep.subr.mxu0 0.0
    %3592 = vmatpush1.msra.mxu0 0.0
    %3593 = vmatprep.subr.mxu0 0.0
    %3594 = vmatpush1.msra.mxu0 0.0
    %3595 = vmatprep.subr.mxu0 0.0
    %3596 = vmatpush1.msra.mxu0 0.0
    %3597 = vmatprep.subr.mxu0 0.0
    %3598 = vmatpush1.msra.mxu0 0.0
    %3599 = vmatprep.subr.mxu0 0.0
    %3600 = vmatpush1.msra.mxu0 0.0
    %3601 = vmatprep.subr.mxu0 0.0
    %3602 = vmatpush1.msra.mxu0 0.0
    %3603 = vmatprep.subr.mxu0 0.0
    %3604 = vmatpush1.msra.mxu0 0.0
    %3605 = vmatprep.subr.mxu0 0.0
    %3606 = vmatpush1.msra.mxu0 0.0
    %3607 = vmatprep.subr.mxu0 0.0
    %3608 = vmatpush1.msra.mxu0 0.0
    %3609 = vmatprep.subr.mxu0 0.0
    %3610 = vmatpush1.msra.mxu0 0.0
    %3611 = vmatprep.subr.mxu0 0.0
    %3612 = vmatpush1.msra.mxu0 0.0
    %3613 = vmatprep.subr.mxu0 0.0
    %3614 = vmatpush1.msra.mxu0 0.0
    %3615 = vmatprep.subr.mxu0 0.0
    %3616 = vmatpush1.msra.mxu0 0.0
    %3617 = vmatprep.subr.mxu0 0.0
    %3618 = vmatpush1.msra.mxu0 0.0
    %3619 = vmatprep.subr.mxu0 0.0
    %3620 = vmatpush1.msra.mxu0 0.0
    %3621 = vmatprep.mubr.f32.mxu0 0.0
    %3622 = vmatmul.mubr.f32.gmra.mrb[0].mxu0 %v3540
    %v3623 = vpop.f32.mrb[0].mxu0
    %v3624 = vadd.f32 0.0, %v3623
    %v3625 = vpop.f32.mrb[0].mxu0
    %3626 = vmatprep.mubr.f32.mxu0 0.0
    %3627 = vmatmul.mubr.f32.gmra.mrb[0].mxu0 %v3543
    %v3628 = vpop.f32.mrb[0].mxu0
    %v3629 = vadd.f32 0.0, %v3628
    %v3630 = vpop.f32.mrb[0].mxu0
    %3631 = vmatprep.mubr.f32.mxu0 0.0
    %3632 = vmatmul.mubr.f32.gmra.mrb[0].mxu0 %v3546
    %v3633 = vpop.f32.mrb[0].mxu0
    %v3634 = vadd.f32 0.0, %v3633
    %v3635 = vpop.f32.mrb[0].mxu0
    %3636 = vmatprep.mubr.f32.mxu0 0.0
    %3637 = vmatmul.mubr.f32.gmra.mrb[0].mxu0 %v3549
    %v3638 = vpop.f32.mrb[0].mxu0
    %v3639 = vadd.f32 0.0, %v3638
    %v3640 = vpop.f32.mrb[0].mxu0
    %3641 = vmatprep.mubr.f32.mxu0 0.0
    %3642 = vmatmul.mubr.f32.gmra.mrb[0].mxu0 %v3552
    %v3643 = vpop.f32.mrb[0].mxu0
    %v3644 = vadd.f32 0.0, %v3643
    %v3645 = vpop.f32.mrb[0].mxu0
    %3646 = vmatprep.mubr.f32.mxu0 0.0
    %3647 = vmatmul.mubr.f32.gmra.mrb[0].mxu0 %v3555
    %v3648 = vpop.f32.mrb[0].mxu0
    %v3649 = vadd.f32 0.0, %v3648
    %v3650 = vpop.f32.mrb[0].mxu0
    %3651 = vdwg.mxu0
    %v3652 = vadd.f32 %v3527, %v3624
    %v3653 = vadd.f32 %v3528, %v3629
    %v3654 = vadd.f32 %v3529, %v3634
    %v3655 = vadd.f32 %v3530, %v3639
    %v3656 = vadd.f32 %v3531, %v3644
    %v3657 = vadd.f32 %v3532, %v3649
    %v3658 = vld [vmem:[#allocation2 + $0x210] sm:$0xff]
    %v3659 = vld [vmem:[#allocation2 + $0x218] sm:$0xff]
    %v3660 = vld [vmem:[#allocation2 + $0x220] sm:$0xff]
    %v3661 = vld [vmem:[#allocation2 + $0x228] sm:$0xff]
    %v3662 = vld [vmem:[#allocation2 + $0x230] sm:$0xff]
    %v3663 = vld [vmem:[#allocation2 + $0x238] sm:$0xff]
    %v3665 = vsel %vm2828, %v3658, 0
    %v3668 = vsel %vm2828, %v3659, 0
    %v3671 = vsel %vm2828, %v3660, 0
    %v3674 = vsel %vm2828, %v3661, 0
    %v3677 = vsel %vm2828, %v3662, 0
    %v3680 = vsel %vm2828, %v3663, 0
    %3682 = vmatprep.subr.mxu0 0.0
    %3683 = vmatpush1.msra.mxu0 %v3406
    %3684 = vmatprep.subr.mxu0 0.0
    %3685 = vmatpush1.msra.mxu0 %v3412
    %3686 = vmatprep.subr.mxu0 0.0
    %3687 = vmatpush1.msra.mxu0 %v3418
    %3688 = vmatprep.subr.mxu0 0.0
    %3689 = vmatpush1.msra.mxu0 %v3424
    %3690 = vmatprep.subr.mxu0 0.0
    %3691 = vmatpush1.msra.mxu0 %v3430
    %3692 = vmatprep.subr.mxu0 0.0
    %3693 = vmatpush1.msra.mxu0 0.0
    %3694 = vmatprep.subr.mxu0 0.0
    %3695 = vmatpush1.msra.mxu0 0.0
    %3696 = vmatprep.subr.mxu0 0.0
    %3697 = vmatpush1.msra.mxu0 0.0
    %3698 = vmatprep.subr.mxu0 0.0
    %3699 = vmatpush1.msra.mxu0 0.0
    %3700 = vmatprep.subr.mxu0 0.0
    %3701 = vmatpush1.msra.mxu0 0.0
    %3702 = vmatprep.subr.mxu0 0.0
    %3703 = vmatpush1.msra.mxu0 0.0
    %3704 = vmatprep.subr.mxu0 0.0
    %3705 = vmatpush1.msra.mxu0 0.0
    %3706 = vmatprep.subr.mxu0 0.0
    %3707 = vmatpush1.msra.mxu0 0.0
    %3708 = vmatprep.subr.mxu0 0.0
    %3709 = vmatpush1.msra.mxu0 0.0
    %3710 = vmatprep.subr.mxu0 0.0
    %3711 = vmatpush1.msra.mxu0 0.0
    %3712 = vmatprep.subr.mxu0 0.0
    %3713 = vmatpush1.msra.mxu0 0.0
    %3714 = vmatprep.subr.mxu0 0.0
    %3715 = vmatpush1.msra.mxu0 0.0
    %3716 = vmatprep.subr.mxu0 0.0
    %3717 = vmatpush1.msra.mxu0 0.0
    %3718 = vmatprep.subr.mxu0 0.0
    %3719 = vmatpush1.msra.mxu0 0.0
    %3720 = vmatprep.subr.mxu0 0.0
    %3721 = vmatpush1.msra.mxu0 0.0
    %3722 = vmatprep.subr.mxu0 0.0
    %3723 = vmatpush1.msra.mxu0 0.0
    %3724 = vmatprep.subr.mxu0 0.0
    %3725 = vmatpush1.msra.mxu0 0.0
    %3726 = vmatprep.subr.mxu0 0.0
    %3727 = vmatpush1.msra.mxu0 0.0
    %3728 = vmatprep.subr.mxu0 0.0
    %3729 = vmatpush1.msra.mxu0 0.0
    %3730 = vmatprep.subr.mxu0 0.0
    %3731 = vmatpush1.msra.mxu0 0.0
    %3732 = vmatprep.subr.mxu0 0.0
    %3733 = vmatpush1.msra.mxu0 0.0
    %3734 = vmatprep.subr.mxu0 0.0
    %3735 = vmatpush1.msra.mxu0 0.0
    %3736 = vmatprep.subr.mxu0 0.0
    %3737 = vmatpush1.msra.mxu0 0.0
    %3738 = vmatprep.subr.mxu0 0.0
    %3739 = vmatpush1.msra.mxu0 0.0
    %3740 = vmatprep.subr.mxu0 0.0
    %3741 = vmatpush1.msra.mxu0 0.0
    %3742 = vmatprep.subr.mxu0 0.0
    %3743 = vmatpush1.msra.mxu0 0.0
    %3744 = vmatprep.subr.mxu0 0.0
    %3745 = vmatpush1.msra.mxu0 0.0
    %3746 = vmatprep.mubr.f32.mxu0 0.0
    %3747 = vmatmul.mubr.f32.gmra.mrb[0].mxu0 %v3665
    %v3748 = vpop.f32.mrb[0].mxu0
    %v3749 = vadd.f32 0.0, %v3748
    %v3750 = vpop.f32.mrb[0].mxu0
    %3751 = vmatprep.mubr.f32.mxu0 0.0
    %3752 = vmatmul.mubr.f32.gmra.mrb[0].mxu0 %v3668
    %v3753 = vpop.f32.mrb[0].mxu0
    %v3754 = vadd.f32 0.0, %v3753
    %v3755 = vpop.f32.mrb[0].mxu0
    %3756 = vmatprep.mubr.f32.mxu0 0.0
    %3757 = vmatmul.mubr.f32.gmra.mrb[0].mxu0 %v3671
    %v3758 = vpop.f32.mrb[0].mxu0
    %v3759 = vadd.f32 0.0, %v3758
    %v3760 = vpop.f32.mrb[0].mxu0
    %3761 = vmatprep.mubr.f32.mxu0 0.0
    %3762 = vmatmul.mubr.f32.gmra.mrb[0].mxu0 %v3674
    %v3763 = vpop.f32.mrb[0].mxu0
    %v3764 = vadd.f32 0.0, %v3763
    %v3765 = vpop.f32.mrb[0].mxu0
    %3766 = vmatprep.mubr.f32.mxu0 0.0
    %3767 = vmatmul.mubr.f32.gmra.mrb[0].mxu0 %v3677
    %v3768 = vpop.f32.mrb[0].mxu0
    %v3769 = vadd.f32 0.0, %v3768
    %v3770 = vpop.f32.mrb[0].mxu0
    %3771 = vmatprep.mubr.f32.mxu0 0.0
    %3772 = vmatmul.mubr.f32.gmra.mrb[0].mxu0 %v3680
    %v3773 = vpop.f32.mrb[0].mxu0
    %v3774 = vadd.f32 0.0, %v3773
    %v3775 = vpop.f32.mrb[0].mxu0
    %3776 = vdwg.mxu0
    %v3777 = vadd.f32 %v3652, %v3749
    %v3778 = vadd.f32 %v3653, %v3754
    %v3779 = vadd.f32 %v3654, %v3759
    %v3780 = vadd.f32 %v3655, %v3764
    %v3781 = vadd.f32 %v3656, %v3769
    %v3782 = vadd.f32 %v3657, %v3774
    %v3783 = vld [vmem:[#allocation2 + $0x240] sm:$0xff]
    %v3784 = vld [vmem:[#allocation2 + $0x248] sm:$0xff]
    %v3785 = vld [vmem:[#allocation2 + $0x250] sm:$0xff]
    %v3786 = vld [vmem:[#allocation2 + $0x258] sm:$0xff]
    %v3787 = vld [vmem:[#allocation2 + $0x260] sm:$0xff]
    %v3788 = vld [vmem:[#allocation2 + $0x268] sm:$0xff]
    %v3790 = vsel %vm2828, %v3783, 0
    %v3793 = vsel %vm2828, %v3784, 0
    %v3796 = vsel %vm2828, %v3785, 0
    %v3799 = vsel %vm2828, %v3786, 0
    %v3802 = vsel %vm2828, %v3787, 0
    %v3805 = vsel %vm2828, %v3788, 0
    %3807 = vmatprep.subr.mxu0 0.0
    %3808 = vmatpush1.msra.mxu0 %v3499
    %3809 = vmatprep.subr.mxu0 0.0
    %3810 = vmatpush1.msra.mxu0 %v3505
    %3811 = vmatprep.subr.mxu0 0.0
    %3812 = vmatpush1.msra.mxu0 %v3511
    %3813 = vmatprep.subr.mxu0 0.0
    %3814 = vmatpush1.msra.mxu0 %v3517
    %3815 = vmatprep.subr.mxu0 0.0
    %3816 = vmatpush1.msra.mxu0 %v3523
    %3817 = vmatprep.subr.mxu0 0.0
    %3818 = vmatpush1.msra.mxu0 0.0
    %3819 = vmatprep.subr.mxu0 0.0
    %3820 = vmatpush1.msra.mxu0 0.0
    %3821 = vmatprep.subr.mxu0 0.0
    %3822 = vmatpush1.msra.mxu0 0.0
    %3823 = vmatprep.subr.mxu0 0.0
    %3824 = vmatpush1.msra.mxu0 0.0
    %3825 = vmatprep.subr.mxu0 0.0
    %3826 = vmatpush1.msra.mxu0 0.0
    %3827 = vmatprep.subr.mxu0 0.0
    %3828 = vmatpush1.msra.mxu0 0.0
    %3829 = vmatprep.subr.mxu0 0.0
    %3830 = vmatpush1.msra.mxu0 0.0
    %3831 = vmatprep.subr.mxu0 0.0
    %3832 = vmatpush1.msra.mxu0 0.0
    %3833 = vmatprep.subr.mxu0 0.0
    %3834 = vmatpush1.msra.mxu0 0.0
    %3835 = vmatprep.subr.mxu0 0.0
    %3836 = vmatpush1.msra.mxu0 0.0
    %3837 = vmatprep.subr.mxu0 0.0
    %3838 = vmatpush1.msra.mxu0 0.0
    %3839 = vmatprep.subr.mxu0 0.0
    %3840 = vmatpush1.msra.mxu0 0.0
    %3841 = vmatprep.subr.mxu0 0.0
    %3842 = vmatpush1.msra.mxu0 0.0
    %3843 = vmatprep.subr.mxu0 0.0
    %3844 = vmatpush1.msra.mxu0 0.0
    %3845 = vmatprep.subr.mxu0 0.0
    %3846 = vmatpush1.msra.mxu0 0.0
    %3847 = vmatprep.subr.mxu0 0.0
    %3848 = vmatpush1.msra.mxu0 0.0
    %3849 = vmatprep.subr.mxu0 0.0
    %3850 = vmatpush1.msra.mxu0 0.0
    %3851 = vmatprep.subr.mxu0 0.0
    %3852 = vmatpush1.msra.mxu0 0.0
    %3853 = vmatprep.subr.mxu0 0.0
    %3854 = vmatpush1.msra.mxu0 0.0
    %3855 = vmatprep.subr.mxu0 0.0
    %3856 = vmatpush1.msra.mxu0 0.0
    %3857 = vmatprep.subr.mxu0 0.0
    %3858 = vmatpush1.msra.mxu0 0.0
    %3859 = vmatprep.subr.mxu0 0.0
    %3860 = vmatpush1.msra.mxu0 0.0
    %3861 = vmatprep.subr.mxu0 0.0
    %3862 = vmatpush1.msra.mxu0 0.0
    %3863 = vmatprep.subr.mxu0 0.0
    %3864 = vmatpush1.msra.mxu0 0.0
    %3865 = vmatprep.subr.mxu0 0.0
    %3866 = vmatpush1.msra.mxu0 0.0
    %3867 = vmatprep.subr.mxu0 0.0
    %3868 = vmatpush1.msra.mxu0 0.0
    %3869 = vmatprep.subr.mxu0 0.0
    %3870 = vmatpush1.msra.mxu0 0.0
    %3871 = vmatprep.mubr.f32.mxu0 0.0
    %3872 = vmatmul.mubr.f32.gmra.mrb[0].mxu0 %v3790
    %v3873 = vpop.f32.mrb[0].mxu0
    %v3874 = vadd.f32 0.0, %v3873
    %v3875 = vpop.f32.mrb[0].mxu0
    %3876 = vmatprep.mubr.f32.mxu0 0.0
    %3877 = vmatmul.mubr.f32.gmra.mrb[0].mxu0 %v3793
    %v3878 = vpop.f32.mrb[0].mxu0
    %v3879 = vadd.f32 0.0, %v3878
    %v3880 = vpop.f32.mrb[0].mxu0
    %3881 = vmatprep.mubr.f32.mxu0 0.0
    %3882 = vmatmul.mubr.f32.gmra.mrb[0].mxu0 %v3796
    %v3883 = vpop.f32.mrb[0].mxu0
    %v3884 = vadd.f32 0.0, %v3883
    %v3885 = vpop.f32.mrb[0].mxu0
    %3886 = vmatprep.mubr.f32.mxu0 0.0
    %3887 = vmatmul.mubr.f32.gmra.mrb[0].mxu0 %v3799
    %v3888 = vpop.f32.mrb[0].mxu0
    %v3889 = vadd.f32 0.0, %v3888
    %v3890 = vpop.f32.mrb[0].mxu0
    %3891 = vmatprep.mubr.f32.mxu0 0.0
    %3892 = vmatmul.mubr.f32.gmra.mrb[0].mxu0 %v3802
    %v3893 = vpop.f32.mrb[0].mxu0
    %v3894 = vadd.f32 0.0, %v3893
    %v3895 = vpop.f32.mrb[0].mxu0
    %3896 = vmatprep.mubr.f32.mxu0 0.0
    %3897 = vmatmul.mubr.f32.gmra.mrb[0].mxu0 %v3805
    %v3898 = vpop.f32.mrb[0].mxu0
    %v3899 = vadd.f32 0.0, %v3898
    %v3900 = vpop.f32.mrb[0].mxu0
    %3901 = vdwg.mxu0
    %v3902 = vadd.f32 %v3777, %v3874
    %v3903 = vadd.f32 %v3778, %v3879
    %v3904 = vadd.f32 %v3779, %v3884
    %v3905 = vadd.f32 %v3780, %v3889
    %v3906 = vadd.f32 %v3781, %v3894
    %v3907 = vadd.f32 %v3782, %v3899
    %v3908 = vld [vmem:[#allocation2 + $0x270] sm:$0xff]
    %v3909 = vld [vmem:[#allocation2 + $0x278] sm:$0xff]
    %v3910 = vld [vmem:[#allocation2 + $0x280] sm:$0xff]
    %v3911 = vld [vmem:[#allocation2 + $0x288] sm:$0xff]
    %v3912 = vld [vmem:[#allocation2 + $0x290] sm:$0xff]
    %v3913 = vld [vmem:[#allocation2 + $0x298] sm:$0xff]
    %v3915 = vsel %vm2828, %v3908, 0
    %v3918 = vsel %vm2828, %v3909, 0
    %v3921 = vsel %vm2828, %v3910, 0
    %v3924 = vsel %vm2828, %v3911, 0
    %v3927 = vsel %vm2828, %v3912, 0
    %v3930 = vsel %vm2828, %v3913, 0
    %3932 = vmatprep.subr.mxu0 0.0
    %3933 = vmatpush1.msra.mxu0 %v3501
    %3934 = vmatprep.subr.mxu0 0.0
    %3935 = vmatpush1.msra.mxu0 %v3507
    %3936 = vmatprep.subr.mxu0 0.0
    %3937 = vmatpush1.msra.mxu0 %v3513
    %3938 = vmatprep.subr.mxu0 0.0
    %3939 = vmatpush1.msra.mxu0 %v3519
    %3940 = vmatprep.subr.mxu0 0.0
    %3941 = vmatpush1.msra.mxu0 %v3525
    %3942 = vmatprep.subr.mxu0 0.0
    %3943 = vmatpush1.msra.mxu0 0.0
    %3944 = vmatprep.subr.mxu0 0.0
    %3945 = vmatpush1.msra.mxu0 0.0
    %3946 = vmatprep.subr.mxu0 0.0
    %3947 = vmatpush1.msra.mxu0 0.0
    %3948 = vmatprep.subr.mxu0 0.0
    %3949 = vmatpush1.msra.mxu0 0.0
    %3950 = vmatprep.subr.mxu0 0.0
    %3951 = vmatpush1.msra.mxu0 0.0
    %3952 = vmatprep.subr.mxu0 0.0
    %3953 = vmatpush1.msra.mxu0 0.0
    %3954 = vmatprep.subr.mxu0 0.0
    %3955 = vmatpush1.msra.mxu0 0.0
    %3956 = vmatprep.subr.mxu0 0.0
    %3957 = vmatpush1.msra.mxu0 0.0
    %3958 = vmatprep.subr.mxu0 0.0
    %3959 = vmatpush1.msra.mxu0 0.0
    %3960 = vmatprep.subr.mxu0 0.0
    %3961 = vmatpush1.msra.mxu0 0.0
    %3962 = vmatprep.subr.mxu0 0.0
    %3963 = vmatpush1.msra.mxu0 0.0
    %3964 = vmatprep.subr.mxu0 0.0
    %3965 = vmatpush1.msra.mxu0 0.0
    %3966 = vmatprep.subr.mxu0 0.0
    %3967 = vmatpush1.msra.mxu0 0.0
    %3968 = vmatprep.subr.mxu0 0.0
    %3969 = vmatpush1.msra.mxu0 0.0
    %3970 = vmatprep.subr.mxu0 0.0
    %3971 = vmatpush1.msra.mxu0 0.0
    %3972 = vmatprep.subr.mxu0 0.0
    %3973 = vmatpush1.msra.mxu0 0.0
    %3974 = vmatprep.subr.mxu0 0.0
    %3975 = vmatpush1.msra.mxu0 0.0
    %3976 = vmatprep.subr.mxu0 0.0
    %3977 = vmatpush1.msra.mxu0 0.0
    %3978 = vmatprep.subr.mxu0 0.0
    %3979 = vmatpush1.msra.mxu0 0.0
    %3980 = vmatprep.subr.mxu0 0.0
    %3981 = vmatpush1.msra.mxu0 0.0
    %3982 = vmatprep.subr.mxu0 0.0
    %3983 = vmatpush1.msra.mxu0 0.0
    %3984 = vmatprep.subr.mxu0 0.0
    %3985 = vmatpush1.msra.mxu0 0.0
    %3986 = vmatprep.subr.mxu0 0.0
    %3987 = vmatpush1.msra.mxu0 0.0
    %3988 = vmatprep.subr.mxu0 0.0
    %3989 = vmatpush1.msra.mxu0 0.0
    %3990 = vmatprep.subr.mxu0 0.0
    %3991 = vmatpush1.msra.mxu0 0.0
    %3992 = vmatprep.subr.mxu0 0.0
    %3993 = vmatpush1.msra.mxu0 0.0
    %3994 = vmatprep.subr.mxu0 0.0
    %3995 = vmatpush1.msra.mxu0 0.0
    %3996 = vmatprep.mubr.f32.mxu0 0.0
    %3997 = vmatmul.mubr.f32.gmra.mrb[0].mxu0 %v3915
    %v3998 = vpop.f32.mrb[0].mxu0
    %v3999 = vadd.f32 0.0, %v3998
    %v4000 = vpop.f32.mrb[0].mxu0
    %4001 = vmatprep.mubr.f32.mxu0 0.0
    %4002 = vmatmul.mubr.f32.gmra.mrb[0].mxu0 %v3918
    %v4003 = vpop.f32.mrb[0].mxu0
    %v4004 = vadd.f32 0.0, %v4003
    %v4005 = vpop.f32.mrb[0].mxu0
    %4006 = vmatprep.mubr.f32.mxu0 0.0
    %4007 = vmatmul.mubr.f32.gmra.mrb[0].mxu0 %v3921
    %v4008 = vpop.f32.mrb[0].mxu0
    %v4009 = vadd.f32 0.0, %v4008
    %v4010 = vpop.f32.mrb[0].mxu0
    %4011 = vmatprep.mubr.f32.mxu0 0.0
    %4012 = vmatmul.mubr.f32.gmra.mrb[0].mxu0 %v3924
    %v4013 = vpop.f32.mrb[0].mxu0
    %v4014 = vadd.f32 0.0, %v4013
    %v4015 = vpop.f32.mrb[0].mxu0
    %4016 = vmatprep.mubr.f32.mxu0 0.0
    %4017 = vmatmul.mubr.f32.gmra.mrb[0].mxu0 %v3927
    %v4018 = vpop.f32.mrb[0].mxu0
    %v4019 = vadd.f32 0.0, %v4018
    %v4020 = vpop.f32.mrb[0].mxu0
    %4021 = vmatprep.mubr.f32.mxu0 0.0
    %4022 = vmatmul.mubr.f32.gmra.mrb[0].mxu0 %v3930
    %v4023 = vpop.f32.mrb[0].mxu0
    %v4024 = vadd.f32 0.0, %v4023
    %v4025 = vpop.f32.mrb[0].mxu0
    %4026 = vdwg.mxu0
    %v4027 = vadd.f32 %v3902, %v3999
    %v4028 = vadd.f32 %v3903, %v4004
    %v4029 = vadd.f32 %v3904, %v4009
    %v4030 = vadd.f32 %v3905, %v4014
    %v4031 = vadd.f32 %v3906, %v4019
    %v4032 = vadd.f32 %v3907, %v4024
    %4033 = vst [vmem:[%s4] sm:$0xff] %v4027
    %4034 = vst [vmem:[%s4 + $0x8] sm:$0xff] %v4028
    %4035 = vst [vmem:[%s4 + $0x10] sm:$0xff] %v4029
    %4036 = vst [vmem:[%s4 + $0x18] sm:$0xff] %v4030
    %4037 = vst [vmem:[%s4 + $0x20] sm:$0xff] %v4031
    %4038 = vst [vmem:[%s4 + $0x28] sm:$0xff] %v4032
    // Predicated region
    $region30: #{forward.1} parent=1 // pred_check
      _
    $region31: #{forward.1} parent=1 // pred_check_branch
      %4040 = sbr.rel (0) target = $region33
    $region32: #{forward.1} parent=1 // pred_region
      _
    $region33: #{forward.1} parent=1 // pred_fallthru
      _
    // Predicated region
    $region34: #{forward.1} parent=1 // pred_check
      _
    $region35: #{forward.1} parent=1 // pred_check_branch
      %4042 = sbr.rel (0) target = $region37
    $region36: #{forward.1} parent=1 // pred_region
      _
    $region37: #{forward.1} parent=1 // pred_fallthru
      _
    %4043 = vsyncpa [#allocation3], 1
    %4044 = vsyncpa [#allocation5], 1

</llo_original>
